<compile_context>
chip_gen: v7x
topology: tpu7x:2x2x1
jax: 0.10.0
libtpu: 0.0.40
codegen_flags: <defaults>
</compile_context>

<pallas_src>
import functools

import jax
import jax.numpy as jnp
from jax.experimental import pallas as pl
from jax.experimental.pallas import tpu as pltpu


def _sa_attn_kernel(x_ref, wcat_ref, bv_ref, wt_ref, bt_ref, y_ref, stats_ref,
                    *, n_sub, c4, mxu_dtype):
    """Stacked projections + attention + trans_conv + BN partial stats."""
    wcat = wcat_ref[...]          # (C//4 + C, C), already mxu_dtype
    wt = wt_ref[...]              # (C, C),        already mxu_dtype
    bv = bv_ref[...]              # (C, 1) f32
    bt = bt_ref[...]              # (C, 1) f32

    contract_dim0 = (((0,), (0,)), ((), ()))
    ysum = None
    ysq = None
    for b in range(n_sub):        # short, statically unrolled
        xb = x_ref[b]             # (C, N) f32 -- only this sub-batch is live
        # 1x1-conv projections as one matmul: rows [0:C//4] -> q=k, rest -> v.
        qkv = jnp.dot(wcat, xb.astype(mxu_dtype),
                      preferred_element_type=jnp.float32)            # (C//4+C, N)
        qk = qkv[:c4, :].astype(mxu_dtype)                            # (C//4, N)
        v = qkv[c4:, :] + bv                                          # (C, N) f32
        # energy[m, n] = sum_q qk[q, m] * qk[q, n]; contract dim 0 of both
        # operands directly (no explicit .T).  f32 accumulation keeps the
        # softmax logits accurate even with bf16 operands.
        energy = jax.lax.dot_general(qk, qk, dimension_numbers=contract_dim0,
                                     preferred_element_type=jnp.float32)  # (N, N)
        mx = jnp.max(energy, axis=-1, keepdims=True)
        e = jnp.exp(energy - mx)
        att = e * pl.reciprocal(jnp.sum(e, axis=-1, keepdims=True), approx=True)
        # attention / (1e-9 + attention.sum(dim=1, keepdims=True)) -> column sums.
        att = att * pl.reciprocal(1e-9 + jnp.sum(att, axis=0, keepdims=True),
                                  approx=True)
        x_r = jnp.dot(v.astype(mxu_dtype), att.astype(mxu_dtype),
                      preferred_element_type=jnp.float32)             # (C, N)
        d = (xb - x_r).astype(mxu_dtype)
        yb = jnp.dot(wt, d, preferred_element_type=jnp.float32) + bt  # (C, N)
        y_ref[b] = yb.astype(y_ref.dtype)   # store now -> live range ends here
        # BatchNorm partial sums (f32), accumulated across the sub-batches.
        # TODO(synk): E[y^2]-E[y]^2 combine can cancel if |mean| >> std; fine
        # at f32 for these activation scales.
        s = jnp.sum(yb, axis=-1)                                      # (C,)
        s2 = jnp.sum(yb * yb, axis=-1)                                # (C,)
        ysum = s if ysum is None else ysum + s
        ysq = s2 if ysq is None else ysq + s2

    # Lane-dense stats: C on the 128-lane axis, two plain row stores.
    stats_ref[0, 0, :] = ysum
    stats_ref[0, 1, :] = ysq


def _bn_relu_res_kernel(x_ref, y_ref, scale_ref, shift_ref, out_ref):
    """out = x + relu(y * scale + shift) -- purely elementwise, HBM-bound."""
    bn = y_ref[...] * scale_ref[...] + shift_ref[...]
    out_ref[...] = (x_ref[...] + jnp.maximum(bn, 0.0)).astype(out_ref.dtype)


def _vmem_estimate_bytes(block_b, C, N):
    """Rough per-step VMEM working set for kernel 1 (f32 bytes)."""
    c4 = C // 4
    io = 2 * (2 * block_b * C * N * 4)                 # double-buffered x + y tiles
    w = 2 * ((c4 + C) * C + C * C + 2 * C) * 4         # resident weights (2x slack)
    tmp = (2 * N * N + 4 * C * N + (c4 + C) * N) * 4   # per-sub-batch temporaries
    return io + w + tmp


def sa_layer(x, params, *, eps=1e-5, block_b=None, mxu_dtype=jnp.bfloat16):
    B, C, N = x.shape
    assert C % 4 == 0, "SA_Layer requires channels divisible by 4"
    c4 = C // 4

    if block_b is None:
        # Largest batch group that (a) leaves >= 2 grid steps (pipeline overlap /
        # megacore sharding on v7x) and (b) fits a conservative VMEM budget that
        # is safe across v5e (16 MiB default scoped), v6e (128 MiB) and v7x
        # (64 MiB physical).
        budget = 24 * 2**20
        block_b = 1
        for cand in (8, 4, 2):
            if (B % cand == 0 and B // cand >= 2
                    and _vmem_estimate_bytes(cand, C, N) <= budget):
                block_b = cand
                break
        else:
            # Tiny B: take the whole batch in one wide step (single-TC friendly).
            if _vmem_estimate_bytes(B, C, N) <= budget:
                block_b = B
    assert B % block_b == 0
    grid_b = B // block_b

    vmem_limit = int(min(48 * 2**20,
                         max(2 * _vmem_estimate_bytes(block_b, C, N), 32 * 2**20)))

    # Grid-invariant weights pre-cast once; Wqk/Wv stacked for a single matmul.
    w_cat = jnp.concatenate([params["wqk"], params["wv"]], axis=0).astype(mxu_dtype)
    wt = params["wt"].astype(mxu_dtype)
    bv = params["bv"].reshape(C, 1).astype(jnp.float32)
    bt = params["bt"].reshape(C, 1).astype(jnp.float32)

    x32 = x.astype(jnp.float32)

    blk_spec = pl.BlockSpec((block_b, C, N), lambda g: (g, 0, 0))

    def const_spec(shape):
        # Constant block index -> data stays resident in VMEM across the grid.
        return pl.BlockSpec(shape, lambda g: (0,) * len(shape))

    kernel1 = functools.partial(_sa_attn_kernel, n_sub=block_b, c4=c4,
                                mxu_dtype=mxu_dtype)
    y, stats = pl.pallas_call(
        kernel1,
        grid=(grid_b,),
        in_specs=[blk_spec, const_spec((c4 + C, C)), const_spec((C, 1)),
                  const_spec((C, C)), const_spec((C, 1))],
        out_specs=(blk_spec, pl.BlockSpec((1, 2, C), lambda g: (g, 0, 0))),
        out_shape=(jax.ShapeDtypeStruct((B, C, N), jnp.float32),
                   jax.ShapeDtypeStruct((grid_b, 2, C), jnp.float32)),
        compiler_params=pltpu.CompilerParams(
            dimension_semantics=("parallel",), vmem_limit_bytes=vmem_limit),
    )(x32, w_cat, bv, wt, bt)

    # BatchNorm1d default (train) mode: biased batch statistics over (B, N).
    # TODO(synk): running_mean/running_var buffer updates (training-time side
    # effect) are not reproduced; only the forward output is.
    cnt = float(B * N)
    mean = jnp.sum(stats[:, 0, :], axis=0) / cnt                        # (C,)
    var = jnp.maximum(jnp.sum(stats[:, 1, :], axis=0) / cnt - mean * mean, 0.0)
    invstd = jax.lax.rsqrt(var + eps)
    scale = (invstd * params["gamma"]).reshape(1, C, 1).astype(jnp.float32)
    shift = (params["beta"] - mean * invstd * params["gamma"])
    shift = shift.reshape(1, C, 1).astype(jnp.float32)

    out = pl.pallas_call(
        _bn_relu_res_kernel,
        grid=(grid_b,),
        in_specs=[blk_spec, blk_spec, const_spec((1, C, 1)), const_spec((1, C, 1))],
        out_specs=blk_spec,
        out_shape=jax.ShapeDtypeStruct((B, C, N), jnp.float32),
        input_output_aliases={1: 0},   # out reuses y's HBM buffer (same shape/dtype)
        compiler_params=pltpu.CompilerParams(
            dimension_semantics=("parallel",), vmem_limit_bytes=vmem_limit),
    )(x32, y, scale, shift)

    return out.astype(x.dtype)


def _reference(x, params, eps=1e-5):
    """Pure-JAX reference matching the PyTorch forward (train-mode BN)."""
    qk = jnp.einsum("oc,bcn->bon", params["wqk"], x)
    v = jnp.einsum("oc,bcn->bon", params["wv"], x) + params["bv"][None, :, None]
    energy = jnp.einsum("bqm,bqn->bmn", qk, qk)
    att = jax.nn.softmax(energy, axis=-1)
    att = att / (1e-9 + jnp.sum(att, axis=1, keepdims=True))
    x_r = jnp.einsum("bcm,bmn->bcn", v, att)
    y = jnp.einsum("oc,bcn->bon", params["wt"], x - x_r) + params["bt"][None, :, None]
    mean = jnp.mean(y, axis=(0, 2), keepdims=True)
    var = jnp.mean((y - mean) ** 2, axis=(0, 2), keepdims=True)
    bn = (y - mean) * jax.lax.rsqrt(var + eps)
    bn = bn * params["gamma"][None, :, None] + params["beta"][None, :, None]
    return x + jnp.maximum(bn, 0.0)


if __name__ == "__main__":
    B, C, N = 8, 64, 128          # channels divisible by 4; N = one full lane width
    key = jax.random.PRNGKey(0)
    ks = jax.random.split(key, 6)
    params = {
        "wqk": 0.1 * jax.random.normal(ks[0], (C // 4, C), jnp.float32),
        "wv": 0.1 * jax.random.normal(ks[1], (C, C), jnp.float32),
        "bv": 0.1 * jax.random.normal(ks[2], (C,), jnp.float32),
        "wt": 0.1 * jax.random.normal(ks[3], (C, C), jnp.float32),
        "bt": 0.1 * jax.random.normal(ks[4], (C,), jnp.float32),
        "gamma": jnp.ones((C,), jnp.float32),
        "beta": jnp.zeros((C,), jnp.float32),
    }
    x = jax.random.normal(ks[5], (B, C, N), jnp.float32)

    ref = _reference(x, params)

    # Default path: bf16 MXU operands (fast on every TPU generation), f32
    # accumulation / softmax / BN stats.  Loose tolerance covers bf16 rounding
    # of the projection / energy / x_r operands.
    out = jax.block_until_ready(jax.jit(sa_layer)(x, params))
    assert out.shape == (B, C, N)
    assert jnp.allclose(out, ref, rtol=1e-1, atol=1e-1), "bf16-operand mismatch vs reference"

    # f32-operand path: tight check of the algorithm itself (only the approx
    # EUP reciprocals in the softmax normalizations differ from exact division).
    out_f32 = jax.block_until_ready(
        jax.jit(functools.partial(sa_layer, mxu_dtype=jnp.float32))(x, params))
    assert out_f32.shape == (B, C, N)
    assert jnp.allclose(out_f32, ref, rtol=1e-2, atol=1e-2), "f32 mismatch vs reference"

    print("KERNEL_OK")
</pallas_src>

<mosaic_0001>
module attributes {stable_mosaic.version = 11 : i64} {
  func.func @_sa_attn_kernel(%arg0: i32, %arg1: memref<4x64x128xf32, #tpu.memory_space<vmem>>, %arg2: memref<80x64xbf16, #tpu.memory_space<vmem>>, %arg3: memref<64x1xf32, #tpu.memory_space<vmem>>, %arg4: memref<64x64xbf16, #tpu.memory_space<vmem>>, %arg5: memref<64x1xf32, #tpu.memory_space<vmem>>, %arg6: memref<4x64x128xf32, #tpu.memory_space<vmem>>, %arg7: memref<1x2x64xf32, #tpu.memory_space<vmem>>) attributes {dimension_semantics = [#tpu.dimension_semantics<parallel>], iteration_bounds = array<i64: 2>, scalar_prefetch = 0 : i64, scratch_operands = 0 : i64, tpu.core_type = #tpu.core_type<tc>, window_params = [{transform_indices = @transform_0, window_bounds = array<i64: 4, 64, 128>}, {pipeline_mode = #tpu.pipeline_mode<synchronous>, transform_indices = @transform_1, window_bounds = array<i64: 80, 64>}, {pipeline_mode = #tpu.pipeline_mode<synchronous>, transform_indices = @transform_2, window_bounds = array<i64: 64, 1>}, {pipeline_mode = #tpu.pipeline_mode<synchronous>, transform_indices = @transform_3, window_bounds = array<i64: 64, 64>}, {pipeline_mode = #tpu.pipeline_mode<synchronous>, transform_indices = @transform_4, window_bounds = array<i64: 64, 1>}, {transform_indices = @transform_5, window_bounds = array<i64: 4, 64, 128>}, {transform_indices = @transform_6, window_bounds = array<i64: 1, 2, 64>}]} {
    %c0 = arith.constant 0 : index
    %c0_0 = arith.constant 0 : index
    %0 = vector.load %arg2[%c0, %c0_0] : memref<80x64xbf16, #tpu.memory_space<vmem>>, vector<80x64xbf16>
    %c0_1 = arith.constant 0 : index
    %c0_2 = arith.constant 0 : index
    %1 = vector.load %arg4[%c0_1, %c0_2] : memref<64x64xbf16, #tpu.memory_space<vmem>>, vector<64x64xbf16>
    %c0_3 = arith.constant 0 : index
    %c0_4 = arith.constant 0 : index
    %2 = vector.load %arg3[%c0_3, %c0_4] : memref<64x1xf32, #tpu.memory_space<vmem>>, vector<64x1xf32>
    %c0_5 = arith.constant 0 : index
    %c0_6 = arith.constant 0 : index
    %3 = vector.load %arg5[%c0_5, %c0_6] : memref<64x1xf32, #tpu.memory_space<vmem>>, vector<64x1xf32>
    %c0_7 = arith.constant 0 : index
    %c0_8 = arith.constant 0 : index
    %c0_9 = arith.constant 0 : index
    %4 = vector.load %arg1[%c0_7, %c0_8, %c0_9] : memref<4x64x128xf32, #tpu.memory_space<vmem>>, vector<1x64x128xf32>
    %5 = vector.shape_cast %4 : vector<1x64x128xf32> to vector<64x128xf32>
    %6 = arith.truncf %5 : vector<64x128xf32> to vector<64x128xbf16>
    %cst = arith.constant dense<0.000000e+00> : vector<80x128xf32>
    %7 = tpu.matmul %0, %6, %cst {dimension_numbers = #tpu.dot_dimension_numbers<[1], [0], [0], [1], [0, 0, 1, 1], [], []>} : vector<80x64xbf16>, vector<64x128xbf16>, vector<80x128xf32> -> vector<80x128xf32>
    %8 = vector.extract_strided_slice %7 {offsets = [0, 0], sizes = [16, 128], strides = [1, 1]} : vector<80x128xf32> to vector<16x128xf32>
    %9 = arith.truncf %8 : vector<16x128xf32> to vector<16x128xbf16>
    %10 = vector.extract_strided_slice %7 {offsets = [16, 0], sizes = [64, 128], strides = [1, 1]} : vector<80x128xf32> to vector<64x128xf32>
    %11 = vector.broadcast %2 : vector<64x1xf32> to vector<64x128xf32>
    %12 = arith.addf %10, %11 : vector<64x128xf32>
    %cst_10 = arith.constant dense<0.000000e+00> : vector<128x128xf32>
    %13 = tpu.matmul %9, %9, %cst_10 {dimension_numbers = #tpu.dot_dimension_numbers<[0], [0], [1], [1], [0, 1, 1, 1], [], []>} : vector<16x128xbf16>, vector<16x128xbf16>, vector<128x128xf32> -> vector<128x128xf32>
    %cst_11 = arith.constant dense<0xFF800000> : vector<128xf32>
    %14 = vector.multi_reduction <maximumf>, %13, %cst_11 [1] : vector<128x128xf32> to vector<128xf32>
    %15 = vector.shape_cast %14 : vector<128xf32> to vector<128x1xf32>
    %16 = vector.broadcast %15 : vector<128x1xf32> to vector<128x128xf32>
    %17 = arith.subf %13, %16 : vector<128x128xf32>
    %18 = math.exp %17 : vector<128x128xf32>
    %cst_12 = arith.constant dense<0.000000e+00> : vector<128xf32>
    %19 = vector.multi_reduction <add>, %18, %cst_12 [1] : vector<128x128xf32> to vector<128xf32>
    %20 = vector.shape_cast %19 : vector<128xf32> to vector<128x1xf32>
    %21 = tpu.reciprocal %20 {approx = true} : vector<128x1xf32> -> vector<128x1xf32>
    %22 = vector.broadcast %21 : vector<128x1xf32> to vector<128x128xf32>
    %23 = arith.mulf %18, %22 : vector<128x128xf32>
    %cst_13 = arith.constant dense<0.000000e+00> : vector<128xf32>
    %24 = vector.multi_reduction <add>, %23, %cst_13 [0] : vector<128x128xf32> to vector<128xf32>
    %25 = vector.shape_cast %24 : vector<128xf32> to vector<1x128xf32>
    %cst_14 = arith.constant 9.99999971E-10 : f32
    %26 = vector.broadcast %cst_14 : f32 to vector<1x128xf32>
    %27 = arith.addf %26, %25 : vector<1x128xf32>
    %28 = tpu.reciprocal %27 {approx = true} : vector<1x128xf32> -> vector<1x128xf32>
    %29 = vector.broadcast %28 : vector<1x128xf32> to vector<128x128xf32>
    %30 = arith.mulf %23, %29 : vector<128x128xf32>
    %31 = arith.truncf %12 : vector<64x128xf32> to vector<64x128xbf16>
    %32 = arith.truncf %30 : vector<128x128xf32> to vector<128x128xbf16>
    %cst_15 = arith.constant dense<0.000000e+00> : vector<64x128xf32>
    %33 = tpu.matmul %31, %32, %cst_15 {dimension_numbers = #tpu.dot_dimension_numbers<[1], [0], [0], [1], [0, 0, 1, 1], [], []>} : vector<64x128xbf16>, vector<128x128xbf16>, vector<64x128xf32> -> vector<64x128xf32>
    %34 = arith.subf %5, %33 : vector<64x128xf32>
    %35 = arith.truncf %34 : vector<64x128xf32> to vector<64x128xbf16>
    %cst_16 = arith.constant dense<0.000000e+00> : vector<64x128xf32>
    %36 = tpu.matmul %1, %35, %cst_16 {dimension_numbers = #tpu.dot_dimension_numbers<[1], [0], [0], [1], [0, 0, 1, 1], [], []>} : vector<64x64xbf16>, vector<64x128xbf16>, vector<64x128xf32> -> vector<64x128xf32>
    %37 = vector.broadcast %3 : vector<64x1xf32> to vector<64x128xf32>
    %38 = arith.addf %36, %37 : vector<64x128xf32>
    %c0_17 = arith.constant 0 : index
    %c0_18 = arith.constant 0 : index
    %c0_19 = arith.constant 0 : index
    %39 = vector.load %arg6[%c0_17, %c0_18, %c0_19] : memref<4x64x128xf32, #tpu.memory_space<vmem>>, vector<1x64x128xf32>
    %40 = vector.shape_cast %39 : vector<1x64x128xf32> to vector<64x128xf32>
    %41 = vector.shape_cast %38 : vector<64x128xf32> to vector<1x64x128xf32>
    tpu.vector_store %arg6[%c0_17, %c0_18, %c0_19], %41 {strides = array<i32>} : memref<4x64x128xf32, #tpu.memory_space<vmem>>, vector<1x64x128xf32>,
    %cst_20 = arith.constant dense<0.000000e+00> : vector<64xf32>
    %42 = vector.multi_reduction <add>, %38, %cst_20 [1] : vector<64x128xf32> to vector<64xf32>
    %43 = arith.mulf %38, %38 : vector<64x128xf32>
    %cst_21 = arith.constant dense<0.000000e+00> : vector<64xf32>
    %44 = vector.multi_reduction <add>, %43, %cst_21 [1] : vector<64x128xf32> to vector<64xf32>
    %c1 = arith.constant 1 : index
    %c0_22 = arith.constant 0 : index
    %c0_23 = arith.constant 0 : index
    %45 = vector.load %arg1[%c1, %c0_22, %c0_23] : memref<4x64x128xf32, #tpu.memory_space<vmem>>, vector<1x64x128xf32>
    %46 = vector.shape_cast %45 : vector<1x64x128xf32> to vector<64x128xf32>
    %47 = arith.truncf %46 : vector<64x128xf32> to vector<64x128xbf16>
    %cst_24 = arith.constant dense<0.000000e+00> : vector<80x128xf32>
    %48 = tpu.matmul %0, %47, %cst_24 {dimension_numbers = #tpu.dot_dimension_numbers<[1], [0], [0], [1], [0, 0, 1, 1], [], []>} : vector<80x64xbf16>, vector<64x128xbf16>, vector<80x128xf32> -> vector<80x128xf32>
    %49 = vector.extract_strided_slice %48 {offsets = [0, 0], sizes = [16, 128], strides = [1, 1]} : vector<80x128xf32> to vector<16x128xf32>
    %50 = arith.truncf %49 : vector<16x128xf32> to vector<16x128xbf16>
    %51 = vector.extract_strided_slice %48 {offsets = [16, 0], sizes = [64, 128], strides = [1, 1]} : vector<80x128xf32> to vector<64x128xf32>
    %52 = vector.broadcast %2 : vector<64x1xf32> to vector<64x128xf32>
    %53 = arith.addf %51, %52 : vector<64x128xf32>
    %cst_25 = arith.constant dense<0.000000e+00> : vector<128x128xf32>
    %54 = tpu.matmul %50, %50, %cst_25 {dimension_numbers = #tpu.dot_dimension_numbers<[0], [0], [1], [1], [0, 1, 1, 1], [], []>} : vector<16x128xbf16>, vector<16x128xbf16>, vector<128x128xf32> -> vector<128x128xf32>
    %cst_26 = arith.constant dense<0xFF800000> : vector<128xf32>
    %55 = vector.multi_reduction <maximumf>, %54, %cst_26 [1] : vector<128x128xf32> to vector<128xf32>
    %56 = vector.shape_cast %55 : vector<128xf32> to vector<128x1xf32>
    %57 = vector.broadcast %56 : vector<128x1xf32> to vector<128x128xf32>
    %58 = arith.subf %54, %57 : vector<128x128xf32>
    %59 = math.exp %58 : vector<128x128xf32>
    %cst_27 = arith.constant dense<0.000000e+00> : vector<128xf32>
    %60 = vector.multi_reduction <add>, %59, %cst_27 [1] : vector<128x128xf32> to vector<128xf32>
    %61 = vector.shape_cast %60 : vector<128xf32> to vector<128x1xf32>
    %62 = tpu.reciprocal %61 {approx = true} : vector<128x1xf32> -> vector<128x1xf32>
    %63 = vector.broadcast %62 : vector<128x1xf32> to vector<128x128xf32>
    %64 = arith.mulf %59, %63 : vector<128x128xf32>
    %cst_28 = arith.constant dense<0.000000e+00> : vector<128xf32>
    %65 = vector.multi_reduction <add>, %64, %cst_28 [0] : vector<128x128xf32> to vector<128xf32>
    %66 = vector.shape_cast %65 : vector<128xf32> to vector<1x128xf32>
    %cst_29 = arith.constant 9.99999971E-10 : f32
    %67 = vector.broadcast %cst_29 : f32 to vector<1x128xf32>
    %68 = arith.addf %67, %66 : vector<1x128xf32>
    %69 = tpu.reciprocal %68 {approx = true} : vector<1x128xf32> -> vector<1x128xf32>
    %70 = vector.broadcast %69 : vector<1x128xf32> to vector<128x128xf32>
    %71 = arith.mulf %64, %70 : vector<128x128xf32>
    %72 = arith.truncf %53 : vector<64x128xf32> to vector<64x128xbf16>
    %73 = arith.truncf %71 : vector<128x128xf32> to vector<128x128xbf16>
    %cst_30 = arith.constant dense<0.000000e+00> : vector<64x128xf32>
    %74 = tpu.matmul %72, %73, %cst_30 {dimension_numbers = #tpu.dot_dimension_numbers<[1], [0], [0], [1], [0, 0, 1, 1], [], []>} : vector<64x128xbf16>, vector<128x128xbf16>, vector<64x128xf32> -> vector<64x128xf32>
    %75 = arith.subf %46, %74 : vector<64x128xf32>
    %76 = arith.truncf %75 : vector<64x128xf32> to vector<64x128xbf16>
    %cst_31 = arith.constant dense<0.000000e+00> : vector<64x128xf32>
    %77 = tpu.matmul %1, %76, %cst_31 {dimension_numbers = #tpu.dot_dimension_numbers<[1], [0], [0], [1], [0, 0, 1, 1], [], []>} : vector<64x64xbf16>, vector<64x128xbf16>, vector<64x128xf32> -> vector<64x128xf32>
    %78 = vector.broadcast %3 : vector<64x1xf32> to vector<64x128xf32>
    %79 = arith.addf %77, %78 : vector<64x128xf32>
    %c1_32 = arith.constant 1 : index
    %c0_33 = arith.constant 0 : index
    %c0_34 = arith.constant 0 : index
    %80 = vector.load %arg6[%c1_32, %c0_33, %c0_34] : memref<4x64x128xf32, #tpu.memory_space<vmem>>, vector<1x64x128xf32>
    %81 = vector.shape_cast %80 : vector<1x64x128xf32> to vector<64x128xf32>
    %82 = vector.shape_cast %79 : vector<64x128xf32> to vector<1x64x128xf32>
    tpu.vector_store %arg6[%c1_32, %c0_33, %c0_34], %82 {strides = array<i32>} : memref<4x64x128xf32, #tpu.memory_space<vmem>>, vector<1x64x128xf32>,
    %cst_35 = arith.constant dense<0.000000e+00> : vector<64xf32>
    %83 = vector.multi_reduction <add>, %79, %cst_35 [1] : vector<64x128xf32> to vector<64xf32>
    %84 = arith.mulf %79, %79 : vector<64x128xf32>
    %cst_36 = arith.constant dense<0.000000e+00> : vector<64xf32>
    %85 = vector.multi_reduction <add>, %84, %cst_36 [1] : vector<64x128xf32> to vector<64xf32>
    %86 = arith.addf %42, %83 : vector<64xf32>
    %87 = arith.addf %44, %85 : vector<64xf32>
    %c2 = arith.constant 2 : index
    %c0_37 = arith.constant 0 : index
    %c0_38 = arith.constant 0 : index
    %88 = vector.load %arg1[%c2, %c0_37, %c0_38] : memref<4x64x128xf32, #tpu.memory_space<vmem>>, vector<1x64x128xf32>
    %89 = vector.shape_cast %88 : vector<1x64x128xf32> to vector<64x128xf32>
    %90 = arith.truncf %89 : vector<64x128xf32> to vector<64x128xbf16>
    %cst_39 = arith.constant dense<0.000000e+00> : vector<80x128xf32>
    %91 = tpu.matmul %0, %90, %cst_39 {dimension_numbers = #tpu.dot_dimension_numbers<[1], [0], [0], [1], [0, 0, 1, 1], [], []>} : vector<80x64xbf16>, vector<64x128xbf16>, vector<80x128xf32> -> vector<80x128xf32>
    %92 = vector.extract_strided_slice %91 {offsets = [0, 0], sizes = [16, 128], strides = [1, 1]} : vector<80x128xf32> to vector<16x128xf32>
    %93 = arith.truncf %92 : vector<16x128xf32> to vector<16x128xbf16>
    %94 = vector.extract_strided_slice %91 {offsets = [16, 0], sizes = [64, 128], strides = [1, 1]} : vector<80x128xf32> to vector<64x128xf32>
    %95 = vector.broadcast %2 : vector<64x1xf32> to vector<64x128xf32>
    %96 = arith.addf %94, %95 : vector<64x128xf32>
    %cst_40 = arith.constant dense<0.000000e+00> : vector<128x128xf32>
    %97 = tpu.matmul %93, %93, %cst_40 {dimension_numbers = #tpu.dot_dimension_numbers<[0], [0], [1], [1], [0, 1, 1, 1], [], []>} : vector<16x128xbf16>, vector<16x128xbf16>, vector<128x128xf32> -> vector<128x128xf32>
    %cst_41 = arith.constant dense<0xFF800000> : vector<128xf32>
    %98 = vector.multi_reduction <maximumf>, %97, %cst_41 [1] : vector<128x128xf32> to vector<128xf32>
    %99 = vector.shape_cast %98 : vector<128xf32> to vector<128x1xf32>
    %100 = vector.broadcast %99 : vector<128x1xf32> to vector<128x128xf32>
    %101 = arith.subf %97, %100 : vector<128x128xf32>
    %102 = math.exp %101 : vector<128x128xf32>
    %cst_42 = arith.constant dense<0.000000e+00> : vector<128xf32>
    %103 = vector.multi_reduction <add>, %102, %cst_42 [1] : vector<128x128xf32> to vector<128xf32>
    %104 = vector.shape_cast %103 : vector<128xf32> to vector<128x1xf32>
    %105 = tpu.reciprocal %104 {approx = true} : vector<128x1xf32> -> vector<128x1xf32>
    %106 = vector.broadcast %105 : vector<128x1xf32> to vector<128x128xf32>
    %107 = arith.mulf %102, %106 : vector<128x128xf32>
    %cst_43 = arith.constant dense<0.000000e+00> : vector<128xf32>
    %108 = vector.multi_reduction <add>, %107, %cst_43 [0] : vector<128x128xf32> to vector<128xf32>
    %109 = vector.shape_cast %108 : vector<128xf32> to vector<1x128xf32>
    %cst_44 = arith.constant 9.99999971E-10 : f32
    %110 = vector.broadcast %cst_44 : f32 to vector<1x128xf32>
    %111 = arith.addf %110, %109 : vector<1x128xf32>
    %112 = tpu.reciprocal %111 {approx = true} : vector<1x128xf32> -> vector<1x128xf32>
    %113 = vector.broadcast %112 : vector<1x128xf32> to vector<128x128xf32>
    %114 = arith.mulf %107, %113 : vector<128x128xf32>
    %115 = arith.truncf %96 : vector<64x128xf32> to vector<64x128xbf16>
    %116 = arith.truncf %114 : vector<128x128xf32> to vector<128x128xbf16>
    %cst_45 = arith.constant dense<0.000000e+00> : vector<64x128xf32>
    %117 = tpu.matmul %115, %116, %cst_45 {dimension_numbers = #tpu.dot_dimension_numbers<[1], [0], [0], [1], [0, 0, 1, 1], [], []>} : vector<64x128xbf16>, vector<128x128xbf16>, vector<64x128xf32> -> vector<64x128xf32>
    %118 = arith.subf %89, %117 : vector<64x128xf32>
    %119 = arith.truncf %118 : vector<64x128xf32> to vector<64x128xbf16>
    %cst_46 = arith.constant dense<0.000000e+00> : vector<64x128xf32>
    %120 = tpu.matmul %1, %119, %cst_46 {dimension_numbers = #tpu.dot_dimension_numbers<[1], [0], [0], [1], [0, 0, 1, 1], [], []>} : vector<64x64xbf16>, vector<64x128xbf16>, vector<64x128xf32> -> vector<64x128xf32>
    %121 = vector.broadcast %3 : vector<64x1xf32> to vector<64x128xf32>
    %122 = arith.addf %120, %121 : vector<64x128xf32>
    %c2_47 = arith.constant 2 : index
    %c0_48 = arith.constant 0 : index
    %c0_49 = arith.constant 0 : index
    %123 = vector.load %arg6[%c2_47, %c0_48, %c0_49] : memref<4x64x128xf32, #tpu.memory_space<vmem>>, vector<1x64x128xf32>
    %124 = vector.shape_cast %123 : vector<1x64x128xf32> to vector<64x128xf32>
    %125 = vector.shape_cast %122 : vector<64x128xf32> to vector<1x64x128xf32>
    tpu.vector_store %arg6[%c2_47, %c0_48, %c0_49], %125 {strides = array<i32>} : memref<4x64x128xf32, #tpu.memory_space<vmem>>, vector<1x64x128xf32>,
    %cst_50 = arith.constant dense<0.000000e+00> : vector<64xf32>
    %126 = vector.multi_reduction <add>, %122, %cst_50 [1] : vector<64x128xf32> to vector<64xf32>
    %127 = arith.mulf %122, %122 : vector<64x128xf32>
    %cst_51 = arith.constant dense<0.000000e+00> : vector<64xf32>
    %128 = vector.multi_reduction <add>, %127, %cst_51 [1] : vector<64x128xf32> to vector<64xf32>
    %129 = arith.addf %86, %126 : vector<64xf32>
    %130 = arith.addf %87, %128 : vector<64xf32>
    %c3 = arith.constant 3 : index
    %c0_52 = arith.constant 0 : index
    %c0_53 = arith.constant 0 : index
    %131 = vector.load %arg1[%c3, %c0_52, %c0_53] : memref<4x64x128xf32, #tpu.memory_space<vmem>>, vector<1x64x128xf32>
    %132 = vector.shape_cast %131 : vector<1x64x128xf32> to vector<64x128xf32>
    %133 = arith.truncf %132 : vector<64x128xf32> to vector<64x128xbf16>
    %cst_54 = arith.constant dense<0.000000e+00> : vector<80x128xf32>
    %134 = tpu.matmul %0, %133, %cst_54 {dimension_numbers = #tpu.dot_dimension_numbers<[1], [0], [0], [1], [0, 0, 1, 1], [], []>} : vector<80x64xbf16>, vector<64x128xbf16>, vector<80x128xf32> -> vector<80x128xf32>
    %135 = vector.extract_strided_slice %134 {offsets = [0, 0], sizes = [16, 128], strides = [1, 1]} : vector<80x128xf32> to vector<16x128xf32>
    %136 = arith.truncf %135 : vector<16x128xf32> to vector<16x128xbf16>
    %137 = vector.extract_strided_slice %134 {offsets = [16, 0], sizes = [64, 128], strides = [1, 1]} : vector<80x128xf32> to vector<64x128xf32>
    %138 = vector.broadcast %2 : vector<64x1xf32> to vector<64x128xf32>
    %139 = arith.addf %137, %138 : vector<64x128xf32>
    %cst_55 = arith.constant dense<0.000000e+00> : vector<128x128xf32>
    %140 = tpu.matmul %136, %136, %cst_55 {dimension_numbers = #tpu.dot_dimension_numbers<[0], [0], [1], [1], [0, 1, 1, 1], [], []>} : vector<16x128xbf16>, vector<16x128xbf16>, vector<128x128xf32> -> vector<128x128xf32>
    %cst_56 = arith.constant dense<0xFF800000> : vector<128xf32>
    %141 = vector.multi_reduction <maximumf>, %140, %cst_56 [1] : vector<128x128xf32> to vector<128xf32>
    %142 = vector.shape_cast %141 : vector<128xf32> to vector<128x1xf32>
    %143 = vector.broadcast %142 : vector<128x1xf32> to vector<128x128xf32>
    %144 = arith.subf %140, %143 : vector<128x128xf32>
    %145 = math.exp %144 : vector<128x128xf32>
    %cst_57 = arith.constant dense<0.000000e+00> : vector<128xf32>
    %146 = vector.multi_reduction <add>, %145, %cst_57 [1] : vector<128x128xf32> to vector<128xf32>
    %147 = vector.shape_cast %146 : vector<128xf32> to vector<128x1xf32>
    %148 = tpu.reciprocal %147 {approx = true} : vector<128x1xf32> -> vector<128x1xf32>
    %149 = vector.broadcast %148 : vector<128x1xf32> to vector<128x128xf32>
    %150 = arith.mulf %145, %149 : vector<128x128xf32>
    %cst_58 = arith.constant dense<0.000000e+00> : vector<128xf32>
    %151 = vector.multi_reduction <add>, %150, %cst_58 [0] : vector<128x128xf32> to vector<128xf32>
    %152 = vector.shape_cast %151 : vector<128xf32> to vector<1x128xf32>
    %cst_59 = arith.constant 9.99999971E-10 : f32
    %153 = vector.broadcast %cst_59 : f32 to vector<1x128xf32>
    %154 = arith.addf %153, %152 : vector<1x128xf32>
    %155 = tpu.reciprocal %154 {approx = true} : vector<1x128xf32> -> vector<1x128xf32>
    %156 = vector.broadcast %155 : vector<1x128xf32> to vector<128x128xf32>
    %157 = arith.mulf %150, %156 : vector<128x128xf32>
    %158 = arith.truncf %139 : vector<64x128xf32> to vector<64x128xbf16>
    %159 = arith.truncf %157 : vector<128x128xf32> to vector<128x128xbf16>
    %cst_60 = arith.constant dense<0.000000e+00> : vector<64x128xf32>
    %160 = tpu.matmul %158, %159, %cst_60 {dimension_numbers = #tpu.dot_dimension_numbers<[1], [0], [0], [1], [0, 0, 1, 1], [], []>} : vector<64x128xbf16>, vector<128x128xbf16>, vector<64x128xf32> -> vector<64x128xf32>
    %161 = arith.subf %132, %160 : vector<64x128xf32>
    %162 = arith.truncf %161 : vector<64x128xf32> to vector<64x128xbf16>
    %cst_61 = arith.constant dense<0.000000e+00> : vector<64x128xf32>
    %163 = tpu.matmul %1, %162, %cst_61 {dimension_numbers = #tpu.dot_dimension_numbers<[1], [0], [0], [1], [0, 0, 1, 1], [], []>} : vector<64x64xbf16>, vector<64x128xbf16>, vector<64x128xf32> -> vector<64x128xf32>
    %164 = vector.broadcast %3 : vector<64x1xf32> to vector<64x128xf32>
    %165 = arith.addf %163, %164 : vector<64x128xf32>
    %c3_62 = arith.constant 3 : index
    %c0_63 = arith.constant 0 : index
    %c0_64 = arith.constant 0 : index
    %166 = vector.load %arg6[%c3_62, %c0_63, %c0_64] : memref<4x64x128xf32, #tpu.memory_space<vmem>>, vector<1x64x128xf32>
    %167 = vector.shape_cast %166 : vector<1x64x128xf32> to vector<64x128xf32>
    %168 = vector.shape_cast %165 : vector<64x128xf32> to vector<1x64x128xf32>
    tpu.vector_store %arg6[%c3_62, %c0_63, %c0_64], %168 {strides = array<i32>} : memref<4x64x128xf32, #tpu.memory_space<vmem>>, vector<1x64x128xf32>,
    %cst_65 = arith.constant dense<0.000000e+00> : vector<64xf32>
    %169 = vector.multi_reduction <add>, %165, %cst_65 [1] : vector<64x128xf32> to vector<64xf32>
    %170 = arith.mulf %165, %165 : vector<64x128xf32>
    %cst_66 = arith.constant dense<0.000000e+00> : vector<64xf32>
    %171 = vector.multi_reduction <add>, %170, %cst_66 [1] : vector<64x128xf32> to vector<64xf32>
    %172 = arith.addf %129, %169 : vector<64xf32>
    %173 = arith.addf %130, %171 : vector<64xf32>
    %c0_67 = arith.constant 0 : index
    %c0_68 = arith.constant 0 : index
    %c0_69 = arith.constant 0 : index
    %174 = vector.load %arg7[%c0_67, %c0_68, %c0_69] : memref<1x2x64xf32, #tpu.memory_space<vmem>>, vector<1x1x64xf32>
    %175 = vector.shape_cast %174 : vector<1x1x64xf32> to vector<64xf32>
    %176 = vector.shape_cast %172 : vector<64xf32> to vector<1x1x64xf32>
    tpu.vector_store %arg7[%c0_67, %c0_68, %c0_69], %176 {strides = array<i32>} : memref<1x2x64xf32, #tpu.memory_space<vmem>>, vector<1x1x64xf32>,
    %c0_70 = arith.constant 0 : index
    %c1_71 = arith.constant 1 : index
    %c0_72 = arith.constant 0 : index
    %177 = vector.load %arg7[%c0_70, %c1_71, %c0_72] : memref<1x2x64xf32, #tpu.memory_space<vmem>>, vector<1x1x64xf32>
    %178 = vector.shape_cast %177 : vector<1x1x64xf32> to vector<64xf32>
    %179 = vector.shape_cast %173 : vector<64xf32> to vector<1x1x64xf32>
    tpu.vector_store %arg7[%c0_70, %c1_71, %c0_72], %179 {strides = array<i32>} : memref<1x2x64xf32, #tpu.memory_space<vmem>>, vector<1x1x64xf32>,
    return
  }
  func.func @transform_0(%arg0: i32) -> (i32, i32, i32) {
    %c0_i32 = arith.constant 0 : i32
    %c0_i32_0 = arith.constant 0 : i32
    %c0_i32_1 = arith.constant 0 : i32
    return %arg0, %c0_i32, %c0_i32_0 : i32, i32, i32
  }
  func.func @transform_1(%arg0: i32) -> (i32, i32) {
    %c0_i32 = arith.constant 0 : i32
    %c0_i32_0 = arith.constant 0 : i32
    %c0_i32_1 = arith.constant 0 : i32
    return %c0_i32, %c0_i32_0 : i32, i32
  }
  func.func @transform_2(%arg0: i32) -> (i32, i32) {
    %c0_i32 = arith.constant 0 : i32
    %c0_i32_0 = arith.constant 0 : i32
    %c0_i32_1 = arith.constant 0 : i32
    return %c0_i32, %c0_i32_0 : i32, i32
  }
  func.func @transform_3(%arg0: i32) -> (i32, i32) {
    %c0_i32 = arith.constant 0 : i32
    %c0_i32_0 = arith.constant 0 : i32
    %c0_i32_1 = arith.constant 0 : i32
    return %c0_i32, %c0_i32_0 : i32, i32
  }
  func.func @transform_4(%arg0: i32) -> (i32, i32) {
    %c0_i32 = arith.constant 0 : i32
    %c0_i32_0 = arith.constant 0 : i32
    %c0_i32_1 = arith.constant 0 : i32
    return %c0_i32, %c0_i32_0 : i32, i32
  }
  func.func @transform_5(%arg0: i32) -> (i32, i32, i32) {
    %c0_i32 = arith.constant 0 : i32
    %c0_i32_0 = arith.constant 0 : i32
    %c0_i32_1 = arith.constant 0 : i32
    return %arg0, %c0_i32, %c0_i32_0 : i32, i32, i32
  }
  func.func @transform_6(%arg0: i32) -> (i32, i32, i32) {
    %c0_i32 = arith.constant 0 : i32
    %c0_i32_0 = arith.constant 0 : i32
    %c0_i32_1 = arith.constant 0 : i32
    return %arg0, %c0_i32, %c0_i32_0 : i32, i32, i32
  }
}

module attributes {stable_mosaic.version = 11 : i64} {
  func.func @_bn_relu_res_kernel(%arg0: i32, %arg1: memref<4x64x128xf32, #tpu.memory_space<vmem>>, %arg2: memref<4x64x128xf32, #tpu.memory_space<vmem>>, %arg3: memref<1x64x1xf32, #tpu.memory_space<vmem>>, %arg4: memref<1x64x1xf32, #tpu.memory_space<vmem>>, %arg5: memref<4x64x128xf32, #tpu.memory_space<vmem>>) attributes {dimension_semantics = [#tpu.dimension_semantics<parallel>], iteration_bounds = array<i64: 2>, scalar_prefetch = 0 : i64, scratch_operands = 0 : i64, tpu.core_type = #tpu.core_type<tc>, window_params = [{transform_indices = @transform_0, window_bounds = array<i64: 4, 64, 128>}, {transform_indices = @transform_1, window_bounds = array<i64: 4, 64, 128>}, {pipeline_mode = #tpu.pipeline_mode<synchronous>, transform_indices = @transform_2, window_bounds = array<i64: 1, 64, 1>}, {pipeline_mode = #tpu.pipeline_mode<synchronous>, transform_indices = @transform_3, window_bounds = array<i64: 1, 64, 1>}, {transform_indices = @transform_4, window_bounds = array<i64: 4, 64, 128>}]} {
    %c0 = arith.constant 0 : index
    %c0_0 = arith.constant 0 : index
    %c0_1 = arith.constant 0 : index
    %0 = vector.load %arg2[%c0, %c0_0, %c0_1] : memref<4x64x128xf32, #tpu.memory_space<vmem>>, vector<4x64x128xf32>
    %c0_2 = arith.constant 0 : index
    %c0_3 = arith.constant 0 : index
    %c0_4 = arith.constant 0 : index
    %1 = vector.load %arg3[%c0_2, %c0_3, %c0_4] : memref<1x64x1xf32, #tpu.memory_space<vmem>>, vector<1x64x1xf32>
    %2 = vector.broadcast %1 : vector<1x64x1xf32> to vector<4x64x128xf32>
    %3 = arith.mulf %0, %2 : vector<4x64x128xf32>
    %c0_5 = arith.constant 0 : index
    %c0_6 = arith.constant 0 : index
    %c0_7 = arith.constant 0 : index
    %4 = vector.load %arg4[%c0_5, %c0_6, %c0_7] : memref<1x64x1xf32, #tpu.memory_space<vmem>>, vector<1x64x1xf32>
    %5 = vector.broadcast %4 : vector<1x64x1xf32> to vector<4x64x128xf32>
    %6 = arith.addf %3, %5 : vector<4x64x128xf32>
    %c0_8 = arith.constant 0 : index
    %c0_9 = arith.constant 0 : index
    %c0_10 = arith.constant 0 : index
    %7 = vector.load %arg1[%c0_8, %c0_9, %c0_10] : memref<4x64x128xf32, #tpu.memory_space<vmem>>, vector<4x64x128xf32>
    %cst = arith.constant 0.000000e+00 : f32
    %8 = vector.broadcast %cst : f32 to vector<4x64x128xf32>
    %9 = arith.maximumf %6, %8 : vector<4x64x128xf32>
    %10 = arith.addf %7, %9 : vector<4x64x128xf32>
    %c0_11 = arith.constant 0 : index
    %c0_12 = arith.constant 0 : index
    %c0_13 = arith.constant 0 : index
    %11 = vector.load %arg5[%c0_11, %c0_12, %c0_13] : memref<4x64x128xf32, #tpu.memory_space<vmem>>, vector<4x64x128xf32>
    tpu.vector_store %arg5[%c0_11, %c0_12, %c0_13], %10 {strides = array<i32>} : memref<4x64x128xf32, #tpu.memory_space<vmem>>, vector<4x64x128xf32>,
    return
  }
  func.func @transform_0(%arg0: i32) -> (i32, i32, i32) {
    %c0_i32 = arith.constant 0 : i32
    %c0_i32_0 = arith.constant 0 : i32
    %c0_i32_1 = arith.constant 0 : i32
    return %arg0, %c0_i32, %c0_i32_0 : i32, i32, i32
  }
  func.func @transform_1(%arg0: i32) -> (i32, i32, i32) {
    %c0_i32 = arith.constant 0 : i32
    %c0_i32_0 = arith.constant 0 : i32
    %c0_i32_1 = arith.constant 0 : i32
    return %arg0, %c0_i32, %c0_i32_0 : i32, i32, i32
  }
  func.func @transform_2(%arg0: i32) -> (i32, i32, i32) {
    %c0_i32 = arith.constant 0 : i32
    %c0_i32_0 = arith.constant 0 : i32
    %c0_i32_1 = arith.constant 0 : i32
    %c0_i32_2 = arith.constant 0 : i32
    return %c0_i32, %c0_i32_0, %c0_i32_1 : i32, i32, i32
  }
  func.func @transform_3(%arg0: i32) -> (i32, i32, i32) {
    %c0_i32 = arith.constant 0 : i32
    %c0_i32_0 = arith.constant 0 : i32
    %c0_i32_1 = arith.constant 0 : i32
    %c0_i32_2 = arith.constant 0 : i32
    return %c0_i32, %c0_i32_0, %c0_i32_1 : i32, i32, i32
  }
  func.func @transform_4(%arg0: i32) -> (i32, i32, i32) {
    %c0_i32 = arith.constant 0 : i32
    %c0_i32_0 = arith.constant 0 : i32
    %c0_i32_1 = arith.constant 0 : i32
    return %arg0, %c0_i32, %c0_i32_0 : i32, i32, i32
  }
}

</mosaic_0001>

<llo_original>
// kernel: sa_layer.3
$region0: #{sa_layer.3}
  #allocation0 [shape = 'u32[]', space=smem, size = 0x4, offset = 0x4, fixed_abs, tag = 'smem constant byte address 0x4 - core index']
  #allocation1 [shape = 'u32[144,128]{1,0:T(1,128)}', space=vmem, size = 0x12000, scoped, tag = 'internal scratch']
  %s0 = inlined_call_operand.vmem [shape: f32[8,64,128], index: 0, kind: input, shape index: {}]
  %s1 = inlined_call_operand.hbm [shape: f32[8,64,128], index: 1, kind: input, shape index: {}, may-alias: {1,4}]
  %s2 = inlined_call_operand.vmem [shape: f32[1,64,1], index: 2, kind: input, shape index: {}]
  %s3 = inlined_call_operand.vmem [shape: f32[1,64,1], index: 3, kind: input, shape index: {}]
  %s4 = inlined_call_operand.hbm [shape: f32[8,64,128], index: 4, kind: output, shape index: {}, may-alias: {1,4}]
  %s5 = sld [smem:[#allocation0]]
  $region53: #{sa_layer.3} parent=0
    _
  %s7 = ssub.s32 1, %s5
  %s8 = scalar_select 0, %s7, %s5
  $region1: #{sa_layer.3} parent=0
    #allocation2 [shape = 'u8[262144]{0}', space=vmem, size = 0x40000, scoped, tag = 'input window, operand 1']
    #allocation3 [shape = 's32[2]{0}', space=sflag, size = 0x8, scoped, tag = 'scoped memory for sa_layer.3']
    #allocation4 [shape = 's32[2]{0}', space=sflag, size = 0x8, scoped, tag = 'scoped memory for sa_layer.3']
    #allocation5 [shape = 'u8[262144]{0}', space=vmem, size = 0x40000, scoped, tag = 'output window, operand 0']
    %9 = vsyncpa [#allocation3], 0
    %s10 = scalar_lea.sflag [#allocation3], 1
    %11 = vsyncpa %s10, 0
    %12 = vsyncpa [#allocation4], 0
    %s13 = scalar_lea.sflag [#allocation4], 1
    %14 = vsyncpa %s13, 0
    loop: start=0, step=1, limit=4
    $region2: #{sa_layer.3} parent=1 // loop_pre_header
      _
    $region3: #{sa_layer.3} parent=1 // loop_header
      %s16 = sphi 0, %s20
      %p17 = scmp.ge.s32.totalorder %s16, 4
      %s26 = sphi 0, %s28
      %s29 = sphi 0, %s26
      %s30 = sphi 0, %s29
      %s46 = sphi 0, %s30
      %s52 = sphi 0, %s54
      %s55 = sphi 0, %s52
      %s56 = sphi 0, %s55
      %s72 = sphi 0, %s56
      %s76 = sphi 0, %s76
      %s78 = sphi 0, %s76
      %s79 = sphi 0, %s78
      %s93 = sphi 0, %s79
      %s97 = sphi 0, %s97
      %s99 = sphi 0, %s97
      %s100 = sphi 0, %s99
      %s114 = sphi 0, %s100
      %s120 = sphi 0, %s122
      %s123 = sphi 0, %s120
      %s124 = sphi 0, %s123
      %s140 = sphi 0, %s124
    $region4: #{sa_layer.3} parent=1 // loop_header_branch
      %19 = sbr.rel (%p17) target = $region8
    $region5: #{sa_layer.3} parent=1 // loop_body
      %s21 = ssub.s32 %s16, 1
      %s22 = ssub.s32 %s16, 2
      %s23 = sadd.s32 %s16, 1
      %s24 = ssub.s32 %s16, %s23
      %p25 = scmp.eq.s32.totalorder %s24, 0
      %s27 = sadd.s32 %s26, 1
      %s28 = scalar_select %p25, %s26, %s27
      %p31 = pneg %p25
      %p32 = scmp.eq.s32.totalorder %s16, 1
      %p33 = por %p31, %p32
      %p34 = scmp.ne.s32.totalorder %s26, %s29
      %p35 = scmp.eq.s32.totalorder %s16, 0
      %p36 = por %p34, %p35
      %p37 = scmp.ne.s32.totalorder %s26, %s29
      %p38 = scmp.eq.s32.totalorder %s21, 1
      %p39 = por %p37, %p38
      %p40 = scmp.ne.s32.totalorder %s29, %s30
      %p41 = scmp.eq.s32.totalorder %s21, 0
      %p42 = por %p40, %p41
      %p43 = scmp.ne.s32.totalorder %s29, %s30
      %p44 = scmp.eq.s32.totalorder %s22, 1
      %p45 = por %p43, %p44
      %p47 = scmp.ne.s32.totalorder %s30, %s46
      %p48 = scmp.eq.s32.totalorder %s22, 0
      %p49 = por %p47, %p48
      %s50 = ssub.s32 %s16, %s23
      %p51 = scmp.eq.s32.totalorder %s50, 0
      %s53 = sadd.s32 %s52, 1
      %s54 = scalar_select %p51, %s52, %s53
      %p57 = pneg %p51
      %p58 = scmp.eq.s32.totalorder %s16, 1
      %p59 = por %p57, %p58
      %p60 = scmp.ne.s32.totalorder %s52, %s55
      %p61 = scmp.eq.s32.totalorder %s16, 0
      %p62 = por %p60, %p61
      %p63 = scmp.ne.s32.totalorder %s52, %s55
      %p64 = scmp.eq.s32.totalorder %s21, 1
      %p65 = por %p63, %p64
      %p66 = scmp.ne.s32.totalorder %s55, %s56
      %p67 = scmp.eq.s32.totalorder %s21, 0
      %p68 = por %p66, %p67
      %p69 = scmp.ne.s32.totalorder %s55, %s56
      %p70 = scmp.eq.s32.totalorder %s22, 1
      %p71 = por %p69, %p70
      %p73 = scmp.ne.s32.totalorder %s56, %s72
      %p74 = scmp.eq.s32.totalorder %s22, 0
      %p75 = por %p73, %p74
      %s77 = sadd.s32 %s76, 1
      %p80 = scmp.eq.s32.totalorder %s16, 1
      %p81 = scmp.ne.s32.totalorder %s76, %s78
      %p82 = scmp.eq.s32.totalorder %s16, 0
      %p83 = por %p81, %p82
      %p84 = scmp.ne.s32.totalorder %s76, %s78
      %p85 = scmp.eq.s32.totalorder %s21, 1
      %p86 = por %p84, %p85
      %p87 = scmp.ne.s32.totalorder %s78, %s79
      %p88 = scmp.eq.s32.totalorder %s21, 0
      %p89 = por %p87, %p88
      %p90 = scmp.ne.s32.totalorder %s78, %s79
      %p91 = scmp.eq.s32.totalorder %s22, 1
      %p92 = por %p90, %p91
      %p94 = scmp.ne.s32.totalorder %s79, %s93
      %p95 = scmp.eq.s32.totalorder %s22, 0
      %p96 = por %p94, %p95
      %s98 = sadd.s32 %s97, 1
      %p101 = scmp.eq.s32.totalorder %s16, 1
      %p102 = scmp.ne.s32.totalorder %s97, %s99
      %p103 = scmp.eq.s32.totalorder %s16, 0
      %p104 = por %p102, %p103
      %p105 = scmp.ne.s32.totalorder %s97, %s99
      %p106 = scmp.eq.s32.totalorder %s21, 1
      %p107 = por %p105, %p106
      %p108 = scmp.ne.s32.totalorder %s99, %s100
      %p109 = scmp.eq.s32.totalorder %s21, 0
      %p110 = por %p108, %p109
      %p111 = scmp.ne.s32.totalorder %s99, %s100
      %p112 = scmp.eq.s32.totalorder %s22, 1
      %p113 = por %p111, %p112
      %p115 = scmp.ne.s32.totalorder %s100, %s114
      %p116 = scmp.eq.s32.totalorder %s22, 0
      %p117 = por %p115, %p116
      %s118 = ssub.s32 %s16, %s23
      %p119 = scmp.eq.s32.totalorder %s118, 0
      %s121 = sadd.s32 %s120, 1
      %s122 = scalar_select %p119, %s120, %s121
      %p125 = pneg %p119
      %p126 = scmp.eq.s32.totalorder %s16, 1
      %p127 = por %p125, %p126
      %p128 = scmp.ne.s32.totalorder %s120, %s123
      %p129 = scmp.eq.s32.totalorder %s16, 0
      %p130 = por %p128, %p129
      %p131 = scmp.ne.s32.totalorder %s120, %s123
      %p132 = scmp.eq.s32.totalorder %s21, 1
      %p133 = por %p131, %p132
      %p134 = scmp.ne.s32.totalorder %s123, %s124
      %p135 = scmp.eq.s32.totalorder %s21, 0
      %p136 = por %p134, %p135
      %p137 = scmp.ne.s32.totalorder %s123, %s124
      %p138 = scmp.eq.s32.totalorder %s22, 1
      %p139 = por %p137, %p138
      %p141 = scmp.ne.s32.totalorder %s124, %s140
      %p142 = scmp.eq.s32.totalorder %s22, 0
      %p143 = por %p141, %p142
      %p144 = scmp.le.s32.totalorder 1, %s16
      %p145 = scmp.lt.s32.totalorder %s16, 3
      %p146 = pnand %p144, %p145
      %p147 = pneg %p146
      // Predicated region
      $region9: #{sa_layer.3} parent=5 // pred_check
        _
      $region10: #{sa_layer.3} parent=5 // pred_check_branch
        %149 = sbr.rel (%p146) target = $region12
      $region11: #{sa_layer.3} parent=5 // pred_region
        %s150 = ssub.s32 %s16, 1
        // Predicated region
        $region13: #{sa_layer.3} parent=11 // pred_check
          %p151 = pneg %p89
        $region14: #{sa_layer.3} parent=11 // pred_check_branch
          %153 = sbr.rel (%p151) target = $region16
        $region15: #{sa_layer.3} parent=11 // pred_region
          _
        $region16: #{sa_layer.3} parent=11 // pred_fallthru
          _
        // Predicated region
        $region17: #{sa_layer.3} parent=11 // pred_check
          %p154 = pneg %p110
        $region18: #{sa_layer.3} parent=11 // pred_check_branch
          %156 = sbr.rel (%p154) target = $region20
        $region19: #{sa_layer.3} parent=11 // pred_region
          _
        $region20: #{sa_layer.3} parent=11 // pred_fallthru
          _
      $region12: #{sa_layer.3} parent=5 // pred_fallthru
        _
      %p157 = scmp.lt.s32.totalorder %s16, 2
      // Predicated region
      $region21: #{sa_layer.3} parent=5 // pred_check
        %p158 = pneg %p157
      $region22: #{sa_layer.3} parent=5 // pred_check_branch
        %160 = sbr.rel (%p158) target = $region24
      $region23: #{sa_layer.3} parent=5 // pred_region
        // Predicated region
        $region25: #{sa_layer.3} parent=23 // pred_check
          %p161 = pneg %p36
        $region26: #{sa_layer.3} parent=23 // pred_check_branch
          %163 = sbr.rel (%p161) target = $region28
        $region27: #{sa_layer.3} parent=23 // pred_region
          %s164 = smul.u32 4, %s16
          %p165 = scmp.lt.s32.totalorder %s164, 7
          %s166 = scalar_select %p165, %s164, 7
          %s167 = smul.addr %s166, 8
          %s168 = smul.addr %s167, 8
          %s169 = scalar_lea.vmem %s0, %s168
          %s170 = smul.u32 4, %s16
        $region28: #{sa_layer.3} parent=23 // pred_fallthru
          _
        // Predicated region
        $region29: #{sa_layer.3} parent=23 // pred_check
          %p171 = pneg %p62
        $region30: #{sa_layer.3} parent=23 // pred_check_branch
          %173 = sbr.rel (%p171) target = $region32
        $region31: #{sa_layer.3} parent=23 // pred_region
          %s174 = sand.u32 %s52, 1
          %s175 = scalar_lea.sflag [#allocation3], %s174
          %s176 = sand.u32 %s52, 1
          %s177 = smul.addr %s176, 256
          %s178 = scalar_lea.vmem [#allocation2], %s177
          %s179 = smul.u32 4, %s16
          %s181 = ssub.s32 4096, 4096
          %182 = vsyncadd %s175, %s181
          %s183 = smul.addr %s179, 8
          %s184 = smul.addr %s183, 128
          %s185 = scalar_lea.hbm %s1, %s184
          %s186 = sshll.u32 %s178, 4
          %s187 = int_to_ptr.vmem [resolvable:$true] %s186
          %192 = dma.hbm_to_vmem [thread:$0]  %s185, 4096, %s187, %s175, 128, 128, 8
        $region32: #{sa_layer.3} parent=23 // pred_fallthru
          _
      $region24: #{sa_layer.3} parent=5 // pred_fallthru
        _
      %p193 = scmp.le.s32.totalorder 1, %s16
      %p194 = scmp.lt.s32.totalorder %s16, 3
      %p195 = pnand %p193, %p194
      %p196 = pneg %p195
      // Predicated region
      $region33: #{sa_layer.3} parent=5 // pred_check
        _
      $region34: #{sa_layer.3} parent=5 // pred_check_branch
        %198 = sbr.rel (%p195) target = $region36
      $region35: #{sa_layer.3} parent=5 // pred_region
        %s199 = ssub.s32 %s16, 1
        %s200 = sand.u32 %s55, 1
        %s201 = scalar_lea.sflag [#allocation3], %s200
        %s202 = sand.u32 %s55, 1
        %s203 = smul.addr %s202, 256
        %s204 = scalar_lea.vmem [#allocation2], %s203
        // Predicated region
        $region37: #{sa_layer.3} parent=35 // pred_check
          %p205 = pneg %p68
        $region38: #{sa_layer.3} parent=35 // pred_check_branch
          %207 = sbr.rel (%p205) target = $region40
        $region39: #{sa_layer.3} parent=35 // pred_region
          %208 = dma.done %s201, 4096
        $region40: #{sa_layer.3} parent=35 // pred_fallthru
          _
        %s209 = smul.u32 4, %s21
        %p210 = scmp.lt.s32.totalorder %s209, 7
        %s211 = scalar_select %p210, %s209, 7
        %s212 = smul.addr %s211, 8
        %s213 = smul.addr %s212, 8
        %s214 = scalar_lea.vmem %s0, %s213
        %p215 = pneg %p42
        %p216 = pneg %p39
        %s217 = sand.u32 %s55, 1
        %s218 = scalar_lea.sflag [#allocation3], %s217
        %s219 = sand.u32 %s55, 1
        %s220 = smul.addr %s219, 256
        %s221 = scalar_lea.vmem [#allocation2], %s220
        %p222 = pneg %p68
        %p223 = pneg %p65
        %p224 = pneg %p89
        %p225 = pneg %p86
        %p226 = pneg %p110
        %p227 = pneg %p107
        %p228 = pneg %p136
        %p229 = pneg %p133
        %s230 = sand.u32 %s123, 1
        %s231 = scalar_lea.sflag [#allocation4], %s230
        %s232 = sand.u32 %s123, 1
        %s233 = smul.addr %s232, 256
        %s234 = scalar_lea.vmem [#allocation5], %s233
        %s235 = smul.u32 4, %s21
        %p236 = scmp.lt.s32.totalorder %s235, 7
        %s237 = scalar_select %p236, %s235, 7
        %s238 = smul.addr %s237, 8
        %s239 = smul.addr %s238, 8
        %s240 = scalar_lea.vmem %s0, %s239
        %s241 = smul.u32 4, %s21
        %s242 = smul.u32 4, %s21
        %s243 = smul.u32 4, %s21
        %v244 = vld [vmem:[%s204] sm:$0xff]
        %v245 = vld [vmem:[%s204 + $0x8] sm:$0xff]
        %v246 = vld [vmem:[%s204 + $0x10] sm:$0xff]
        %v247 = vld [vmem:[%s204 + $0x18] sm:$0xff]
        %v248 = vld [vmem:[%s204 + $0x20] sm:$0xff]
        %v249 = vld [vmem:[%s204 + $0x28] sm:$0xff]
        %v250 = vld [vmem:[%s204 + $0x30] sm:$0xff]
        %v251 = vld [vmem:[%s204 + $0x38] sm:$0xff]
        %v252 = vld [vmem:[%s204 + $0x40] sm:$0xff]
        %v253 = vld [vmem:[%s204 + $0x48] sm:$0xff]
        %v254 = vld [vmem:[%s204 + $0x50] sm:$0xff]
        %v255 = vld [vmem:[%s204 + $0x58] sm:$0xff]
        %v256 = vld [vmem:[%s204 + $0x60] sm:$0xff]
        %v257 = vld [vmem:[%s204 + $0x68] sm:$0xff]
        %v258 = vld [vmem:[%s204 + $0x70] sm:$0xff]
        %v259 = vld [vmem:[%s204 + $0x78] sm:$0xff]
        %v260 = vld [vmem:[%s204 + $0x80] sm:$0xff]
        %v261 = vld [vmem:[%s204 + $0x88] sm:$0xff]
        %v262 = vld [vmem:[%s204 + $0x90] sm:$0xff]
        %v263 = vld [vmem:[%s204 + $0x98] sm:$0xff]
        %v264 = vld [vmem:[%s204 + $0xa0] sm:$0xff]
        %v265 = vld [vmem:[%s204 + $0xa8] sm:$0xff]
        %v266 = vld [vmem:[%s204 + $0xb0] sm:$0xff]
        %v267 = vld [vmem:[%s204 + $0xb8] sm:$0xff]
        %v268 = vld [vmem:[%s204 + $0xc0] sm:$0xff]
        %v269 = vld [vmem:[%s204 + $0xc8] sm:$0xff]
        %v270 = vld [vmem:[%s204 + $0xd0] sm:$0xff]
        %v271 = vld [vmem:[%s204 + $0xd8] sm:$0xff]
        %v272 = vld [vmem:[%s204 + $0xe0] sm:$0xff]
        %v273 = vld [vmem:[%s204 + $0xe8] sm:$0xff]
        %v274 = vld [vmem:[%s204 + $0xf0] sm:$0xff]
        %v275 = vld [vmem:[%s204 + $0xf8] sm:$0xff]
        %v276 = vld [vmem:[%s2] sm:$0xff]
        %v277 = vld [vmem:[%s2 + $0x8] sm:$0xff]
        %v278 = vld [vmem:[%s2 + $0x10] sm:$0xff]
        %v279 = vld [vmem:[%s2 + $0x18] sm:$0xff]
        %v280 = vld [vmem:[%s2 + $0x20] sm:$0xff]
        %v281 = vld [vmem:[%s2 + $0x28] sm:$0xff]
        %v282 = vld [vmem:[%s2 + $0x30] sm:$0xff]
        %v283 = vld [vmem:[%s2 + $0x38] sm:$0xff]
        %285 = vset.pattern.permute.xlu0 0
        %286 = vperm.xlu0 %285, %v276
        %v287 = vpop.permute.xlu0 %286
        %290 = vset.pattern.permute.xlu0 0
        %291 = vperm.xlu0 %290, %v277
        %v292 = vpop.permute.xlu0 %291
        %295 = vset.pattern.permute.xlu0 0
        %296 = vperm.xlu0 %295, %v278
        %v297 = vpop.permute.xlu0 %296
        %300 = vset.pattern.permute.xlu0 0
        %301 = vperm.xlu0 %300, %v279
        %v302 = vpop.permute.xlu0 %301
        %305 = vset.pattern.permute.xlu0 0
        %306 = vperm.xlu0 %305, %v280
        %v307 = vpop.permute.xlu0 %306
        %310 = vset.pattern.permute.xlu0 0
        %311 = vperm.xlu0 %310, %v281
        %v312 = vpop.permute.xlu0 %311
        %315 = vset.pattern.permute.xlu0 0
        %316 = vperm.xlu0 %315, %v282
        %v317 = vpop.permute.xlu0 %316
        %320 = vset.pattern.permute.xlu0 0
        %321 = vperm.xlu0 %320, %v283
        %v322 = vpop.permute.xlu0 %321
        %v324 = vmul.f32 %v244, %v287
        %v325 = vmul.f32 %v245, %v292
        %v326 = vmul.f32 %v246, %v297
        %v327 = vmul.f32 %v247, %v302
        %v328 = vmul.f32 %v248, %v307
        %v329 = vmul.f32 %v249, %v312
        %v330 = vmul.f32 %v250, %v317
        %v331 = vmul.f32 %v251, %v322
        %v332 = vmul.f32 %v252, %v287
        %v333 = vmul.f32 %v253, %v292
        %v334 = vmul.f32 %v254, %v297
        %v335 = vmul.f32 %v255, %v302
        %v336 = vmul.f32 %v256, %v307
        %v337 = vmul.f32 %v257, %v312
        %v338 = vmul.f32 %v258, %v317
        %v339 = vmul.f32 %v259, %v322
        %v340 = vmul.f32 %v260, %v287
        %v341 = vmul.f32 %v261, %v292
        %v342 = vmul.f32 %v262, %v297
        %v343 = vmul.f32 %v263, %v302
        %v344 = vmul.f32 %v264, %v307
        %v345 = vmul.f32 %v265, %v312
        %v346 = vmul.f32 %v266, %v317
        %v347 = vmul.f32 %v267, %v322
        %v348 = vmul.f32 %v268, %v287
        %v349 = vmul.f32 %v269, %v292
        %v350 = vmul.f32 %v270, %v297
        %v351 = vmul.f32 %v271, %v302
        %v352 = vmul.f32 %v272, %v307
        %v353 = vmul.f32 %v273, %v312
        %v354 = vmul.f32 %v274, %v317
        %v355 = vmul.f32 %v275, %v322
        %v356 = vld [vmem:[%s3] sm:$0xff]
        %v357 = vld [vmem:[%s3 + $0x8] sm:$0xff]
        %v358 = vld [vmem:[%s3 + $0x10] sm:$0xff]
        %v359 = vld [vmem:[%s3 + $0x18] sm:$0xff]
        %v360 = vld [vmem:[%s3 + $0x20] sm:$0xff]
        %v361 = vld [vmem:[%s3 + $0x28] sm:$0xff]
        %v362 = vld [vmem:[%s3 + $0x30] sm:$0xff]
        %v363 = vld [vmem:[%s3 + $0x38] sm:$0xff]
        %365 = vset.pattern.permute.xlu0 0
        %366 = vperm.xlu0 %365, %v356
        %v367 = vpop.permute.xlu0 %366
        %370 = vset.pattern.permute.xlu0 0
        %371 = vperm.xlu0 %370, %v357
        %v372 = vpop.permute.xlu0 %371
        %375 = vset.pattern.permute.xlu0 0
        %376 = vperm.xlu0 %375, %v358
        %v377 = vpop.permute.xlu0 %376
        %380 = vset.pattern.permute.xlu0 0
        %381 = vperm.xlu0 %380, %v359
        %v382 = vpop.permute.xlu0 %381
        %385 = vset.pattern.permute.xlu0 0
        %386 = vperm.xlu0 %385, %v360
        %v387 = vpop.permute.xlu0 %386
        %390 = vset.pattern.permute.xlu0 0
        %391 = vperm.xlu0 %390, %v361
        %v392 = vpop.permute.xlu0 %391
        %395 = vset.pattern.permute.xlu0 0
        %396 = vperm.xlu0 %395, %v362
        %v397 = vpop.permute.xlu0 %396
        %400 = vset.pattern.permute.xlu0 0
        %401 = vperm.xlu0 %400, %v363
        %v402 = vpop.permute.xlu0 %401
        %v404 = vadd.f32 %v324, %v367
        %v405 = vadd.f32 %v325, %v372
        %v406 = vadd.f32 %v326, %v377
        %v407 = vadd.f32 %v327, %v382
        %v408 = vadd.f32 %v328, %v387
        %v409 = vadd.f32 %v329, %v392
        %v410 = vadd.f32 %v330, %v397
        %v411 = vadd.f32 %v331, %v402
        %v412 = vadd.f32 %v332, %v367
        %v413 = vadd.f32 %v333, %v372
        %v414 = vadd.f32 %v334, %v377
        %v415 = vadd.f32 %v335, %v382
        %v416 = vadd.f32 %v336, %v387
        %v417 = vadd.f32 %v337, %v392
        %v418 = vadd.f32 %v338, %v397
        %v419 = vadd.f32 %v339, %v402
        %v420 = vadd.f32 %v340, %v367
        %v421 = vadd.f32 %v341, %v372
        %v422 = vadd.f32 %v342, %v377
        %v423 = vadd.f32 %v343, %v382
        %v424 = vadd.f32 %v344, %v387
        %v425 = vadd.f32 %v345, %v392
        %v426 = vadd.f32 %v346, %v397
        %v427 = vadd.f32 %v347, %v402
        %v428 = vadd.f32 %v348, %v367
        %v429 = vadd.f32 %v349, %v372
        %v430 = vadd.f32 %v350, %v377
        %v431 = vadd.f32 %v351, %v382
        %v432 = vadd.f32 %v352, %v387
        %v433 = vadd.f32 %v353, %v392
        %v434 = vadd.f32 %v354, %v397
        %v435 = vadd.f32 %v355, %v402
        %v436 = vld [vmem:[%s240] sm:$0xff]
        %v437 = vld [vmem:[%s240 + $0x8] sm:$0xff]
        %v438 = vld [vmem:[%s240 + $0x10] sm:$0xff]
        %v439 = vld [vmem:[%s240 + $0x18] sm:$0xff]
        %v440 = vld [vmem:[%s240 + $0x20] sm:$0xff]
        %v441 = vld [vmem:[%s240 + $0x28] sm:$0xff]
        %v442 = vld [vmem:[%s240 + $0x30] sm:$0xff]
        %v443 = vld [vmem:[%s240 + $0x38] sm:$0xff]
        %v444 = vld [vmem:[%s240 + $0x40] sm:$0xff]
        %v445 = vld [vmem:[%s240 + $0x48] sm:$0xff]
        %v446 = vld [vmem:[%s240 + $0x50] sm:$0xff]
        %v447 = vld [vmem:[%s240 + $0x58] sm:$0xff]
        %v448 = vld [vmem:[%s240 + $0x60] sm:$0xff]
        %v449 = vld [vmem:[%s240 + $0x68] sm:$0xff]
        %v450 = vld [vmem:[%s240 + $0x70] sm:$0xff]
        %v451 = vld [vmem:[%s240 + $0x78] sm:$0xff]
        %v452 = vld [vmem:[%s240 + $0x80] sm:$0xff]
        %v453 = vld [vmem:[%s240 + $0x88] sm:$0xff]
        %v454 = vld [vmem:[%s240 + $0x90] sm:$0xff]
        %v455 = vld [vmem:[%s240 + $0x98] sm:$0xff]
        %v456 = vld [vmem:[%s240 + $0xa0] sm:$0xff]
        %v457 = vld [vmem:[%s240 + $0xa8] sm:$0xff]
        %v458 = vld [vmem:[%s240 + $0xb0] sm:$0xff]
        %v459 = vld [vmem:[%s240 + $0xb8] sm:$0xff]
        %v460 = vld [vmem:[%s240 + $0xc0] sm:$0xff]
        %v461 = vld [vmem:[%s240 + $0xc8] sm:$0xff]
        %v462 = vld [vmem:[%s240 + $0xd0] sm:$0xff]
        %v463 = vld [vmem:[%s240 + $0xd8] sm:$0xff]
        %v464 = vld [vmem:[%s240 + $0xe0] sm:$0xff]
        %v465 = vld [vmem:[%s240 + $0xe8] sm:$0xff]
        %v466 = vld [vmem:[%s240 + $0xf0] sm:$0xff]
        %v467 = vld [vmem:[%s240 + $0xf8] sm:$0xff]
        %v468 = vmax.f32 %v404, 0.0
        %v469 = vmax.f32 %v405, 0.0
        %v470 = vmax.f32 %v406, 0.0
        %v471 = vmax.f32 %v407, 0.0
        %v472 = vmax.f32 %v408, 0.0
        %v473 = vmax.f32 %v409, 0.0
        %v474 = vmax.f32 %v410, 0.0
        %v475 = vmax.f32 %v411, 0.0
        %v476 = vmax.f32 %v412, 0.0
        %v477 = vmax.f32 %v413, 0.0
        %v478 = vmax.f32 %v414, 0.0
        %v479 = vmax.f32 %v415, 0.0
        %v480 = vmax.f32 %v416, 0.0
        %v481 = vmax.f32 %v417, 0.0
        %v482 = vmax.f32 %v418, 0.0
        %v483 = vmax.f32 %v419, 0.0
        %v484 = vmax.f32 %v420, 0.0
        %v485 = vmax.f32 %v421, 0.0
        %v486 = vmax.f32 %v422, 0.0
        %v487 = vmax.f32 %v423, 0.0
        %v488 = vmax.f32 %v424, 0.0
        %v489 = vmax.f32 %v425, 0.0
        %v490 = vmax.f32 %v426, 0.0
        %v491 = vmax.f32 %v427, 0.0
        %v492 = vmax.f32 %v428, 0.0
        %v493 = vmax.f32 %v429, 0.0
        %v494 = vmax.f32 %v430, 0.0
        %v495 = vmax.f32 %v431, 0.0
        %v496 = vmax.f32 %v432, 0.0
        %v497 = vmax.f32 %v433, 0.0
        %v498 = vmax.f32 %v434, 0.0
        %v499 = vmax.f32 %v435, 0.0
        %v500 = vadd.f32 %v436, %v468
        %v501 = vadd.f32 %v437, %v469
        %v502 = vadd.f32 %v438, %v470
        %v503 = vadd.f32 %v439, %v471
        %v504 = vadd.f32 %v440, %v472
        %v505 = vadd.f32 %v441, %v473
        %v506 = vadd.f32 %v442, %v474
        %v507 = vadd.f32 %v443, %v475
        %v508 = vadd.f32 %v444, %v476
        %v509 = vadd.f32 %v445, %v477
        %v510 = vadd.f32 %v446, %v478
        %v511 = vadd.f32 %v447, %v479
        %v512 = vadd.f32 %v448, %v480
        %v513 = vadd.f32 %v449, %v481
        %v514 = vadd.f32 %v450, %v482
        %v515 = vadd.f32 %v451, %v483
        %v516 = vadd.f32 %v452, %v484
        %v517 = vadd.f32 %v453, %v485
        %v518 = vadd.f32 %v454, %v486
        %v519 = vadd.f32 %v455, %v487
        %v520 = vadd.f32 %v456, %v488
        %v521 = vadd.f32 %v457, %v489
        %v522 = vadd.f32 %v458, %v490
        %v523 = vadd.f32 %v459, %v491
        %v524 = vadd.f32 %v460, %v492
        %v525 = vadd.f32 %v461, %v493
        %v526 = vadd.f32 %v462, %v494
        %v527 = vadd.f32 %v463, %v495
        %v528 = vadd.f32 %v464, %v496
        %v529 = vadd.f32 %v465, %v497
        %v530 = vadd.f32 %v466, %v498
        %v531 = vadd.f32 %v467, %v499
        %532 = vst [vmem:[%s234] sm:$0xff] %v500
        %533 = vst [vmem:[%s234 + $0x8] sm:$0xff] %v501
        %534 = vst [vmem:[%s234 + $0x10] sm:$0xff] %v502
        %535 = vst [vmem:[%s234 + $0x18] sm:$0xff] %v503
        %536 = vst [vmem:[%s234 + $0x20] sm:$0xff] %v504
        %537 = vst [vmem:[%s234 + $0x28] sm:$0xff] %v505
        %538 = vst [vmem:[%s234 + $0x30] sm:$0xff] %v506
        %539 = vst [vmem:[%s234 + $0x38] sm:$0xff] %v507
        %540 = vst [vmem:[%s234 + $0x40] sm:$0xff] %v508
        %541 = vst [vmem:[%s234 + $0x48] sm:$0xff] %v509
        %542 = vst [vmem:[%s234 + $0x50] sm:$0xff] %v510
        %543 = vst [vmem:[%s234 + $0x58] sm:$0xff] %v511
        %544 = vst [vmem:[%s234 + $0x60] sm:$0xff] %v512
        %545 = vst [vmem:[%s234 + $0x68] sm:$0xff] %v513
        %546 = vst [vmem:[%s234 + $0x70] sm:$0xff] %v514
        %547 = vst [vmem:[%s234 + $0x78] sm:$0xff] %v515
        %548 = vst [vmem:[%s234 + $0x80] sm:$0xff] %v516
        %549 = vst [vmem:[%s234 + $0x88] sm:$0xff] %v517
        %550 = vst [vmem:[%s234 + $0x90] sm:$0xff] %v518
        %551 = vst [vmem:[%s234 + $0x98] sm:$0xff] %v519
        %552 = vst [vmem:[%s234 + $0xa0] sm:$0xff] %v520
        %553 = vst [vmem:[%s234 + $0xa8] sm:$0xff] %v521
        %554 = vst [vmem:[%s234 + $0xb0] sm:$0xff] %v522
        %555 = vst [vmem:[%s234 + $0xb8] sm:$0xff] %v523
        %556 = vst [vmem:[%s234 + $0xc0] sm:$0xff] %v524
        %557 = vst [vmem:[%s234 + $0xc8] sm:$0xff] %v525
        %558 = vst [vmem:[%s234 + $0xd0] sm:$0xff] %v526
        %559 = vst [vmem:[%s234 + $0xd8] sm:$0xff] %v527
        %560 = vst [vmem:[%s234 + $0xe0] sm:$0xff] %v528
        %561 = vst [vmem:[%s234 + $0xe8] sm:$0xff] %v529
        %562 = vst [vmem:[%s234 + $0xf0] sm:$0xff] %v530
        %563 = vst [vmem:[%s234 + $0xf8] sm:$0xff] %v531
        %s564 = sand.u32 %s123, 1
        %s565 = scalar_lea.sflag [#allocation4], %s564
        %s566 = sand.u32 %s123, 1
        %s567 = smul.addr %s566, 256
        %s568 = scalar_lea.vmem [#allocation5], %s567
        // Predicated region
        $region41: #{sa_layer.3} parent=35 // pred_check
          %p569 = pneg %p133
        $region42: #{sa_layer.3} parent=35 // pred_check_branch
          %571 = sbr.rel (%p569) target = $region44
        $region43: #{sa_layer.3} parent=35 // pred_region
          %s572 = smul.u32 4, %s21
          %s574 = ssub.s32 4096, 4096
          %575 = vsyncadd %s565, %s574
          %s576 = smul.addr %s572, 8
          %s577 = smul.addr %s576, 128
          %s578 = scalar_lea.hbm %s4, %s577
          %s579 = sshll.u32 %s568, 4
          %s580 = int_to_ptr.vmem [resolvable:$true] %s579
          %585 = dma.vmem_to_hbm [thread:$0]  %s580, 4096, %s578, %s565, 128, 128, 8
        $region44: #{sa_layer.3} parent=35 // pred_fallthru
          _
      $region36: #{sa_layer.3} parent=5 // pred_fallthru
        _
      %p586 = scmp.le.s32.totalorder 2, %s16
      // Predicated region
      $region45: #{sa_layer.3} parent=5 // pred_check
        %p587 = pneg %p586
      $region46: #{sa_layer.3} parent=5 // pred_check_branch
        %589 = sbr.rel (%p587) target = $region48
      $region47: #{sa_layer.3} parent=5 // pred_region
        %s590 = ssub.s32 %s16, 2
        // Predicated region
        $region49: #{sa_layer.3} parent=47 // pred_check
          %p591 = pneg %p139
        $region50: #{sa_layer.3} parent=47 // pred_check_branch
          %593 = sbr.rel (%p591) target = $region52
        $region51: #{sa_layer.3} parent=47 // pred_region
          %s594 = sand.u32 %s124, 1
          %s595 = scalar_lea.sflag [#allocation4], %s594
          %s596 = sand.u32 %s124, 1
          %s597 = smul.addr %s596, 256
          %s598 = scalar_lea.vmem [#allocation5], %s597
          %599 = dma.done %s595, 4096
        $region52: #{sa_layer.3} parent=47 // pred_fallthru
          _
      $region48: #{sa_layer.3} parent=5 // pred_fallthru
        _
    $region6: #{sa_layer.3} parent=1 // loop_footer
      %s20 = sadd.s32 1, %s16
    $region7: #{sa_layer.3} parent=1 // loop_footer_branch
      %15 = sbr.rel target = $region3
    $region8: #{sa_layer.3} parent=1 // loop_exit
      _
    %600 = vsyncpa [#allocation3], 1
    %s601 = scalar_lea.sflag [#allocation3], 1
    %602 = vsyncpa %s601, 1
    %603 = vsyncpa [#allocation4], 1
    %s604 = scalar_lea.sflag [#allocation4], 1
    %605 = vsyncpa %s604, 1

// kernel: sa_layer.2
$region0: #{sa_layer.2}
  #allocation0 [shape = 'u32[]', space=smem, size = 0x4, offset = 0x4, fixed_abs, tag = 'smem constant byte address 0x4 - core index']
  #allocation1 [shape = 'u32[144,128]{1,0:T(1,128)}', space=vmem, size = 0x12000, scoped, tag = 'internal scratch']
  %s0 = inlined_call_operand.hbm [shape: f32[8,64,128], index: 0, kind: input, shape index: {}]
  %s1 = inlined_call_operand.vmem [shape: bf16[80,64], index: 1, kind: input, shape index: {}]
  %s2 = inlined_call_operand.vmem [shape: f32[64,1], index: 2, kind: input, shape index: {}]
  %s3 = inlined_call_operand.vmem [shape: bf16[64,64], index: 3, kind: input, shape index: {}]
  %s4 = inlined_call_operand.vmem [shape: f32[64,1], index: 4, kind: input, shape index: {}]
  %s5 = inlined_call_operand.hbm [shape: f32[8,64,128], index: 5, kind: output, shape index: {0}]
  %s6 = inlined_call_operand.vmem [shape: f32[2,2,64], index: 6, kind: output, shape index: {1}]
  %7 = xla_tuple %s5, %s6
  %s8 = sld [smem:[#allocation0]]
  $region65: #{sa_layer.2} parent=0
    _
  %s10 = ssub.s32 1, %s8
  %s11 = scalar_select 0, %s10, %s8
  $region1: #{sa_layer.2} parent=0
    #allocation2 [shape = 'u8[262144]{0}', space=vmem, size = 0x40000, scoped, tag = 'input window, operand 0']
    #allocation3 [shape = 's32[2]{0}', space=sflag, size = 0x8, scoped, tag = 'scoped memory for sa_layer.2']
    #allocation4 [shape = 's32[2]{0}', space=sflag, size = 0x8, scoped, tag = 'scoped memory for sa_layer.2']
    #allocation5 [shape = 'u8[262144]{0}', space=vmem, size = 0x40000, scoped, tag = 'output window, operand 0']
    %12 = vsyncpa [#allocation3], 0
    %s13 = scalar_lea.sflag [#allocation3], 1
    %14 = vsyncpa %s13, 0
    %15 = vsyncpa [#allocation4], 0
    %s16 = scalar_lea.sflag [#allocation4], 1
    %17 = vsyncpa %s16, 0
    loop: start=0, step=1, limit=4
    $region2: #{sa_layer.2} parent=1 // loop_pre_header
      _
    $region3: #{sa_layer.2} parent=1 // loop_header
      %s19 = sphi 0, %s23
      %p20 = scmp.ge.s32.totalorder %s19, 4
      %s29 = sphi 0, %s31
      %s32 = sphi 0, %s29
      %s33 = sphi 0, %s32
      %s49 = sphi 0, %s33
      %s53 = sphi 0, %s53
      %s55 = sphi 0, %s53
      %s56 = sphi 0, %s55
      %s70 = sphi 0, %s56
      %s74 = sphi 0, %s74
      %s76 = sphi 0, %s74
      %s77 = sphi 0, %s76
      %s91 = sphi 0, %s77
      %s95 = sphi 0, %s95
      %s97 = sphi 0, %s95
      %s98 = sphi 0, %s97
      %s112 = sphi 0, %s98
      %s116 = sphi 0, %s116
      %s118 = sphi 0, %s116
      %s119 = sphi 0, %s118
      %s133 = sphi 0, %s119
      %s139 = sphi 0, %s141
      %s142 = sphi 0, %s139
      %s143 = sphi 0, %s142
      %s159 = sphi 0, %s143
      %s165 = sphi 0, %s167
      %s168 = sphi 0, %s165
      %s169 = sphi 0, %s168
      %s185 = sphi 0, %s169
    $region4: #{sa_layer.2} parent=1 // loop_header_branch
      %22 = sbr.rel (%p20) target = $region8
    $region5: #{sa_layer.2} parent=1 // loop_body
      %s24 = ssub.s32 %s19, 1
      %s25 = ssub.s32 %s19, 2
      %s26 = sadd.s32 %s19, 1
      %s27 = ssub.s32 %s19, %s26
      %p28 = scmp.eq.s32.totalorder %s27, 0
      %s30 = sadd.s32 %s29, 1
      %s31 = scalar_select %p28, %s29, %s30
      %p34 = pneg %p28
      %p35 = scmp.eq.s32.totalorder %s19, 1
      %p36 = por %p34, %p35
      %p37 = scmp.ne.s32.totalorder %s29, %s32
      %p38 = scmp.eq.s32.totalorder %s19, 0
      %p39 = por %p37, %p38
      %p40 = scmp.ne.s32.totalorder %s29, %s32
      %p41 = scmp.eq.s32.totalorder %s24, 1
      %p42 = por %p40, %p41
      %p43 = scmp.ne.s32.totalorder %s32, %s33
      %p44 = scmp.eq.s32.totalorder %s24, 0
      %p45 = por %p43, %p44
      %p46 = scmp.ne.s32.totalorder %s32, %s33
      %p47 = scmp.eq.s32.totalorder %s25, 1
      %p48 = por %p46, %p47
      %p50 = scmp.ne.s32.totalorder %s33, %s49
      %p51 = scmp.eq.s32.totalorder %s25, 0
      %p52 = por %p50, %p51
      %s54 = sadd.s32 %s53, 1
      %p57 = scmp.eq.s32.totalorder %s19, 1
      %p58 = scmp.ne.s32.totalorder %s53, %s55
      %p59 = scmp.eq.s32.totalorder %s19, 0
      %p60 = por %p58, %p59
      %p61 = scmp.ne.s32.totalorder %s53, %s55
      %p62 = scmp.eq.s32.totalorder %s24, 1
      %p63 = por %p61, %p62
      %p64 = scmp.ne.s32.totalorder %s55, %s56
      %p65 = scmp.eq.s32.totalorder %s24, 0
      %p66 = por %p64, %p65
      %p67 = scmp.ne.s32.totalorder %s55, %s56
      %p68 = scmp.eq.s32.totalorder %s25, 1
      %p69 = por %p67, %p68
      %p71 = scmp.ne.s32.totalorder %s56, %s70
      %p72 = scmp.eq.s32.totalorder %s25, 0
      %p73 = por %p71, %p72
      %s75 = sadd.s32 %s74, 1
      %p78 = scmp.eq.s32.totalorder %s19, 1
      %p79 = scmp.ne.s32.totalorder %s74, %s76
      %p80 = scmp.eq.s32.totalorder %s19, 0
      %p81 = por %p79, %p80
      %p82 = scmp.ne.s32.totalorder %s74, %s76
      %p83 = scmp.eq.s32.totalorder %s24, 1
      %p84 = por %p82, %p83
      %p85 = scmp.ne.s32.totalorder %s76, %s77
      %p86 = scmp.eq.s32.totalorder %s24, 0
      %p87 = por %p85, %p86
      %p88 = scmp.ne.s32.totalorder %s76, %s77
      %p89 = scmp.eq.s32.totalorder %s25, 1
      %p90 = por %p88, %p89
      %p92 = scmp.ne.s32.totalorder %s77, %s91
      %p93 = scmp.eq.s32.totalorder %s25, 0
      %p94 = por %p92, %p93
      %s96 = sadd.s32 %s95, 1
      %p99 = scmp.eq.s32.totalorder %s19, 1
      %p100 = scmp.ne.s32.totalorder %s95, %s97
      %p101 = scmp.eq.s32.totalorder %s19, 0
      %p102 = por %p100, %p101
      %p103 = scmp.ne.s32.totalorder %s95, %s97
      %p104 = scmp.eq.s32.totalorder %s24, 1
      %p105 = por %p103, %p104
      %p106 = scmp.ne.s32.totalorder %s97, %s98
      %p107 = scmp.eq.s32.totalorder %s24, 0
      %p108 = por %p106, %p107
      %p109 = scmp.ne.s32.totalorder %s97, %s98
      %p110 = scmp.eq.s32.totalorder %s25, 1
      %p111 = por %p109, %p110
      %p113 = scmp.ne.s32.totalorder %s98, %s112
      %p114 = scmp.eq.s32.totalorder %s25, 0
      %p115 = por %p113, %p114
      %s117 = sadd.s32 %s116, 1
      %p120 = scmp.eq.s32.totalorder %s19, 1
      %p121 = scmp.ne.s32.totalorder %s116, %s118
      %p122 = scmp.eq.s32.totalorder %s19, 0
      %p123 = por %p121, %p122
      %p124 = scmp.ne.s32.totalorder %s116, %s118
      %p125 = scmp.eq.s32.totalorder %s24, 1
      %p126 = por %p124, %p125
      %p127 = scmp.ne.s32.totalorder %s118, %s119
      %p128 = scmp.eq.s32.totalorder %s24, 0
      %p129 = por %p127, %p128
      %p130 = scmp.ne.s32.totalorder %s118, %s119
      %p131 = scmp.eq.s32.totalorder %s25, 1
      %p132 = por %p130, %p131
      %p134 = scmp.ne.s32.totalorder %s119, %s133
      %p135 = scmp.eq.s32.totalorder %s25, 0
      %p136 = por %p134, %p135
      %s137 = ssub.s32 %s19, %s26
      %p138 = scmp.eq.s32.totalorder %s137, 0
      %s140 = sadd.s32 %s139, 1
      %s141 = scalar_select %p138, %s139, %s140
      %p144 = pneg %p138
      %p145 = scmp.eq.s32.totalorder %s19, 1
      %p146 = por %p144, %p145
      %p147 = scmp.ne.s32.totalorder %s139, %s142
      %p148 = scmp.eq.s32.totalorder %s19, 0
      %p149 = por %p147, %p148
      %p150 = scmp.ne.s32.totalorder %s139, %s142
      %p151 = scmp.eq.s32.totalorder %s24, 1
      %p152 = por %p150, %p151
      %p153 = scmp.ne.s32.totalorder %s142, %s143
      %p154 = scmp.eq.s32.totalorder %s24, 0
      %p155 = por %p153, %p154
      %p156 = scmp.ne.s32.totalorder %s142, %s143
      %p157 = scmp.eq.s32.totalorder %s25, 1
      %p158 = por %p156, %p157
      %p160 = scmp.ne.s32.totalorder %s143, %s159
      %p161 = scmp.eq.s32.totalorder %s25, 0
      %p162 = por %p160, %p161
      %s163 = ssub.s32 %s19, %s26
      %p164 = scmp.eq.s32.totalorder %s163, 0
      %s166 = sadd.s32 %s165, 1
      %s167 = scalar_select %p164, %s165, %s166
      %p170 = pneg %p164
      %p171 = scmp.eq.s32.totalorder %s19, 1
      %p172 = por %p170, %p171
      %p173 = scmp.ne.s32.totalorder %s165, %s168
      %p174 = scmp.eq.s32.totalorder %s19, 0
      %p175 = por %p173, %p174
      %p176 = scmp.ne.s32.totalorder %s165, %s168
      %p177 = scmp.eq.s32.totalorder %s24, 1
      %p178 = por %p176, %p177
      %p179 = scmp.ne.s32.totalorder %s168, %s169
      %p180 = scmp.eq.s32.totalorder %s24, 0
      %p181 = por %p179, %p180
      %p182 = scmp.ne.s32.totalorder %s168, %s169
      %p183 = scmp.eq.s32.totalorder %s25, 1
      %p184 = por %p182, %p183
      %p186 = scmp.ne.s32.totalorder %s169, %s185
      %p187 = scmp.eq.s32.totalorder %s25, 0
      %p188 = por %p186, %p187
      %p189 = scmp.le.s32.totalorder 1, %s19
      %p190 = scmp.lt.s32.totalorder %s19, 3
      %p191 = pnand %p189, %p190
      %p192 = pneg %p191
      // Predicated region
      $region9: #{sa_layer.2} parent=5 // pred_check
        _
      $region10: #{sa_layer.2} parent=5 // pred_check_branch
        %194 = sbr.rel (%p191) target = $region12
      $region11: #{sa_layer.2} parent=5 // pred_region
        %s195 = ssub.s32 %s19, 1
        // Predicated region
        $region13: #{sa_layer.2} parent=11 // pred_check
          %p196 = pneg %p66
        $region14: #{sa_layer.2} parent=11 // pred_check_branch
          %198 = sbr.rel (%p196) target = $region16
        $region15: #{sa_layer.2} parent=11 // pred_region
          _
        $region16: #{sa_layer.2} parent=11 // pred_fallthru
          _
        // Predicated region
        $region17: #{sa_layer.2} parent=11 // pred_check
          %p199 = pneg %p87
        $region18: #{sa_layer.2} parent=11 // pred_check_branch
          %201 = sbr.rel (%p199) target = $region20
        $region19: #{sa_layer.2} parent=11 // pred_region
          _
        $region20: #{sa_layer.2} parent=11 // pred_fallthru
          _
        // Predicated region
        $region21: #{sa_layer.2} parent=11 // pred_check
          %p202 = pneg %p108
        $region22: #{sa_layer.2} parent=11 // pred_check_branch
          %204 = sbr.rel (%p202) target = $region24
        $region23: #{sa_layer.2} parent=11 // pred_region
          _
        $region24: #{sa_layer.2} parent=11 // pred_fallthru
          _
        // Predicated region
        $region25: #{sa_layer.2} parent=11 // pred_check
          %p205 = pneg %p129
        $region26: #{sa_layer.2} parent=11 // pred_check_branch
          %207 = sbr.rel (%p205) target = $region28
        $region27: #{sa_layer.2} parent=11 // pred_region
          _
        $region28: #{sa_layer.2} parent=11 // pred_fallthru
          _
      $region12: #{sa_layer.2} parent=5 // pred_fallthru
        _
      %p208 = scmp.lt.s32.totalorder %s19, 2
      // Predicated region
      $region29: #{sa_layer.2} parent=5 // pred_check
        %p209 = pneg %p208
      $region30: #{sa_layer.2} parent=5 // pred_check_branch
        %211 = sbr.rel (%p209) target = $region32
      $region31: #{sa_layer.2} parent=5 // pred_region
        // Predicated region
        $region33: #{sa_layer.2} parent=31 // pred_check
          %p212 = pneg %p39
        $region34: #{sa_layer.2} parent=31 // pred_check_branch
          %214 = sbr.rel (%p212) target = $region36
        $region35: #{sa_layer.2} parent=31 // pred_region
          %s215 = sand.u32 %s29, 1
          %s216 = scalar_lea.sflag [#allocation3], %s215
          %s217 = sand.u32 %s29, 1
          %s218 = smul.addr %s217, 256
          %s219 = scalar_lea.vmem [#allocation2], %s218
          %s220 = smul.u32 4, %s19
          %s222 = ssub.s32 4096, 4096
          %223 = vsyncadd %s216, %s222
          %s224 = smul.addr %s220, 8
          %s225 = smul.addr %s224, 128
          %s226 = scalar_lea.hbm %s0, %s225
          %s227 = sshll.u32 %s219, 4
          %s228 = int_to_ptr.vmem [resolvable:$true] %s227
          %233 = dma.hbm_to_vmem [thread:$0]  %s226, 4096, %s228, %s216, 128, 128, 8
        $region36: #{sa_layer.2} parent=31 // pred_fallthru
          _
      $region32: #{sa_layer.2} parent=5 // pred_fallthru
        _
      %p234 = scmp.le.s32.totalorder 1, %s19
      %p235 = scmp.lt.s32.totalorder %s19, 3
      %p236 = pnand %p234, %p235
      %p237 = pneg %p236
      // Predicated region
      $region37: #{sa_layer.2} parent=5 // pred_check
        _
      $region38: #{sa_layer.2} parent=5 // pred_check_branch
        %239 = sbr.rel (%p236) target = $region40
      $region39: #{sa_layer.2} parent=5 // pred_region
        %s240 = ssub.s32 %s19, 1
        %s241 = sand.u32 %s32, 1
        %s242 = scalar_lea.sflag [#allocation3], %s241
        %s243 = sand.u32 %s32, 1
        %s244 = smul.addr %s243, 256
        %s245 = scalar_lea.vmem [#allocation2], %s244
        // Predicated region
        $region41: #{sa_layer.2} parent=39 // pred_check
          %p246 = pneg %p45
        $region42: #{sa_layer.2} parent=39 // pred_check_branch
          %248 = sbr.rel (%p246) target = $region44
        $region43: #{sa_layer.2} parent=39 // pred_region
          %249 = dma.done %s242, 4096
        $region44: #{sa_layer.2} parent=39 // pred_fallthru
          _
        %s250 = sand.u32 %s32, 1
        %s251 = scalar_lea.sflag [#allocation3], %s250
        %s252 = sand.u32 %s32, 1
        %s253 = smul.addr %s252, 256
        %s254 = scalar_lea.vmem [#allocation2], %s253
        %p255 = pneg %p45
        %p256 = pneg %p42
        %p257 = pneg %p66
        %p258 = pneg %p63
        %p259 = pneg %p87
        %p260 = pneg %p84
        %p261 = pneg %p108
        %p262 = pneg %p105
        %p263 = pneg %p129
        %p264 = pneg %p126
        %p265 = pneg %p155
        %p266 = pneg %p152
        %s267 = sand.u32 %s142, 1
        %s268 = scalar_lea.sflag [#allocation4], %s267
        %s269 = sand.u32 %s142, 1
        %s270 = smul.addr %s269, 256
        %s271 = scalar_lea.vmem [#allocation5], %s270
        %p272 = pneg %p181
        %p273 = pneg %p178
        %p274 = scmp.lt.s32.totalorder %s24, 1
        %s275 = scalar_select %p274, %s24, 1
        %s276 = smul.addr %s275, 2
        %s277 = scalar_lea.vmem %s6, %s276
        %s278 = smul.u32 4, %s24
        %s279 = smul.u32 4, %s24
        %p280 = scmp.lt.s32.totalorder %s24, 1
        %s281 = scalar_select %p280, %s24, 1
        %s282 = smul.addr %s281, 2
        %s283 = scalar_lea.vmem %s6, %s282
        %v285 = vld [vmem:[%s1] sm:$0xf]
        %v286 = vld [vmem:[%s1 + $0x4] sm:$0xf]
        %v287 = vld [vmem:[%s1 + $0x8] sm:$0xf]
        %v288 = vld [vmem:[%s1 + $0xc] sm:$0xf]
        %v289 = vld [vmem:[%s1 + $0x10] sm:$0xf]
        %v290 = vld [vmem:[%s1 + $0x14] sm:$0xf]
        %v291 = vld [vmem:[%s1 + $0x18] sm:$0xf]
        %v292 = vld [vmem:[%s1 + $0x1c] sm:$0xf]
        %v293 = vld [vmem:[%s1 + $0x20] sm:$0xf]
        %v294 = vld [vmem:[%s1 + $0x24] sm:$0xf]
        %v295 = vld [vmem:[%s3] sm:$0xf]
        %v296 = vld [vmem:[%s3 + $0x4] sm:$0xf]
        %v297 = vld [vmem:[%s3 + $0x8] sm:$0xf]
        %v298 = vld [vmem:[%s3 + $0xc] sm:$0xf]
        %v299 = vld [vmem:[%s3 + $0x10] sm:$0xf]
        %v300 = vld [vmem:[%s3 + $0x14] sm:$0xf]
        %v301 = vld [vmem:[%s3 + $0x18] sm:$0xf]
        %v302 = vld [vmem:[%s3 + $0x1c] sm:$0xf]
        %v303 = vld [vmem:[%s2] sm:$0xff]
        %v304 = vld [vmem:[%s2 + $0x8] sm:$0xff]
        %v305 = vld [vmem:[%s2 + $0x10] sm:$0xff]
        %v306 = vld [vmem:[%s2 + $0x18] sm:$0xff]
        %v307 = vld [vmem:[%s2 + $0x20] sm:$0xff]
        %v308 = vld [vmem:[%s2 + $0x28] sm:$0xff]
        %v309 = vld [vmem:[%s2 + $0x30] sm:$0xff]
        %v310 = vld [vmem:[%s2 + $0x38] sm:$0xff]
        %v311 = vld [vmem:[%s4] sm:$0xff]
        %v312 = vld [vmem:[%s4 + $0x8] sm:$0xff]
        %v313 = vld [vmem:[%s4 + $0x10] sm:$0xff]
        %v314 = vld [vmem:[%s4 + $0x18] sm:$0xff]
        %v315 = vld [vmem:[%s4 + $0x20] sm:$0xff]
        %v316 = vld [vmem:[%s4 + $0x28] sm:$0xff]
        %v317 = vld [vmem:[%s4 + $0x30] sm:$0xff]
        %v318 = vld [vmem:[%s4 + $0x38] sm:$0xff]
        %v319 = vld [vmem:[%s245] sm:$0xff]
        %v320 = vld [vmem:[%s245 + $0x8] sm:$0xff]
        %v321 = vld [vmem:[%s245 + $0x10] sm:$0xff]
        %v322 = vld [vmem:[%s245 + $0x18] sm:$0xff]
        %v323 = vld [vmem:[%s245 + $0x20] sm:$0xff]
        %v324 = vld [vmem:[%s245 + $0x28] sm:$0xff]
        %v325 = vld [vmem:[%s245 + $0x30] sm:$0xff]
        %v326 = vld [vmem:[%s245 + $0x38] sm:$0xff]
        %v327 = vpack.c.bf16 %v320, %v319
        %v328 = vpack.c.bf16 %v322, %v321
        %v329 = vpack.c.bf16 %v324, %v323
        %v330 = vpack.c.bf16 %v326, %v325
        %v341 = vunpack.c.l.b16 %v285
        %v342 = vunpack.c.l.b16 %v286
        %v343 = vunpack.c.l.b16 %v287
        %v344 = vunpack.c.l.b16 %v288
        %v345 = vunpack.c.l.b16 %v289
        %v346 = vunpack.c.l.b16 %v290
        %v347 = vunpack.c.l.b16 %v291
        %v348 = vunpack.c.l.b16 %v292
        %v349 = vunpack.c.l.b16 %v293
        %v350 = vunpack.c.l.b16 %v294
        %v351 = vpack.c.b16 %v342, %v341
        %v352 = vpack.c.b16 %v344, %v343
        %v353 = vpack.c.b16 %v346, %v345
        %v354 = vpack.c.b16 %v348, %v347
        %v355 = vpack.c.b16 %v350, %v349
        %vm356 = vcmask 523264
        %v358 = vsel %vm356, %v351, 0
        %v361 = vsel %vm356, %v352, 0
        %v364 = vsel %vm356, %v353, 0
        %v367 = vsel %vm356, %v354, 0
        %v370 = vsel %vm356, %v355, 0
        %372 = vmatprep.subr.bf16.mxu0 0
        %373 = vmatpush1.bf16.msra.mxu0 %v327
        %374 = vmatprep.subr.bf16.mxu0 0
        %375 = vmatpush1.bf16.msra.mxu0 %v328
        %376 = vmatprep.subr.bf16.mxu0 0
        %377 = vmatpush1.bf16.msra.mxu0 %v329
        %378 = vmatprep.subr.bf16.mxu0 0
        %379 = vmatpush1.bf16.msra.mxu0 %v330
        %380 = vmatprep.subr.bf16.mxu0 0
        %381 = vmatpush1.bf16.msra.mxu0 0
        %382 = vmatprep.subr.bf16.mxu0 0
        %383 = vmatpush1.bf16.msra.mxu0 0
        %384 = vmatprep.subr.bf16.mxu0 0
        %385 = vmatpush1.bf16.msra.mxu0 0
        %386 = vmatprep.subr.bf16.mxu0 0
        %387 = vmatpush1.bf16.msra.mxu0 0
        %388 = vmatprep.subr.bf16.mxu0 0
        %389 = vmatpush1.bf16.msra.mxu0 0
        %390 = vmatprep.subr.bf16.mxu0 0
        %391 = vmatpush1.bf16.msra.mxu0 0
        %392 = vmatprep.subr.bf16.mxu0 0
        %393 = vmatpush1.bf16.msra.mxu0 0
        %394 = vmatprep.subr.bf16.mxu0 0
        %395 = vmatpush1.bf16.msra.mxu0 0
        %396 = vmatprep.subr.bf16.mxu0 0
        %397 = vmatpush1.bf16.msra.mxu0 0
        %398 = vmatprep.subr.bf16.mxu0 0
        %399 = vmatpush1.bf16.msra.mxu0 0
        %400 = vmatprep.subr.bf16.mxu0 0
        %401 = vmatpush1.bf16.msra.mxu0 0
        %402 = vmatprep.subr.bf16.mxu0 0
        %403 = vmatpush1.bf16.msra.mxu0 0
        %404 = vmatprep.mubr.bf16.mxu0 0
        %405 = vmatmul.mubr.bf16.gmra.mrb[0].mxu0 %v358
        %v406 = vpop.f32.mrb[0].mxu0
        %v407 = vadd.f32 0.0, %v406
        %v408 = vpop.f32.mrb[0].mxu0
        %v409 = vpop.f32.mrb[0].mxu0
        %v410 = vadd.f32 0.0, %v409
        %v411 = vpop.f32.mrb[0].mxu0
        %412 = vmatprep.mubr.bf16.mxu0 0
        %413 = vmatmul.mubr.bf16.gmra.mrb[0].mxu0 %v361
        %v414 = vpop.f32.mrb[0].mxu0
        %v415 = vadd.f32 0.0, %v414
        %v416 = vpop.f32.mrb[0].mxu0
        %v417 = vpop.f32.mrb[0].mxu0
        %v418 = vadd.f32 0.0, %v417
        %v419 = vpop.f32.mrb[0].mxu0
        %420 = vmatprep.mubr.bf16.mxu0 0
        %421 = vmatmul.mubr.bf16.gmra.mrb[0].mxu0 %v364
        %v422 = vpop.f32.mrb[0].mxu0
        %v423 = vadd.f32 0.0, %v422
        %v424 = vpop.f32.mrb[0].mxu0
        %v425 = vpop.f32.mrb[0].mxu0
        %v426 = vadd.f32 0.0, %v425
        %v427 = vpop.f32.mrb[0].mxu0
        %428 = vmatprep.mubr.bf16.mxu0 0
        %429 = vmatmul.mubr.bf16.gmra.mrb[0].mxu0 %v367
        %v430 = vpop.f32.mrb[0].mxu0
        %v431 = vadd.f32 0.0, %v430
        %v432 = vpop.f32.mrb[0].mxu0
        %v433 = vpop.f32.mrb[0].mxu0
        %v434 = vadd.f32 0.0, %v433
        %v435 = vpop.f32.mrb[0].mxu0
        %436 = vmatprep.mubr.bf16.mxu0 0
        %437 = vmatmul.mubr.bf16.gmra.mrb[0].mxu0 %v370
        %v438 = vpop.f32.mrb[0].mxu0
        %v439 = vadd.f32 0.0, %v438
        %v440 = vpop.f32.mrb[0].mxu0
        %v441 = vpop.f32.mrb[0].mxu0
        %v442 = vadd.f32 0.0, %v441
        %v443 = vpop.f32.mrb[0].mxu0
        %444 = vdwg.mxu0
        %v445 = vpack.c.bf16 %v410, %v407
        %447 = vset.pattern.permute.xlu0 0
        %448 = vperm.xlu0 %447, %v303
        %v449 = vpop.permute.xlu0 %448
        %452 = vset.pattern.permute.xlu0 0
        %453 = vperm.xlu0 %452, %v304
        %v454 = vpop.permute.xlu0 %453
        %457 = vset.pattern.permute.xlu0 0
        %458 = vperm.xlu0 %457, %v305
        %v459 = vpop.permute.xlu0 %458
        %462 = vset.pattern.permute.xlu0 0
        %463 = vperm.xlu0 %462, %v306
        %v464 = vpop.permute.xlu0 %463
        %467 = vset.pattern.permute.xlu0 0
        %468 = vperm.xlu0 %467, %v307
        %v469 = vpop.permute.xlu0 %468
        %472 = vset.pattern.permute.xlu0 0
        %473 = vperm.xlu0 %472, %v308
        %v474 = vpop.permute.xlu0 %473
        %477 = vset.pattern.permute.xlu0 0
        %478 = vperm.xlu0 %477, %v309
        %v479 = vpop.permute.xlu0 %478
        %482 = vset.pattern.permute.xlu0 0
        %483 = vperm.xlu0 %482, %v310
        %v484 = vpop.permute.xlu0 %483
        %v486 = vadd.f32 %v415, %v449
        %v487 = vadd.f32 %v418, %v454
        %v488 = vadd.f32 %v423, %v459
        %v489 = vadd.f32 %v426, %v464
        %v490 = vadd.f32 %v431, %v469
        %v491 = vadd.f32 %v434, %v474
        %v492 = vadd.f32 %v439, %v479
        %v493 = vadd.f32 %v442, %v484
        %494 = vxpose.xlu0.c.b16.start [1/8] %v445, 128
        %495 = vxpose.xlu0.c.b16.cont [2/8] 0, 128
        %496 = vxpose.xlu0.c.b16.cont [3/8] 0, 128
        %497 = vxpose.xlu0.c.b16.cont [4/8] 0, 128
        %498 = vxpose.xlu0.c.b16.cont [5/8] 0, 128
        %499 = vxpose.xlu0.c.b16.cont [6/8] 0, 128
        %500 = vxpose.xlu0.c.b16.cont [7/8] 0, 128
        %501 = vxpose.xlu0.c.b16.end [8/8] 0, 128
        %v502 = vpop.trf.xlu0
        %v503 = vpop.trf.xlu0
        %v504 = vpop.trf.xlu0
        %v505 = vpop.trf.xlu0
        %v506 = vpop.trf.xlu0
        %v507 = vpop.trf.xlu0
        %v508 = vpop.trf.xlu0
        %v509 = vpop.trf.xlu0
        %vm510 = vcmask 130048
        %v512 = vsel %vm510, %v502, 0
        %v515 = vsel %vm510, %v503, 0
        %v518 = vsel %vm510, %v504, 0
        %v521 = vsel %vm510, %v505, 0
        %v524 = vsel %vm510, %v506, 0
        %v527 = vsel %vm510, %v507, 0
        %v530 = vsel %vm510, %v508, 0
        %v533 = vsel %vm510, %v509, 0
        %535 = vmatprep.subr.bf16.mxu0 0
        %536 = vmatpush1.bf16.msra.mxu0 %v445
        %537 = vmatprep.subr.bf16.mxu0 0
        %538 = vmatpush1.bf16.msra.mxu0 0
        %539 = vmatprep.subr.bf16.mxu0 0
        %540 = vmatpush1.bf16.msra.mxu0 0
        %541 = vmatprep.subr.bf16.mxu0 0
        %542 = vmatpush1.bf16.msra.mxu0 0
        %543 = vmatprep.subr.bf16.mxu0 0
        %544 = vmatpush1.bf16.msra.mxu0 0
        %545 = vmatprep.subr.bf16.mxu0 0
        %546 = vmatpush1.bf16.msra.mxu0 0
        %547 = vmatprep.subr.bf16.mxu0 0
        %548 = vmatpush1.bf16.msra.mxu0 0
        %549 = vmatprep.subr.bf16.mxu0 0
        %550 = vmatpush1.bf16.msra.mxu0 0
        %551 = vmatprep.subr.bf16.mxu0 0
        %552 = vmatpush1.bf16.msra.mxu0 0
        %553 = vmatprep.subr.bf16.mxu0 0
        %554 = vmatpush1.bf16.msra.mxu0 0
        %555 = vmatprep.subr.bf16.mxu0 0
        %556 = vmatpush1.bf16.msra.mxu0 0
        %557 = vmatprep.subr.bf16.mxu0 0
        %558 = vmatpush1.bf16.msra.mxu0 0
        %559 = vmatprep.subr.bf16.mxu0 0
        %560 = vmatpush1.bf16.msra.mxu0 0
        %561 = vmatprep.subr.bf16.mxu0 0
        %562 = vmatpush1.bf16.msra.mxu0 0
        %563 = vmatprep.subr.bf16.mxu0 0
        %564 = vmatpush1.bf16.msra.mxu0 0
        %565 = vmatprep.subr.bf16.mxu0 0
        %566 = vmatpush1.bf16.msra.mxu0 0
        %567 = vmatprep.mubr.bf16.mxu0 0
        %568 = vmatmul.mubr.bf16.gmra.mrb[0].mxu0 %v512
        %v569 = vpop.f32.mrb[0].mxu0
        %v570 = vadd.f32 0.0, %v569
        %v571 = vpop.f32.mrb[0].mxu0
        %v572 = vpop.f32.mrb[0].mxu0
        %v573 = vadd.f32 0.0, %v572
        %v574 = vpop.f32.mrb[0].mxu0
        %575 = vmatprep.mubr.bf16.mxu0 0
        %576 = vmatmul.mubr.bf16.gmra.mrb[0].mxu0 %v515
        %v577 = vpop.f32.mrb[0].mxu0
        %v578 = vadd.f32 0.0, %v577
        %v579 = vpop.f32.mrb[0].mxu0
        %v580 = vpop.f32.mrb[0].mxu0
        %v581 = vadd.f32 0.0, %v580
        %v582 = vpop.f32.mrb[0].mxu0
        %583 = vmatprep.mubr.bf16.mxu0 0
        %584 = vmatmul.mubr.bf16.gmra.mrb[0].mxu0 %v518
        %v585 = vpop.f32.mrb[0].mxu0
        %v586 = vadd.f32 0.0, %v585
        %v587 = vpop.f32.mrb[0].mxu0
        %v588 = vpop.f32.mrb[0].mxu0
        %v589 = vadd.f32 0.0, %v588
        %v590 = vpop.f32.mrb[0].mxu0
        %591 = vmatprep.mubr.bf16.mxu0 0
        %592 = vmatmul.mubr.bf16.gmra.mrb[0].mxu0 %v521
        %v593 = vpop.f32.mrb[0].mxu0
        %v594 = vadd.f32 0.0, %v593
        %v595 = vpop.f32.mrb[0].mxu0
        %v596 = vpop.f32.mrb[0].mxu0
        %v597 = vadd.f32 0.0, %v596
        %v598 = vpop.f32.mrb[0].mxu0
        %599 = vmatprep.mubr.bf16.mxu0 0
        %600 = vmatmul.mubr.bf16.gmra.mrb[0].mxu0 %v524
        %v601 = vpop.f32.mrb[0].mxu0
        %v602 = vadd.f32 0.0, %v601
        %v603 = vpop.f32.mrb[0].mxu0
        %v604 = vpop.f32.mrb[0].mxu0
        %v605 = vadd.f32 0.0, %v604
        %v606 = vpop.f32.mrb[0].mxu0
        %607 = vmatprep.mubr.bf16.mxu0 0
        %608 = vmatmul.mubr.bf16.gmra.mrb[0].mxu0 %v527
        %v609 = vpop.f32.mrb[0].mxu0
        %v610 = vadd.f32 0.0, %v609
        %v611 = vpop.f32.mrb[0].mxu0
        %v612 = vpop.f32.mrb[0].mxu0
        %v613 = vadd.f32 0.0, %v612
        %v614 = vpop.f32.mrb[0].mxu0
        %615 = vmatprep.mubr.bf16.mxu0 0
        %616 = vmatmul.mubr.bf16.gmra.mrb[0].mxu0 %v530
        %v617 = vpop.f32.mrb[0].mxu0
        %v618 = vadd.f32 0.0, %v617
        %v619 = vpop.f32.mrb[0].mxu0
        %v620 = vpop.f32.mrb[0].mxu0
        %v621 = vadd.f32 0.0, %v620
        %v622 = vpop.f32.mrb[0].mxu0
        %623 = vmatprep.mubr.bf16.mxu0 0
        %624 = vmatmul.mubr.bf16.gmra.mrb[0].mxu0 %v533
        %v625 = vpop.f32.mrb[0].mxu0
        %v626 = vadd.f32 0.0, %v625
        %v627 = vpop.f32.mrb[0].mxu0
        %v628 = vpop.f32.mrb[0].mxu0
        %v629 = vadd.f32 0.0, %v628
        %v630 = vpop.f32.mrb[0].mxu0
        %631 = vdwg.mxu0
        %632 = vmax.xlane.f32.xlu0 %v570
        %v633 = vpop.xlane.xlu0 %632
        %634 = vmax.xlane.f32.xlu0 %v573
        %v635 = vpop.xlane.xlu0 %634
        %636 = vmax.xlane.f32.xlu0 %v578
        %v637 = vpop.xlane.xlu0 %636
        %638 = vmax.xlane.f32.xlu0 %v581
        %v639 = vpop.xlane.xlu0 %638
        %640 = vmax.xlane.f32.xlu0 %v586
        %v641 = vpop.xlane.xlu0 %640
        %642 = vmax.xlane.f32.xlu0 %v589
        %v643 = vpop.xlane.xlu0 %642
        %644 = vmax.xlane.f32.xlu0 %v594
        %v645 = vpop.xlane.xlu0 %644
        %646 = vmax.xlane.f32.xlu0 %v597
        %v647 = vpop.xlane.xlu0 %646
        %648 = vmax.xlane.f32.xlu0 %v602
        %v649 = vpop.xlane.xlu0 %648
        %650 = vmax.xlane.f32.xlu0 %v605
        %v651 = vpop.xlane.xlu0 %650
        %652 = vmax.xlane.f32.xlu0 %v610
        %v653 = vpop.xlane.xlu0 %652
        %654 = vmax.xlane.f32.xlu0 %v613
        %v655 = vpop.xlane.xlu0 %654
        %656 = vmax.xlane.f32.xlu0 %v618
        %v657 = vpop.xlane.xlu0 %656
        %658 = vmax.xlane.f32.xlu0 %v621
        %v659 = vpop.xlane.xlu0 %658
        %660 = vmax.xlane.f32.xlu0 %v626
        %v661 = vpop.xlane.xlu0 %660
        %662 = vmax.xlane.f32.xlu0 %v629
        %v663 = vpop.xlane.xlu0 %662
        %v664 = vsub.f32 %v570, %v633
        %v665 = vsub.f32 %v573, %v635
        %v666 = vsub.f32 %v578, %v637
        %v667 = vsub.f32 %v581, %v639
        %v668 = vsub.f32 %v586, %v641
        %v669 = vsub.f32 %v589, %v643
        %v670 = vsub.f32 %v594, %v645
        %v671 = vsub.f32 %v597, %v647
        %v672 = vsub.f32 %v602, %v649
        %v673 = vsub.f32 %v605, %v651
        %v674 = vsub.f32 %v610, %v653
        %v675 = vsub.f32 %v613, %v655
        %v676 = vsub.f32 %v618, %v657
        %v677 = vsub.f32 %v621, %v659
        %v678 = vsub.f32 %v626, %v661
        %v679 = vsub.f32 %v629, %v663
        %v680 = vmul.f32 %v664, 1.442695
        %v681 = vpow.pop %v680
        %v682 = vmul.f32 %v665, 1.442695
        %v683 = vpow.pop %v682
        %v684 = vmul.f32 %v666, 1.442695
        %v685 = vpow.pop %v684
        %v686 = vmul.f32 %v667, 1.442695
        %v687 = vpow.pop %v686
        %v688 = vmul.f32 %v668, 1.442695
        %v689 = vpow.pop %v688
        %v690 = vmul.f32 %v669, 1.442695
        %v691 = vpow.pop %v690
        %v692 = vmul.f32 %v670, 1.442695
        %v693 = vpow.pop %v692
        %v694 = vmul.f32 %v671, 1.442695
        %v695 = vpow.pop %v694
        %v696 = vmul.f32 %v672, 1.442695
        %v697 = vpow.pop %v696
        %v698 = vmul.f32 %v673, 1.442695
        %v699 = vpow.pop %v698
        %v700 = vmul.f32 %v674, 1.442695
        %v701 = vpow.pop %v700
        %v702 = vmul.f32 %v675, 1.442695
        %v703 = vpow.pop %v702
        %v704 = vmul.f32 %v676, 1.442695
        %v705 = vpow.pop %v704
        %v706 = vmul.f32 %v677, 1.442695
        %v707 = vpow.pop %v706
        %v708 = vmul.f32 %v678, 1.442695
        %v709 = vpow.pop %v708
        %v710 = vmul.f32 %v679, 1.442695
        %v711 = vpow.pop %v710
        %712 = vadd.xlane.f32.xlu0 %v681
        %v713 = vpop.xlane.xlu0 %712
        %714 = vadd.xlane.f32.xlu0 %v683
        %v715 = vpop.xlane.xlu0 %714
        %716 = vadd.xlane.f32.xlu0 %v685
        %v717 = vpop.xlane.xlu0 %716
        %718 = vadd.xlane.f32.xlu0 %v687
        %v719 = vpop.xlane.xlu0 %718
        %720 = vadd.xlane.f32.xlu0 %v689
        %v721 = vpop.xlane.xlu0 %720
        %722 = vadd.xlane.f32.xlu0 %v691
        %v723 = vpop.xlane.xlu0 %722
        %724 = vadd.xlane.f32.xlu0 %v693
        %v725 = vpop.xlane.xlu0 %724
        %726 = vadd.xlane.f32.xlu0 %v695
        %v727 = vpop.xlane.xlu0 %726
        %728 = vadd.xlane.f32.xlu0 %v697
        %v729 = vpop.xlane.xlu0 %728
        %730 = vadd.xlane.f32.xlu0 %v699
        %v731 = vpop.xlane.xlu0 %730
        %732 = vadd.xlane.f32.xlu0 %v701
        %v733 = vpop.xlane.xlu0 %732
        %734 = vadd.xlane.f32.xlu0 %v703
        %v735 = vpop.xlane.xlu0 %734
        %736 = vadd.xlane.f32.xlu0 %v705
        %v737 = vpop.xlane.xlu0 %736
        %738 = vadd.xlane.f32.xlu0 %v707
        %v739 = vpop.xlane.xlu0 %738
        %740 = vadd.xlane.f32.xlu0 %v709
        %v741 = vpop.xlane.xlu0 %740
        %742 = vadd.xlane.f32.xlu0 %v711
        %v743 = vpop.xlane.xlu0 %742
        %v744 = vrcp.pop %v713
        %v745 = vrcp.pop %v715
        %v746 = vrcp.pop %v717
        %v747 = vrcp.pop %v719
        %v748 = vrcp.pop %v721
        %v749 = vrcp.pop %v723
        %v750 = vrcp.pop %v725
        %v751 = vrcp.pop %v727
        %v752 = vrcp.pop %v729
        %v753 = vrcp.pop %v731
        %v754 = vrcp.pop %v733
        %v755 = vrcp.pop %v735
        %v756 = vrcp.pop %v737
        %v757 = vrcp.pop %v739
        %v758 = vrcp.pop %v741
        %v759 = vrcp.pop %v743
        %v760 = vmul.f32 %v681, %v744
        %v761 = vmul.f32 %v683, %v745
        %v762 = vmul.f32 %v685, %v746
        %v763 = vmul.f32 %v687, %v747
        %v764 = vmul.f32 %v689, %v748
        %v765 = vmul.f32 %v691, %v749
        %v766 = vmul.f32 %v693, %v750
        %v767 = vmul.f32 %v695, %v751
        %v768 = vmul.f32 %v697, %v752
        %v769 = vmul.f32 %v699, %v753
        %v770 = vmul.f32 %v701, %v754
        %v771 = vmul.f32 %v703, %v755
        %v772 = vmul.f32 %v705, %v756
        %v773 = vmul.f32 %v707, %v757
        %v774 = vmul.f32 %v709, %v758
        %v775 = vmul.f32 %v711, %v759
        %v776 = vadd.f32 %v760, %v761
        %v777 = vadd.f32 %v776, %v762
        %v778 = vadd.f32 %v777, %v763
        %v779 = vadd.f32 %v778, %v764
        %v780 = vadd.f32 %v779, %v765
        %v781 = vadd.f32 %v780, %v766
        %v782 = vadd.f32 %v781, %v767
        %v783 = vadd.f32 %v782, %v768
        %v784 = vadd.f32 %v783, %v769
        %v785 = vadd.f32 %v784, %v770
        %v786 = vadd.f32 %v785, %v771
        %v787 = vadd.f32 %v786, %v772
        %v788 = vadd.f32 %v787, %v773
        %v789 = vadd.f32 %v788, %v774
        %v790 = vadd.f32 %v789, %v775
        %v791 = vrot.slane %v790, 4
        %v792 = vadd.f32 %v790, %v791
        %v793 = vrot.slane %v792, 2
        %v794 = vadd.f32 %v792, %v793
        %v795 = vrot.slane %v794, 1
        %v796 = vadd.f32 %v794, %v795
        %v797 = vadd.f32 %v796, 1e-09
        %v798 = vrcp.pop %v797
        %v799 = vmul.f32 %v760, %v798
        %v800 = vmul.f32 %v761, %v798
        %v801 = vmul.f32 %v762, %v798
        %v802 = vmul.f32 %v763, %v798
        %v803 = vmul.f32 %v764, %v798
        %v804 = vmul.f32 %v765, %v798
        %v805 = vmul.f32 %v766, %v798
        %v806 = vmul.f32 %v767, %v798
        %v807 = vmul.f32 %v768, %v798
        %v808 = vmul.f32 %v769, %v798
        %v809 = vmul.f32 %v770, %v798
        %v810 = vmul.f32 %v771, %v798
        %v811 = vmul.f32 %v772, %v798
        %v812 = vmul.f32 %v773, %v798
        %v813 = vmul.f32 %v774, %v798
        %v814 = vmul.f32 %v775, %v798
        %v815 = vpack.c.bf16 %v487, %v486
        %v816 = vpack.c.bf16 %v489, %v488
        %v817 = vpack.c.bf16 %v491, %v490
        %v818 = vpack.c.bf16 %v493, %v492
        %v819 = vpack.c.bf16 %v800, %v799
        %v820 = vpack.c.bf16 %v802, %v801
        %v821 = vpack.c.bf16 %v804, %v803
        %v822 = vpack.c.bf16 %v806, %v805
        %v823 = vpack.c.bf16 %v808, %v807
        %v824 = vpack.c.bf16 %v810, %v809
        %v825 = vpack.c.bf16 %v812, %v811
        %v826 = vpack.c.bf16 %v814, %v813
        %827 = vmatprep.subr.bf16.mxu0 0
        %828 = vmatpush1.bf16.msra.mxu0 %v819
        %829 = vmatprep.subr.bf16.mxu0 0
        %830 = vmatpush1.bf16.msra.mxu0 %v820
        %831 = vmatprep.subr.bf16.mxu0 0
        %832 = vmatpush1.bf16.msra.mxu0 %v821
        %833 = vmatprep.subr.bf16.mxu0 0
        %834 = vmatpush1.bf16.msra.mxu0 %v822
        %835 = vmatprep.subr.bf16.mxu0 0
        %836 = vmatpush1.bf16.msra.mxu0 %v823
        %837 = vmatprep.subr.bf16.mxu0 0
        %838 = vmatpush1.bf16.msra.mxu0 %v824
        %839 = vmatprep.subr.bf16.mxu0 0
        %840 = vmatpush1.bf16.msra.mxu0 %v825
        %841 = vmatprep.subr.bf16.mxu0 0
        %842 = vmatpush1.bf16.msra.mxu0 %v826
        %843 = vmatprep.subr.bf16.mxu0 0
        %844 = vmatpush1.bf16.msra.mxu0 0
        %845 = vmatprep.subr.bf16.mxu0 0
        %846 = vmatpush1.bf16.msra.mxu0 0
        %847 = vmatprep.subr.bf16.mxu0 0
        %848 = vmatpush1.bf16.msra.mxu0 0
        %849 = vmatprep.subr.bf16.mxu0 0
        %850 = vmatpush1.bf16.msra.mxu0 0
        %851 = vmatprep.subr.bf16.mxu0 0
        %852 = vmatpush1.bf16.msra.mxu0 0
        %853 = vmatprep.subr.bf16.mxu0 0
        %854 = vmatpush1.bf16.msra.mxu0 0
        %855 = vmatprep.subr.bf16.mxu0 0
        %856 = vmatpush1.bf16.msra.mxu0 0
        %857 = vmatprep.subr.bf16.mxu0 0
        %858 = vmatpush1.bf16.msra.mxu0 0
        %859 = vmatprep.mubr.bf16.mxu0 0
        %860 = vmatmul.mubr.bf16.gmra.mrb[0].mxu0 %v815
        %v861 = vpop.f32.mrb[0].mxu0
        %v862 = vadd.f32 0.0, %v861
        %v863 = vpop.f32.mrb[0].mxu0
        %v864 = vpop.f32.mrb[0].mxu0
        %v865 = vadd.f32 0.0, %v864
        %v866 = vpop.f32.mrb[0].mxu0
        %867 = vmatprep.mubr.bf16.mxu0 0
        %868 = vmatmul.mubr.bf16.gmra.mrb[0].mxu0 %v816
        %v869 = vpop.f32.mrb[0].mxu0
        %v870 = vadd.f32 0.0, %v869
        %v871 = vpop.f32.mrb[0].mxu0
        %v872 = vpop.f32.mrb[0].mxu0
        %v873 = vadd.f32 0.0, %v872
        %v874 = vpop.f32.mrb[0].mxu0
        %875 = vmatprep.mubr.bf16.mxu0 0
        %876 = vmatmul.mubr.bf16.gmra.mrb[0].mxu0 %v817
        %v877 = vpop.f32.mrb[0].mxu0
        %v878 = vadd.f32 0.0, %v877
        %v879 = vpop.f32.mrb[0].mxu0
        %v880 = vpop.f32.mrb[0].mxu0
        %v881 = vadd.f32 0.0, %v880
        %v882 = vpop.f32.mrb[0].mxu0
        %883 = vmatprep.mubr.bf16.mxu0 0
        %884 = vmatmul.mubr.bf16.gmra.mrb[0].mxu0 %v818
        %v885 = vpop.f32.mrb[0].mxu0
        %v886 = vadd.f32 0.0, %v885
        %v887 = vpop.f32.mrb[0].mxu0
        %v888 = vpop.f32.mrb[0].mxu0
        %v889 = vadd.f32 0.0, %v888
        %v890 = vpop.f32.mrb[0].mxu0
        %891 = vdwg.mxu0
        %v892 = vsub.f32 %v319, %v862
        %v893 = vsub.f32 %v320, %v865
        %v894 = vsub.f32 %v321, %v870
        %v895 = vsub.f32 %v322, %v873
        %v896 = vsub.f32 %v323, %v878
        %v897 = vsub.f32 %v324, %v881
        %v898 = vsub.f32 %v325, %v886
        %v899 = vsub.f32 %v326, %v889
        %v900 = vpack.c.bf16 %v893, %v892
        %v901 = vpack.c.bf16 %v895, %v894
        %v902 = vpack.c.bf16 %v897, %v896
        %v903 = vpack.c.bf16 %v899, %v898
        %905 = vset.pattern.permute.xlu0 0
        %906 = vperm.xlu0 %905, %v311
        %v907 = vpop.permute.xlu0 %906
        %910 = vset.pattern.permute.xlu0 0
        %911 = vperm.xlu0 %910, %v312
        %v912 = vpop.permute.xlu0 %911
        %915 = vset.pattern.permute.xlu0 0
        %916 = vperm.xlu0 %915, %v313
        %v917 = vpop.permute.xlu0 %916
        %920 = vset.pattern.permute.xlu0 0
        %921 = vperm.xlu0 %920, %v314
        %v922 = vpop.permute.xlu0 %921
        %925 = vset.pattern.permute.xlu0 0
        %926 = vperm.xlu0 %925, %v315
        %v927 = vpop.permute.xlu0 %926
        %930 = vset.pattern.permute.xlu0 0
        %931 = vperm.xlu0 %930, %v316
        %v932 = vpop.permute.xlu0 %931
        %935 = vset.pattern.permute.xlu0 0
        %936 = vperm.xlu0 %935, %v317
        %v937 = vpop.permute.xlu0 %936
        %940 = vset.pattern.permute.xlu0 0
        %941 = vperm.xlu0 %940, %v318
        %v942 = vpop.permute.xlu0 %941
        %v952 = vunpack.c.l.b16 %v295
        %v953 = vunpack.c.l.b16 %v296
        %v954 = vunpack.c.l.b16 %v297
        %v955 = vunpack.c.l.b16 %v298
        %v956 = vunpack.c.l.b16 %v299
        %v957 = vunpack.c.l.b16 %v300
        %v958 = vunpack.c.l.b16 %v301
        %v959 = vunpack.c.l.b16 %v302
        %v960 = vpack.c.b16 %v953, %v952
        %v961 = vpack.c.b16 %v955, %v954
        %v962 = vpack.c.b16 %v957, %v956
        %v963 = vpack.c.b16 %v959, %v958
        %v965 = vsel %vm356, %v960, 0
        %v968 = vsel %vm356, %v961, 0
        %v971 = vsel %vm356, %v962, 0
        %v974 = vsel %vm356, %v963, 0
        %976 = vmatprep.subr.bf16.mxu0 0
        %977 = vmatpush1.bf16.msra.mxu0 %v900
        %978 = vmatprep.subr.bf16.mxu0 0
        %979 = vmatpush1.bf16.msra.mxu0 %v901
        %980 = vmatprep.subr.bf16.mxu0 0
        %981 = vmatpush1.bf16.msra.mxu0 %v902
        %982 = vmatprep.subr.bf16.mxu0 0
        %983 = vmatpush1.bf16.msra.mxu0 %v903
        %984 = vmatprep.subr.bf16.mxu0 0
        %985 = vmatpush1.bf16.msra.mxu0 0
        %986 = vmatprep.subr.bf16.mxu0 0
        %987 = vmatpush1.bf16.msra.mxu0 0
        %988 = vmatprep.subr.bf16.mxu0 0
        %989 = vmatpush1.bf16.msra.mxu0 0
        %990 = vmatprep.subr.bf16.mxu0 0
        %991 = vmatpush1.bf16.msra.mxu0 0
        %992 = vmatprep.subr.bf16.mxu0 0
        %993 = vmatpush1.bf16.msra.mxu0 0
        %994 = vmatprep.subr.bf16.mxu0 0
        %995 = vmatpush1.bf16.msra.mxu0 0
        %996 = vmatprep.subr.bf16.mxu0 0
        %997 = vmatpush1.bf16.msra.mxu0 0
        %998 = vmatprep.subr.bf16.mxu0 0
        %999 = vmatpush1.bf16.msra.mxu0 0
        %1000 = vmatprep.subr.bf16.mxu0 0
        %1001 = vmatpush1.bf16.msra.mxu0 0
        %1002 = vmatprep.subr.bf16.mxu0 0
        %1003 = vmatpush1.bf16.msra.mxu0 0
        %1004 = vmatprep.subr.bf16.mxu0 0
        %1005 = vmatpush1.bf16.msra.mxu0 0
        %1006 = vmatprep.subr.bf16.mxu0 0
        %1007 = vmatpush1.bf16.msra.mxu0 0
        %1008 = vmatprep.mubr.bf16.mxu0 0
        %1009 = vmatmul.mubr.bf16.gmra.mrb[0].mxu0 %v965
        %v1010 = vpop.f32.mrb[0].mxu0
        %v1011 = vadd.f32 %v907, %v1010
        %v1012 = vpop.f32.mrb[0].mxu0
        %v1013 = vpop.f32.mrb[0].mxu0
        %v1014 = vadd.f32 %v912, %v1013
        %v1015 = vpop.f32.mrb[0].mxu0
        %1016 = vmatprep.mubr.bf16.mxu0 0
        %1017 = vmatmul.mubr.bf16.gmra.mrb[0].mxu0 %v968
        %v1018 = vpop.f32.mrb[0].mxu0
        %v1019 = vadd.f32 %v917, %v1018
        %v1020 = vpop.f32.mrb[0].mxu0
        %v1021 = vpop.f32.mrb[0].mxu0
        %v1022 = vadd.f32 %v922, %v1021
        %v1023 = vpop.f32.mrb[0].mxu0
        %1024 = vmatprep.mubr.bf16.mxu0 0
        %1025 = vmatmul.mubr.bf16.gmra.mrb[0].mxu0 %v971
        %v1026 = vpop.f32.mrb[0].mxu0
        %v1027 = vadd.f32 %v927, %v1026
        %v1028 = vpop.f32.mrb[0].mxu0
        %v1029 = vpop.f32.mrb[0].mxu0
        %v1030 = vadd.f32 %v932, %v1029
        %v1031 = vpop.f32.mrb[0].mxu0
        %1032 = vmatprep.mubr.bf16.mxu0 0
        %1033 = vmatmul.mubr.bf16.gmra.mrb[0].mxu0 %v974
        %v1034 = vpop.f32.mrb[0].mxu0
        %v1035 = vadd.f32 %v937, %v1034
        %v1036 = vpop.f32.mrb[0].mxu0
        %v1037 = vpop.f32.mrb[0].mxu0
        %v1038 = vadd.f32 %v942, %v1037
        %v1039 = vpop.f32.mrb[0].mxu0
        %1040 = vdwg.mxu0
        %1041 = vst [vmem:[%s271] sm:$0xff] %v1011
        %1042 = vst [vmem:[%s271 + $0x8] sm:$0xff] %v1014
        %1043 = vst [vmem:[%s271 + $0x10] sm:$0xff] %v1019
        %1044 = vst [vmem:[%s271 + $0x18] sm:$0xff] %v1022
        %1045 = vst [vmem:[%s271 + $0x20] sm:$0xff] %v1027
        %1046 = vst [vmem:[%s271 + $0x28] sm:$0xff] %v1030
        %1047 = vst [vmem:[%s271 + $0x30] sm:$0xff] %v1035
        %1048 = vst [vmem:[%s271 + $0x38] sm:$0xff] %v1038
        %1049 = vadd.xlane.f32.xlu0 %v1011
        %v1050 = vpop.xlane.xlu0 %1049
        %1051 = vadd.xlane.f32.xlu0 %v1014
        %v1052 = vpop.xlane.xlu0 %1051
        %1053 = vadd.xlane.f32.xlu0 %v1019
        %v1054 = vpop.xlane.xlu0 %1053
        %1055 = vadd.xlane.f32.xlu0 %v1022
        %v1056 = vpop.xlane.xlu0 %1055
        %1057 = vadd.xlane.f32.xlu0 %v1027
        %v1058 = vpop.xlane.xlu0 %1057
        %1059 = vadd.xlane.f32.xlu0 %v1030
        %v1060 = vpop.xlane.xlu0 %1059
        %1061 = vadd.xlane.f32.xlu0 %v1035
        %v1062 = vpop.xlane.xlu0 %1061
        %1063 = vadd.xlane.f32.xlu0 %v1038
        %v1064 = vpop.xlane.xlu0 %1063
        %v1065 = vmul.f32 %v1011, %v1011
        %v1066 = vmul.f32 %v1014, %v1014
        %v1067 = vmul.f32 %v1019, %v1019
        %v1068 = vmul.f32 %v1022, %v1022
        %v1069 = vmul.f32 %v1027, %v1027
        %v1070 = vmul.f32 %v1030, %v1030
        %v1071 = vmul.f32 %v1035, %v1035
        %v1072 = vmul.f32 %v1038, %v1038
        %1073 = vadd.xlane.f32.xlu0 %v1065
        %v1074 = vpop.xlane.xlu0 %1073
        %1075 = vadd.xlane.f32.xlu0 %v1066
        %v1076 = vpop.xlane.xlu0 %1075
        %1077 = vadd.xlane.f32.xlu0 %v1067
        %v1078 = vpop.xlane.xlu0 %1077
        %1079 = vadd.xlane.f32.xlu0 %v1068
        %v1080 = vpop.xlane.xlu0 %1079
        %1081 = vadd.xlane.f32.xlu0 %v1069
        %v1082 = vpop.xlane.xlu0 %1081
        %1083 = vadd.xlane.f32.xlu0 %v1070
        %v1084 = vpop.xlane.xlu0 %1083
        %1085 = vadd.xlane.f32.xlu0 %v1071
        %v1086 = vpop.xlane.xlu0 %1085
        %1087 = vadd.xlane.f32.xlu0 %v1072
        %v1088 = vpop.xlane.xlu0 %1087
        %s1089 = scalar_lea.vmem %s245, 64 [#allocation2]
        %v1090 = vld [vmem:[%s1089] sm:$0xff]
        %v1091 = vld [vmem:[%s1089 + $0x8] sm:$0xff]
        %v1092 = vld [vmem:[%s1089 + $0x10] sm:$0xff]
        %v1093 = vld [vmem:[%s1089 + $0x18] sm:$0xff]
        %v1094 = vld [vmem:[%s1089 + $0x20] sm:$0xff]
        %v1095 = vld [vmem:[%s1089 + $0x28] sm:$0xff]
        %v1096 = vld [vmem:[%s1089 + $0x30] sm:$0xff]
        %v1097 = vld [vmem:[%s1089 + $0x38] sm:$0xff]
        %v1098 = vpack.c.bf16 %v1091, %v1090
        %v1099 = vpack.c.bf16 %v1093, %v1092
        %v1100 = vpack.c.bf16 %v1095, %v1094
        %v1101 = vpack.c.bf16 %v1097, %v1096
        %1102 = vmatprep.subr.bf16.mxu0 0
        %1103 = vmatpush1.bf16.msra.mxu0 %v1098
        %1104 = vmatprep.subr.bf16.mxu0 0
        %1105 = vmatpush1.bf16.msra.mxu0 %v1099
        %1106 = vmatprep.subr.bf16.mxu0 0
        %1107 = vmatpush1.bf16.msra.mxu0 %v1100
        %1108 = vmatprep.subr.bf16.mxu0 0
        %1109 = vmatpush1.bf16.msra.mxu0 %v1101
        %1110 = vmatprep.subr.bf16.mxu0 0
        %1111 = vmatpush1.bf16.msra.mxu0 0
        %1112 = vmatprep.subr.bf16.mxu0 0
        %1113 = vmatpush1.bf16.msra.mxu0 0
        %1114 = vmatprep.subr.bf16.mxu0 0
        %1115 = vmatpush1.bf16.msra.mxu0 0
        %1116 = vmatprep.subr.bf16.mxu0 0
        %1117 = vmatpush1.bf16.msra.mxu0 0
        %1118 = vmatprep.subr.bf16.mxu0 0
        %1119 = vmatpush1.bf16.msra.mxu0 0
        %1120 = vmatprep.subr.bf16.mxu0 0
        %1121 = vmatpush1.bf16.msra.mxu0 0
        %1122 = vmatprep.subr.bf16.mxu0 0
        %1123 = vmatpush1.bf16.msra.mxu0 0
        %1124 = vmatprep.subr.bf16.mxu0 0
        %1125 = vmatpush1.bf16.msra.mxu0 0
        %1126 = vmatprep.subr.bf16.mxu0 0
        %1127 = vmatpush1.bf16.msra.mxu0 0
        %1128 = vmatprep.subr.bf16.mxu0 0
        %1129 = vmatpush1.bf16.msra.mxu0 0
        %1130 = vmatprep.subr.bf16.mxu0 0
        %1131 = vmatpush1.bf16.msra.mxu0 0
        %1132 = vmatprep.subr.bf16.mxu0 0
        %1133 = vmatpush1.bf16.msra.mxu0 0
        %1134 = vmatprep.mubr.bf16.mxu0 0
        %1135 = vmatmul.mubr.bf16.gmra.mrb[0].mxu0 %v358
        %v1136 = vpop.f32.mrb[0].mxu0
        %v1137 = vadd.f32 0.0, %v1136
        %v1138 = vpop.f32.mrb[0].mxu0
        %v1139 = vpop.f32.mrb[0].mxu0
        %v1140 = vadd.f32 0.0, %v1139
        %v1141 = vpop.f32.mrb[0].mxu0
        %1142 = vmatprep.mubr.bf16.mxu0 0
        %1143 = vmatmul.mubr.bf16.gmra.mrb[0].mxu0 %v361
        %v1144 = vpop.f32.mrb[0].mxu0
        %v1145 = vadd.f32 0.0, %v1144
        %v1146 = vpop.f32.mrb[0].mxu0
        %v1147 = vpop.f32.mrb[0].mxu0
        %v1148 = vadd.f32 0.0, %v1147
        %v1149 = vpop.f32.mrb[0].mxu0
        %1150 = vmatprep.mubr.bf16.mxu0 0
        %1151 = vmatmul.mubr.bf16.gmra.mrb[0].mxu0 %v364
        %v1152 = vpop.f32.mrb[0].mxu0
        %v1153 = vadd.f32 0.0, %v1152
        %v1154 = vpop.f32.mrb[0].mxu0
        %v1155 = vpop.f32.mrb[0].mxu0
        %v1156 = vadd.f32 0.0, %v1155
        %v1157 = vpop.f32.mrb[0].mxu0
        %1158 = vmatprep.mubr.bf16.mxu0 0
        %1159 = vmatmul.mubr.bf16.gmra.mrb[0].mxu0 %v367
        %v1160 = vpop.f32.mrb[0].mxu0
        %v1161 = vadd.f32 0.0, %v1160
        %v1162 = vpop.f32.mrb[0].mxu0
        %v1163 = vpop.f32.mrb[0].mxu0
        %v1164 = vadd.f32 0.0, %v1163
        %v1165 = vpop.f32.mrb[0].mxu0
        %1166 = vmatprep.mubr.bf16.mxu0 0
        %1167 = vmatmul.mubr.bf16.gmra.mrb[0].mxu0 %v370
        %v1168 = vpop.f32.mrb[0].mxu0
        %v1169 = vadd.f32 0.0, %v1168
        %v1170 = vpop.f32.mrb[0].mxu0
        %v1171 = vpop.f32.mrb[0].mxu0
        %v1172 = vadd.f32 0.0, %v1171
        %v1173 = vpop.f32.mrb[0].mxu0
        %1174 = vdwg.mxu0
        %v1175 = vpack.c.bf16 %v1140, %v1137
        %v1176 = vadd.f32 %v1145, %v449
        %v1177 = vadd.f32 %v1148, %v454
        %v1178 = vadd.f32 %v1153, %v459
        %v1179 = vadd.f32 %v1156, %v464
        %v1180 = vadd.f32 %v1161, %v469
        %v1181 = vadd.f32 %v1164, %v474
        %v1182 = vadd.f32 %v1169, %v479
        %v1183 = vadd.f32 %v1172, %v484
        %1184 = vxpose.xlu0.c.b16.start [1/8] %v1175, 128
        %1185 = vxpose.xlu0.c.b16.cont [2/8] 0, 128
        %1186 = vxpose.xlu0.c.b16.cont [3/8] 0, 128
        %1187 = vxpose.xlu0.c.b16.cont [4/8] 0, 128
        %1188 = vxpose.xlu0.c.b16.cont [5/8] 0, 128
        %1189 = vxpose.xlu0.c.b16.cont [6/8] 0, 128
        %1190 = vxpose.xlu0.c.b16.cont [7/8] 0, 128
        %1191 = vxpose.xlu0.c.b16.end [8/8] 0, 128
        %v1192 = vpop.trf.xlu0
        %v1193 = vpop.trf.xlu0
        %v1194 = vpop.trf.xlu0
        %v1195 = vpop.trf.xlu0
        %v1196 = vpop.trf.xlu0
        %v1197 = vpop.trf.xlu0
        %v1198 = vpop.trf.xlu0
        %v1199 = vpop.trf.xlu0
        %v1201 = vsel %vm510, %v1192, 0
        %v1204 = vsel %vm510, %v1193, 0
        %v1207 = vsel %vm510, %v1194, 0
        %v1210 = vsel %vm510, %v1195, 0
        %v1213 = vsel %vm510, %v1196, 0
        %v1216 = vsel %vm510, %v1197, 0
        %v1219 = vsel %vm510, %v1198, 0
        %v1222 = vsel %vm510, %v1199, 0
        %1224 = vmatprep.subr.bf16.mxu0 0
        %1225 = vmatpush1.bf16.msra.mxu0 %v1175
        %1226 = vmatprep.subr.bf16.mxu0 0
        %1227 = vmatpush1.bf16.msra.mxu0 0
        %1228 = vmatprep.subr.bf16.mxu0 0
        %1229 = vmatpush1.bf16.msra.mxu0 0
        %1230 = vmatprep.subr.bf16.mxu0 0
        %1231 = vmatpush1.bf16.msra.mxu0 0
        %1232 = vmatprep.subr.bf16.mxu0 0
        %1233 = vmatpush1.bf16.msra.mxu0 0
        %1234 = vmatprep.subr.bf16.mxu0 0
        %1235 = vmatpush1.bf16.msra.mxu0 0
        %1236 = vmatprep.subr.bf16.mxu0 0
        %1237 = vmatpush1.bf16.msra.mxu0 0
        %1238 = vmatprep.subr.bf16.mxu0 0
        %1239 = vmatpush1.bf16.msra.mxu0 0
        %1240 = vmatprep.subr.bf16.mxu0 0
        %1241 = vmatpush1.bf16.msra.mxu0 0
        %1242 = vmatprep.subr.bf16.mxu0 0
        %1243 = vmatpush1.bf16.msra.mxu0 0
        %1244 = vmatprep.subr.bf16.mxu0 0
        %1245 = vmatpush1.bf16.msra.mxu0 0
        %1246 = vmatprep.subr.bf16.mxu0 0
        %1247 = vmatpush1.bf16.msra.mxu0 0
        %1248 = vmatprep.subr.bf16.mxu0 0
        %1249 = vmatpush1.bf16.msra.mxu0 0
        %1250 = vmatprep.subr.bf16.mxu0 0
        %1251 = vmatpush1.bf16.msra.mxu0 0
        %1252 = vmatprep.subr.bf16.mxu0 0
        %1253 = vmatpush1.bf16.msra.mxu0 0
        %1254 = vmatprep.subr.bf16.mxu0 0
        %1255 = vmatpush1.bf16.msra.mxu0 0
        %1256 = vmatprep.mubr.bf16.mxu0 0
        %1257 = vmatmul.mubr.bf16.gmra.mrb[0].mxu0 %v1201
        %v1258 = vpop.f32.mrb[0].mxu0
        %v1259 = vadd.f32 0.0, %v1258
        %v1260 = vpop.f32.mrb[0].mxu0
        %v1261 = vpop.f32.mrb[0].mxu0
        %v1262 = vadd.f32 0.0, %v1261
        %v1263 = vpop.f32.mrb[0].mxu0
        %1264 = vmatprep.mubr.bf16.mxu0 0
        %1265 = vmatmul.mubr.bf16.gmra.mrb[0].mxu0 %v1204
        %v1266 = vpop.f32.mrb[0].mxu0
        %v1267 = vadd.f32 0.0, %v1266
        %v1268 = vpop.f32.mrb[0].mxu0
        %v1269 = vpop.f32.mrb[0].mxu0
        %v1270 = vadd.f32 0.0, %v1269
        %v1271 = vpop.f32.mrb[0].mxu0
        %1272 = vmatprep.mubr.bf16.mxu0 0
        %1273 = vmatmul.mubr.bf16.gmra.mrb[0].mxu0 %v1207
        %v1274 = vpop.f32.mrb[0].mxu0
        %v1275 = vadd.f32 0.0, %v1274
        %v1276 = vpop.f32.mrb[0].mxu0
        %v1277 = vpop.f32.mrb[0].mxu0
        %v1278 = vadd.f32 0.0, %v1277
        %v1279 = vpop.f32.mrb[0].mxu0
        %1280 = vmatprep.mubr.bf16.mxu0 0
        %1281 = vmatmul.mubr.bf16.gmra.mrb[0].mxu0 %v1210
        %v1282 = vpop.f32.mrb[0].mxu0
        %v1283 = vadd.f32 0.0, %v1282
        %v1284 = vpop.f32.mrb[0].mxu0
        %v1285 = vpop.f32.mrb[0].mxu0
        %v1286 = vadd.f32 0.0, %v1285
        %v1287 = vpop.f32.mrb[0].mxu0
        %1288 = vmatprep.mubr.bf16.mxu0 0
        %1289 = vmatmul.mubr.bf16.gmra.mrb[0].mxu0 %v1213
        %v1290 = vpop.f32.mrb[0].mxu0
        %v1291 = vadd.f32 0.0, %v1290
        %v1292 = vpop.f32.mrb[0].mxu0
        %v1293 = vpop.f32.mrb[0].mxu0
        %v1294 = vadd.f32 0.0, %v1293
        %v1295 = vpop.f32.mrb[0].mxu0
        %1296 = vmatprep.mubr.bf16.mxu0 0
        %1297 = vmatmul.mubr.bf16.gmra.mrb[0].mxu0 %v1216
        %v1298 = vpop.f32.mrb[0].mxu0
        %v1299 = vadd.f32 0.0, %v1298
        %v1300 = vpop.f32.mrb[0].mxu0
        %v1301 = vpop.f32.mrb[0].mxu0
        %v1302 = vadd.f32 0.0, %v1301
        %v1303 = vpop.f32.mrb[0].mxu0
        %1304 = vmatprep.mubr.bf16.mxu0 0
        %1305 = vmatmul.mubr.bf16.gmra.mrb[0].mxu0 %v1219
        %v1306 = vpop.f32.mrb[0].mxu0
        %v1307 = vadd.f32 0.0, %v1306
        %v1308 = vpop.f32.mrb[0].mxu0
        %v1309 = vpop.f32.mrb[0].mxu0
        %v1310 = vadd.f32 0.0, %v1309
        %v1311 = vpop.f32.mrb[0].mxu0
        %1312 = vmatprep.mubr.bf16.mxu0 0
        %1313 = vmatmul.mubr.bf16.gmra.mrb[0].mxu0 %v1222
        %v1314 = vpop.f32.mrb[0].mxu0
        %v1315 = vadd.f32 0.0, %v1314
        %v1316 = vpop.f32.mrb[0].mxu0
        %v1317 = vpop.f32.mrb[0].mxu0
        %v1318 = vadd.f32 0.0, %v1317
        %v1319 = vpop.f32.mrb[0].mxu0
        %1320 = vdwg.mxu0
        %1321 = vmax.xlane.f32.xlu0 %v1259
        %v1322 = vpop.xlane.xlu0 %1321
        %1323 = vmax.xlane.f32.xlu0 %v1262
        %v1324 = vpop.xlane.xlu0 %1323
        %1325 = vmax.xlane.f32.xlu0 %v1267
        %v1326 = vpop.xlane.xlu0 %1325
        %1327 = vmax.xlane.f32.xlu0 %v1270
        %v1328 = vpop.xlane.xlu0 %1327
        %1329 = vmax.xlane.f32.xlu0 %v1275
        %v1330 = vpop.xlane.xlu0 %1329
        %1331 = vmax.xlane.f32.xlu0 %v1278
        %v1332 = vpop.xlane.xlu0 %1331
        %1333 = vmax.xlane.f32.xlu0 %v1283
        %v1334 = vpop.xlane.xlu0 %1333
        %1335 = vmax.xlane.f32.xlu0 %v1286
        %v1336 = vpop.xlane.xlu0 %1335
        %1337 = vmax.xlane.f32.xlu0 %v1291
        %v1338 = vpop.xlane.xlu0 %1337
        %1339 = vmax.xlane.f32.xlu0 %v1294
        %v1340 = vpop.xlane.xlu0 %1339
        %1341 = vmax.xlane.f32.xlu0 %v1299
        %v1342 = vpop.xlane.xlu0 %1341
        %1343 = vmax.xlane.f32.xlu0 %v1302
        %v1344 = vpop.xlane.xlu0 %1343
        %1345 = vmax.xlane.f32.xlu0 %v1307
        %v1346 = vpop.xlane.xlu0 %1345
        %1347 = vmax.xlane.f32.xlu0 %v1310
        %v1348 = vpop.xlane.xlu0 %1347
        %1349 = vmax.xlane.f32.xlu0 %v1315
        %v1350 = vpop.xlane.xlu0 %1349
        %1351 = vmax.xlane.f32.xlu0 %v1318
        %v1352 = vpop.xlane.xlu0 %1351
        %v1353 = vsub.f32 %v1259, %v1322
        %v1354 = vsub.f32 %v1262, %v1324
        %v1355 = vsub.f32 %v1267, %v1326
        %v1356 = vsub.f32 %v1270, %v1328
        %v1357 = vsub.f32 %v1275, %v1330
        %v1358 = vsub.f32 %v1278, %v1332
        %v1359 = vsub.f32 %v1283, %v1334
        %v1360 = vsub.f32 %v1286, %v1336
        %v1361 = vsub.f32 %v1291, %v1338
        %v1362 = vsub.f32 %v1294, %v1340
        %v1363 = vsub.f32 %v1299, %v1342
        %v1364 = vsub.f32 %v1302, %v1344
        %v1365 = vsub.f32 %v1307, %v1346
        %v1366 = vsub.f32 %v1310, %v1348
        %v1367 = vsub.f32 %v1315, %v1350
        %v1368 = vsub.f32 %v1318, %v1352
        %v1369 = vmul.f32 %v1353, 1.442695
        %v1370 = vpow.pop %v1369
        %v1371 = vmul.f32 %v1354, 1.442695
        %v1372 = vpow.pop %v1371
        %v1373 = vmul.f32 %v1355, 1.442695
        %v1374 = vpow.pop %v1373
        %v1375 = vmul.f32 %v1356, 1.442695
        %v1376 = vpow.pop %v1375
        %v1377 = vmul.f32 %v1357, 1.442695
        %v1378 = vpow.pop %v1377
        %v1379 = vmul.f32 %v1358, 1.442695
        %v1380 = vpow.pop %v1379
        %v1381 = vmul.f32 %v1359, 1.442695
        %v1382 = vpow.pop %v1381
        %v1383 = vmul.f32 %v1360, 1.442695
        %v1384 = vpow.pop %v1383
        %v1385 = vmul.f32 %v1361, 1.442695
        %v1386 = vpow.pop %v1385
        %v1387 = vmul.f32 %v1362, 1.442695
        %v1388 = vpow.pop %v1387
        %v1389 = vmul.f32 %v1363, 1.442695
        %v1390 = vpow.pop %v1389
        %v1391 = vmul.f32 %v1364, 1.442695
        %v1392 = vpow.pop %v1391
        %v1393 = vmul.f32 %v1365, 1.442695
        %v1394 = vpow.pop %v1393
        %v1395 = vmul.f32 %v1366, 1.442695
        %v1396 = vpow.pop %v1395
        %v1397 = vmul.f32 %v1367, 1.442695
        %v1398 = vpow.pop %v1397
        %v1399 = vmul.f32 %v1368, 1.442695
        %v1400 = vpow.pop %v1399
        %1401 = vadd.xlane.f32.xlu0 %v1370
        %v1402 = vpop.xlane.xlu0 %1401
        %1403 = vadd.xlane.f32.xlu0 %v1372
        %v1404 = vpop.xlane.xlu0 %1403
        %1405 = vadd.xlane.f32.xlu0 %v1374
        %v1406 = vpop.xlane.xlu0 %1405
        %1407 = vadd.xlane.f32.xlu0 %v1376
        %v1408 = vpop.xlane.xlu0 %1407
        %1409 = vadd.xlane.f32.xlu0 %v1378
        %v1410 = vpop.xlane.xlu0 %1409
        %1411 = vadd.xlane.f32.xlu0 %v1380
        %v1412 = vpop.xlane.xlu0 %1411
        %1413 = vadd.xlane.f32.xlu0 %v1382
        %v1414 = vpop.xlane.xlu0 %1413
        %1415 = vadd.xlane.f32.xlu0 %v1384
        %v1416 = vpop.xlane.xlu0 %1415
        %1417 = vadd.xlane.f32.xlu0 %v1386
        %v1418 = vpop.xlane.xlu0 %1417
        %1419 = vadd.xlane.f32.xlu0 %v1388
        %v1420 = vpop.xlane.xlu0 %1419
        %1421 = vadd.xlane.f32.xlu0 %v1390
        %v1422 = vpop.xlane.xlu0 %1421
        %1423 = vadd.xlane.f32.xlu0 %v1392
        %v1424 = vpop.xlane.xlu0 %1423
        %1425 = vadd.xlane.f32.xlu0 %v1394
        %v1426 = vpop.xlane.xlu0 %1425
        %1427 = vadd.xlane.f32.xlu0 %v1396
        %v1428 = vpop.xlane.xlu0 %1427
        %1429 = vadd.xlane.f32.xlu0 %v1398
        %v1430 = vpop.xlane.xlu0 %1429
        %1431 = vadd.xlane.f32.xlu0 %v1400
        %v1432 = vpop.xlane.xlu0 %1431
        %v1433 = vrcp.pop %v1402
        %v1434 = vrcp.pop %v1404
        %v1435 = vrcp.pop %v1406
        %v1436 = vrcp.pop %v1408
        %v1437 = vrcp.pop %v1410
        %v1438 = vrcp.pop %v1412
        %v1439 = vrcp.pop %v1414
        %v1440 = vrcp.pop %v1416
        %v1441 = vrcp.pop %v1418
        %v1442 = vrcp.pop %v1420
        %v1443 = vrcp.pop %v1422
        %v1444 = vrcp.pop %v1424
        %v1445 = vrcp.pop %v1426
        %v1446 = vrcp.pop %v1428
        %v1447 = vrcp.pop %v1430
        %v1448 = vrcp.pop %v1432
        %v1449 = vmul.f32 %v1370, %v1433
        %v1450 = vmul.f32 %v1372, %v1434
        %v1451 = vmul.f32 %v1374, %v1435
        %v1452 = vmul.f32 %v1376, %v1436
        %v1453 = vmul.f32 %v1378, %v1437
        %v1454 = vmul.f32 %v1380, %v1438
        %v1455 = vmul.f32 %v1382, %v1439
        %v1456 = vmul.f32 %v1384, %v1440
        %v1457 = vmul.f32 %v1386, %v1441
        %v1458 = vmul.f32 %v1388, %v1442
        %v1459 = vmul.f32 %v1390, %v1443
        %v1460 = vmul.f32 %v1392, %v1444
        %v1461 = vmul.f32 %v1394, %v1445
        %v1462 = vmul.f32 %v1396, %v1446
        %v1463 = vmul.f32 %v1398, %v1447
        %v1464 = vmul.f32 %v1400, %v1448
        %v1465 = vadd.f32 %v1449, %v1450
        %v1466 = vadd.f32 %v1465, %v1451
        %v1467 = vadd.f32 %v1466, %v1452
        %v1468 = vadd.f32 %v1467, %v1453
        %v1469 = vadd.f32 %v1468, %v1454
        %v1470 = vadd.f32 %v1469, %v1455
        %v1471 = vadd.f32 %v1470, %v1456
        %v1472 = vadd.f32 %v1471, %v1457
        %v1473 = vadd.f32 %v1472, %v1458
        %v1474 = vadd.f32 %v1473, %v1459
        %v1475 = vadd.f32 %v1474, %v1460
        %v1476 = vadd.f32 %v1475, %v1461
        %v1477 = vadd.f32 %v1476, %v1462
        %v1478 = vadd.f32 %v1477, %v1463
        %v1479 = vadd.f32 %v1478, %v1464
        %v1480 = vrot.slane %v1479, 4
        %v1481 = vadd.f32 %v1479, %v1480
        %v1482 = vrot.slane %v1481, 2
        %v1483 = vadd.f32 %v1481, %v1482
        %v1484 = vrot.slane %v1483, 1
        %v1485 = vadd.f32 %v1483, %v1484
        %v1486 = vadd.f32 %v1485, 1e-09
        %v1487 = vrcp.pop %v1486
        %v1488 = vmul.f32 %v1449, %v1487
        %v1489 = vmul.f32 %v1450, %v1487
        %v1490 = vmul.f32 %v1451, %v1487
        %v1491 = vmul.f32 %v1452, %v1487
        %v1492 = vmul.f32 %v1453, %v1487
        %v1493 = vmul.f32 %v1454, %v1487
        %v1494 = vmul.f32 %v1455, %v1487
        %v1495 = vmul.f32 %v1456, %v1487
        %v1496 = vmul.f32 %v1457, %v1487
        %v1497 = vmul.f32 %v1458, %v1487
        %v1498 = vmul.f32 %v1459, %v1487
        %v1499 = vmul.f32 %v1460, %v1487
        %v1500 = vmul.f32 %v1461, %v1487
        %v1501 = vmul.f32 %v1462, %v1487
        %v1502 = vmul.f32 %v1463, %v1487
        %v1503 = vmul.f32 %v1464, %v1487
        %v1504 = vpack.c.bf16 %v1177, %v1176
        %v1505 = vpack.c.bf16 %v1179, %v1178
        %v1506 = vpack.c.bf16 %v1181, %v1180
        %v1507 = vpack.c.bf16 %v1183, %v1182
        %v1508 = vpack.c.bf16 %v1489, %v1488
        %v1509 = vpack.c.bf16 %v1491, %v1490
        %v1510 = vpack.c.bf16 %v1493, %v1492
        %v1511 = vpack.c.bf16 %v1495, %v1494
        %v1512 = vpack.c.bf16 %v1497, %v1496
        %v1513 = vpack.c.bf16 %v1499, %v1498
        %v1514 = vpack.c.bf16 %v1501, %v1500
        %v1515 = vpack.c.bf16 %v1503, %v1502
        %1516 = vmatprep.subr.bf16.mxu0 0
        %1517 = vmatpush1.bf16.msra.mxu0 %v1508
        %1518 = vmatprep.subr.bf16.mxu0 0
        %1519 = vmatpush1.bf16.msra.mxu0 %v1509
        %1520 = vmatprep.subr.bf16.mxu0 0
        %1521 = vmatpush1.bf16.msra.mxu0 %v1510
        %1522 = vmatprep.subr.bf16.mxu0 0
        %1523 = vmatpush1.bf16.msra.mxu0 %v1511
        %1524 = vmatprep.subr.bf16.mxu0 0
        %1525 = vmatpush1.bf16.msra.mxu0 %v1512
        %1526 = vmatprep.subr.bf16.mxu0 0
        %1527 = vmatpush1.bf16.msra.mxu0 %v1513
        %1528 = vmatprep.subr.bf16.mxu0 0
        %1529 = vmatpush1.bf16.msra.mxu0 %v1514
        %1530 = vmatprep.subr.bf16.mxu0 0
        %1531 = vmatpush1.bf16.msra.mxu0 %v1515
        %1532 = vmatprep.subr.bf16.mxu0 0
        %1533 = vmatpush1.bf16.msra.mxu0 0
        %1534 = vmatprep.subr.bf16.mxu0 0
        %1535 = vmatpush1.bf16.msra.mxu0 0
        %1536 = vmatprep.subr.bf16.mxu0 0
        %1537 = vmatpush1.bf16.msra.mxu0 0
        %1538 = vmatprep.subr.bf16.mxu0 0
        %1539 = vmatpush1.bf16.msra.mxu0 0
        %1540 = vmatprep.subr.bf16.mxu0 0
        %1541 = vmatpush1.bf16.msra.mxu0 0
        %1542 = vmatprep.subr.bf16.mxu0 0
        %1543 = vmatpush1.bf16.msra.mxu0 0
        %1544 = vmatprep.subr.bf16.mxu0 0
        %1545 = vmatpush1.bf16.msra.mxu0 0
        %1546 = vmatprep.subr.bf16.mxu0 0
        %1547 = vmatpush1.bf16.msra.mxu0 0
        %1548 = vmatprep.mubr.bf16.mxu0 0
        %1549 = vmatmul.mubr.bf16.gmra.mrb[0].mxu0 %v1504
        %v1550 = vpop.f32.mrb[0].mxu0
        %v1551 = vadd.f32 0.0, %v1550
        %v1552 = vpop.f32.mrb[0].mxu0
        %v1553 = vpop.f32.mrb[0].mxu0
        %v1554 = vadd.f32 0.0, %v1553
        %v1555 = vpop.f32.mrb[0].mxu0
        %1556 = vmatprep.mubr.bf16.mxu0 0
        %1557 = vmatmul.mubr.bf16.gmra.mrb[0].mxu0 %v1505
        %v1558 = vpop.f32.mrb[0].mxu0
        %v1559 = vadd.f32 0.0, %v1558
        %v1560 = vpop.f32.mrb[0].mxu0
        %v1561 = vpop.f32.mrb[0].mxu0
        %v1562 = vadd.f32 0.0, %v1561
        %v1563 = vpop.f32.mrb[0].mxu0
        %1564 = vmatprep.mubr.bf16.mxu0 0
        %1565 = vmatmul.mubr.bf16.gmra.mrb[0].mxu0 %v1506
        %v1566 = vpop.f32.mrb[0].mxu0
        %v1567 = vadd.f32 0.0, %v1566
        %v1568 = vpop.f32.mrb[0].mxu0
        %v1569 = vpop.f32.mrb[0].mxu0
        %v1570 = vadd.f32 0.0, %v1569
        %v1571 = vpop.f32.mrb[0].mxu0
        %1572 = vmatprep.mubr.bf16.mxu0 0
        %1573 = vmatmul.mubr.bf16.gmra.mrb[0].mxu0 %v1507
        %v1574 = vpop.f32.mrb[0].mxu0
        %v1575 = vadd.f32 0.0, %v1574
        %v1576 = vpop.f32.mrb[0].mxu0
        %v1577 = vpop.f32.mrb[0].mxu0
        %v1578 = vadd.f32 0.0, %v1577
        %v1579 = vpop.f32.mrb[0].mxu0
        %1580 = vdwg.mxu0
        %v1581 = vsub.f32 %v1090, %v1551
        %v1582 = vsub.f32 %v1091, %v1554
        %v1583 = vsub.f32 %v1092, %v1559
        %v1584 = vsub.f32 %v1093, %v1562
        %v1585 = vsub.f32 %v1094, %v1567
        %v1586 = vsub.f32 %v1095, %v1570
        %v1587 = vsub.f32 %v1096, %v1575
        %v1588 = vsub.f32 %v1097, %v1578
        %v1589 = vpack.c.bf16 %v1582, %v1581
        %v1590 = vpack.c.bf16 %v1584, %v1583
        %v1591 = vpack.c.bf16 %v1586, %v1585
        %v1592 = vpack.c.bf16 %v1588, %v1587
        %1593 = vmatprep.subr.bf16.mxu0 0
        %1594 = vmatpush1.bf16.msra.mxu0 %v1589
        %1595 = vmatprep.subr.bf16.mxu0 0
        %1596 = vmatpush1.bf16.msra.mxu0 %v1590
        %1597 = vmatprep.subr.bf16.mxu0 0
        %1598 = vmatpush1.bf16.msra.mxu0 %v1591
        %1599 = vmatprep.subr.bf16.mxu0 0
        %1600 = vmatpush1.bf16.msra.mxu0 %v1592
        %1601 = vmatprep.subr.bf16.mxu0 0
        %1602 = vmatpush1.bf16.msra.mxu0 0
        %1603 = vmatprep.subr.bf16.mxu0 0
        %1604 = vmatpush1.bf16.msra.mxu0 0
        %1605 = vmatprep.subr.bf16.mxu0 0
        %1606 = vmatpush1.bf16.msra.mxu0 0
        %1607 = vmatprep.subr.bf16.mxu0 0
        %1608 = vmatpush1.bf16.msra.mxu0 0
        %1609 = vmatprep.subr.bf16.mxu0 0
        %1610 = vmatpush1.bf16.msra.mxu0 0
        %1611 = vmatprep.subr.bf16.mxu0 0
        %1612 = vmatpush1.bf16.msra.mxu0 0
        %1613 = vmatprep.subr.bf16.mxu0 0
        %1614 = vmatpush1.bf16.msra.mxu0 0
        %1615 = vmatprep.subr.bf16.mxu0 0
        %1616 = vmatpush1.bf16.msra.mxu0 0
        %1617 = vmatprep.subr.bf16.mxu0 0
        %1618 = vmatpush1.bf16.msra.mxu0 0
        %1619 = vmatprep.subr.bf16.mxu0 0
        %1620 = vmatpush1.bf16.msra.mxu0 0
        %1621 = vmatprep.subr.bf16.mxu0 0
        %1622 = vmatpush1.bf16.msra.mxu0 0
        %1623 = vmatprep.subr.bf16.mxu0 0
        %1624 = vmatpush1.bf16.msra.mxu0 0
        %1625 = vmatprep.mubr.bf16.mxu0 0
        %1626 = vmatmul.mubr.bf16.gmra.mrb[0].mxu0 %v965
        %v1627 = vpop.f32.mrb[0].mxu0
        %v1628 = vadd.f32 %v907, %v1627
        %v1629 = vpop.f32.mrb[0].mxu0
        %v1630 = vpop.f32.mrb[0].mxu0
        %v1631 = vadd.f32 %v912, %v1630
        %v1632 = vpop.f32.mrb[0].mxu0
        %1633 = vmatprep.mubr.bf16.mxu0 0
        %1634 = vmatmul.mubr.bf16.gmra.mrb[0].mxu0 %v968
        %v1635 = vpop.f32.mrb[0].mxu0
        %v1636 = vadd.f32 %v917, %v1635
        %v1637 = vpop.f32.mrb[0].mxu0
        %v1638 = vpop.f32.mrb[0].mxu0
        %v1639 = vadd.f32 %v922, %v1638
        %v1640 = vpop.f32.mrb[0].mxu0
        %1641 = vmatprep.mubr.bf16.mxu0 0
        %1642 = vmatmul.mubr.bf16.gmra.mrb[0].mxu0 %v971
        %v1643 = vpop.f32.mrb[0].mxu0
        %v1644 = vadd.f32 %v927, %v1643
        %v1645 = vpop.f32.mrb[0].mxu0
        %v1646 = vpop.f32.mrb[0].mxu0
        %v1647 = vadd.f32 %v932, %v1646
        %v1648 = vpop.f32.mrb[0].mxu0
        %1649 = vmatprep.mubr.bf16.mxu0 0
        %1650 = vmatmul.mubr.bf16.gmra.mrb[0].mxu0 %v974
        %v1651 = vpop.f32.mrb[0].mxu0
        %v1652 = vadd.f32 %v937, %v1651
        %v1653 = vpop.f32.mrb[0].mxu0
        %v1654 = vpop.f32.mrb[0].mxu0
        %v1655 = vadd.f32 %v942, %v1654
        %v1656 = vpop.f32.mrb[0].mxu0
        %1657 = vdwg.mxu0
        %s1658 = scalar_lea.vmem %s271, 64 [#allocation5]
        %1659 = vst [vmem:[%s1658] sm:$0xff] %v1628
        %1660 = vst [vmem:[%s1658 + $0x8] sm:$0xff] %v1631
        %1661 = vst [vmem:[%s1658 + $0x10] sm:$0xff] %v1636
        %1662 = vst [vmem:[%s1658 + $0x18] sm:$0xff] %v1639
        %1663 = vst [vmem:[%s1658 + $0x20] sm:$0xff] %v1644
        %1664 = vst [vmem:[%s1658 + $0x28] sm:$0xff] %v1647
        %1665 = vst [vmem:[%s1658 + $0x30] sm:$0xff] %v1652
        %1666 = vst [vmem:[%s1658 + $0x38] sm:$0xff] %v1655
        %1667 = vadd.xlane.f32.xlu0 %v1628
        %v1668 = vpop.xlane.xlu0 %1667
        %1669 = vadd.xlane.f32.xlu0 %v1631
        %v1670 = vpop.xlane.xlu0 %1669
        %1671 = vadd.xlane.f32.xlu0 %v1636
        %v1672 = vpop.xlane.xlu0 %1671
        %1673 = vadd.xlane.f32.xlu0 %v1639
        %v1674 = vpop.xlane.xlu0 %1673
        %1675 = vadd.xlane.f32.xlu0 %v1644
        %v1676 = vpop.xlane.xlu0 %1675
        %1677 = vadd.xlane.f32.xlu0 %v1647
        %v1678 = vpop.xlane.xlu0 %1677
        %1679 = vadd.xlane.f32.xlu0 %v1652
        %v1680 = vpop.xlane.xlu0 %1679
        %1681 = vadd.xlane.f32.xlu0 %v1655
        %v1682 = vpop.xlane.xlu0 %1681
        %v1683 = vmul.f32 %v1628, %v1628
        %v1684 = vmul.f32 %v1631, %v1631
        %v1685 = vmul.f32 %v1636, %v1636
        %v1686 = vmul.f32 %v1639, %v1639
        %v1687 = vmul.f32 %v1644, %v1644
        %v1688 = vmul.f32 %v1647, %v1647
        %v1689 = vmul.f32 %v1652, %v1652
        %v1690 = vmul.f32 %v1655, %v1655
        %1691 = vadd.xlane.f32.xlu0 %v1683
        %v1692 = vpop.xlane.xlu0 %1691
        %1693 = vadd.xlane.f32.xlu0 %v1684
        %v1694 = vpop.xlane.xlu0 %1693
        %1695 = vadd.xlane.f32.xlu0 %v1685
        %v1696 = vpop.xlane.xlu0 %1695
        %1697 = vadd.xlane.f32.xlu0 %v1686
        %v1698 = vpop.xlane.xlu0 %1697
        %1699 = vadd.xlane.f32.xlu0 %v1687
        %v1700 = vpop.xlane.xlu0 %1699
        %1701 = vadd.xlane.f32.xlu0 %v1688
        %v1702 = vpop.xlane.xlu0 %1701
        %1703 = vadd.xlane.f32.xlu0 %v1689
        %v1704 = vpop.xlane.xlu0 %1703
        %1705 = vadd.xlane.f32.xlu0 %v1690
        %v1706 = vpop.xlane.xlu0 %1705
        %v1707 = vadd.f32 %v1050, %v1668
        %v1708 = vadd.f32 %v1052, %v1670
        %v1709 = vadd.f32 %v1054, %v1672
        %v1710 = vadd.f32 %v1056, %v1674
        %v1711 = vadd.f32 %v1058, %v1676
        %v1712 = vadd.f32 %v1060, %v1678
        %v1713 = vadd.f32 %v1062, %v1680
        %v1714 = vadd.f32 %v1064, %v1682
        %v1715 = vadd.f32 %v1074, %v1692
        %v1716 = vadd.f32 %v1076, %v1694
        %v1717 = vadd.f32 %v1078, %v1696
        %v1718 = vadd.f32 %v1080, %v1698
        %v1719 = vadd.f32 %v1082, %v1700
        %v1720 = vadd.f32 %v1084, %v1702
        %v1721 = vadd.f32 %v1086, %v1704
        %v1722 = vadd.f32 %v1088, %v1706
        %s1723 = scalar_lea.vmem %s245, 128 [#allocation2]
        %v1724 = vld [vmem:[%s1723] sm:$0xff]
        %v1725 = vld [vmem:[%s1723 + $0x8] sm:$0xff]
        %v1726 = vld [vmem:[%s1723 + $0x10] sm:$0xff]
        %v1727 = vld [vmem:[%s1723 + $0x18] sm:$0xff]
        %v1728 = vld [vmem:[%s1723 + $0x20] sm:$0xff]
        %v1729 = vld [vmem:[%s1723 + $0x28] sm:$0xff]
        %v1730 = vld [vmem:[%s1723 + $0x30] sm:$0xff]
        %v1731 = vld [vmem:[%s1723 + $0x38] sm:$0xff]
        %v1732 = vpack.c.bf16 %v1725, %v1724
        %v1733 = vpack.c.bf16 %v1727, %v1726
        %v1734 = vpack.c.bf16 %v1729, %v1728
        %v1735 = vpack.c.bf16 %v1731, %v1730
        %1736 = vmatprep.subr.bf16.mxu0 0
        %1737 = vmatpush1.bf16.msra.mxu0 %v1732
        %1738 = vmatprep.subr.bf16.mxu0 0
        %1739 = vmatpush1.bf16.msra.mxu0 %v1733
        %1740 = vmatprep.subr.bf16.mxu0 0
        %1741 = vmatpush1.bf16.msra.mxu0 %v1734
        %1742 = vmatprep.subr.bf16.mxu0 0
        %1743 = vmatpush1.bf16.msra.mxu0 %v1735
        %1744 = vmatprep.subr.bf16.mxu0 0
        %1745 = vmatpush1.bf16.msra.mxu0 0
        %1746 = vmatprep.subr.bf16.mxu0 0
        %1747 = vmatpush1.bf16.msra.mxu0 0
        %1748 = vmatprep.subr.bf16.mxu0 0
        %1749 = vmatpush1.bf16.msra.mxu0 0
        %1750 = vmatprep.subr.bf16.mxu0 0
        %1751 = vmatpush1.bf16.msra.mxu0 0
        %1752 = vmatprep.subr.bf16.mxu0 0
        %1753 = vmatpush1.bf16.msra.mxu0 0
        %1754 = vmatprep.subr.bf16.mxu0 0
        %1755 = vmatpush1.bf16.msra.mxu0 0
        %1756 = vmatprep.subr.bf16.mxu0 0
        %1757 = vmatpush1.bf16.msra.mxu0 0
        %1758 = vmatprep.subr.bf16.mxu0 0
        %1759 = vmatpush1.bf16.msra.mxu0 0
        %1760 = vmatprep.subr.bf16.mxu0 0
        %1761 = vmatpush1.bf16.msra.mxu0 0
        %1762 = vmatprep.subr.bf16.mxu0 0
        %1763 = vmatpush1.bf16.msra.mxu0 0
        %1764 = vmatprep.subr.bf16.mxu0 0
        %1765 = vmatpush1.bf16.msra.mxu0 0
        %1766 = vmatprep.subr.bf16.mxu0 0
        %1767 = vmatpush1.bf16.msra.mxu0 0
        %1768 = vmatprep.mubr.bf16.mxu0 0
        %1769 = vmatmul.mubr.bf16.gmra.mrb[0].mxu0 %v358
        %v1770 = vpop.f32.mrb[0].mxu0
        %v1771 = vadd.f32 0.0, %v1770
        %v1772 = vpop.f32.mrb[0].mxu0
        %v1773 = vpop.f32.mrb[0].mxu0
        %v1774 = vadd.f32 0.0, %v1773
        %v1775 = vpop.f32.mrb[0].mxu0
        %1776 = vmatprep.mubr.bf16.mxu0 0
        %1777 = vmatmul.mubr.bf16.gmra.mrb[0].mxu0 %v361
        %v1778 = vpop.f32.mrb[0].mxu0
        %v1779 = vadd.f32 0.0, %v1778
        %v1780 = vpop.f32.mrb[0].mxu0
        %v1781 = vpop.f32.mrb[0].mxu0
        %v1782 = vadd.f32 0.0, %v1781
        %v1783 = vpop.f32.mrb[0].mxu0
        %1784 = vmatprep.mubr.bf16.mxu0 0
        %1785 = vmatmul.mubr.bf16.gmra.mrb[0].mxu0 %v364
        %v1786 = vpop.f32.mrb[0].mxu0
        %v1787 = vadd.f32 0.0, %v1786
        %v1788 = vpop.f32.mrb[0].mxu0
        %v1789 = vpop.f32.mrb[0].mxu0
        %v1790 = vadd.f32 0.0, %v1789
        %v1791 = vpop.f32.mrb[0].mxu0
        %1792 = vmatprep.mubr.bf16.mxu0 0
        %1793 = vmatmul.mubr.bf16.gmra.mrb[0].mxu0 %v367
        %v1794 = vpop.f32.mrb[0].mxu0
        %v1795 = vadd.f32 0.0, %v1794
        %v1796 = vpop.f32.mrb[0].mxu0
        %v1797 = vpop.f32.mrb[0].mxu0
        %v1798 = vadd.f32 0.0, %v1797
        %v1799 = vpop.f32.mrb[0].mxu0
        %1800 = vmatprep.mubr.bf16.mxu0 0
        %1801 = vmatmul.mubr.bf16.gmra.mrb[0].mxu0 %v370
        %v1802 = vpop.f32.mrb[0].mxu0
        %v1803 = vadd.f32 0.0, %v1802
        %v1804 = vpop.f32.mrb[0].mxu0
        %v1805 = vpop.f32.mrb[0].mxu0
        %v1806 = vadd.f32 0.0, %v1805
        %v1807 = vpop.f32.mrb[0].mxu0
        %1808 = vdwg.mxu0
        %v1809 = vpack.c.bf16 %v1774, %v1771
        %v1810 = vadd.f32 %v1779, %v449
        %v1811 = vadd.f32 %v1782, %v454
        %v1812 = vadd.f32 %v1787, %v459
        %v1813 = vadd.f32 %v1790, %v464
        %v1814 = vadd.f32 %v1795, %v469
        %v1815 = vadd.f32 %v1798, %v474
        %v1816 = vadd.f32 %v1803, %v479
        %v1817 = vadd.f32 %v1806, %v484
        %1818 = vxpose.xlu0.c.b16.start [1/8] %v1809, 128
        %1819 = vxpose.xlu0.c.b16.cont [2/8] 0, 128
        %1820 = vxpose.xlu0.c.b16.cont [3/8] 0, 128
        %1821 = vxpose.xlu0.c.b16.cont [4/8] 0, 128
        %1822 = vxpose.xlu0.c.b16.cont [5/8] 0, 128
        %1823 = vxpose.xlu0.c.b16.cont [6/8] 0, 128
        %1824 = vxpose.xlu0.c.b16.cont [7/8] 0, 128
        %1825 = vxpose.xlu0.c.b16.end [8/8] 0, 128
        %v1826 = vpop.trf.xlu0
        %v1827 = vpop.trf.xlu0
        %v1828 = vpop.trf.xlu0
        %v1829 = vpop.trf.xlu0
        %v1830 = vpop.trf.xlu0
        %v1831 = vpop.trf.xlu0
        %v1832 = vpop.trf.xlu0
        %v1833 = vpop.trf.xlu0
        %v1835 = vsel %vm510, %v1826, 0
        %v1838 = vsel %vm510, %v1827, 0
        %v1841 = vsel %vm510, %v1828, 0
        %v1844 = vsel %vm510, %v1829, 0
        %v1847 = vsel %vm510, %v1830, 0
        %v1850 = vsel %vm510, %v1831, 0
        %v1853 = vsel %vm510, %v1832, 0
        %v1856 = vsel %vm510, %v1833, 0
        %1858 = vmatprep.subr.bf16.mxu0 0
        %1859 = vmatpush1.bf16.msra.mxu0 %v1809
        %1860 = vmatprep.subr.bf16.mxu0 0
        %1861 = vmatpush1.bf16.msra.mxu0 0
        %1862 = vmatprep.subr.bf16.mxu0 0
        %1863 = vmatpush1.bf16.msra.mxu0 0
        %1864 = vmatprep.subr.bf16.mxu0 0
        %1865 = vmatpush1.bf16.msra.mxu0 0
        %1866 = vmatprep.subr.bf16.mxu0 0
        %1867 = vmatpush1.bf16.msra.mxu0 0
        %1868 = vmatprep.subr.bf16.mxu0 0
        %1869 = vmatpush1.bf16.msra.mxu0 0
        %1870 = vmatprep.subr.bf16.mxu0 0
        %1871 = vmatpush1.bf16.msra.mxu0 0
        %1872 = vmatprep.subr.bf16.mxu0 0
        %1873 = vmatpush1.bf16.msra.mxu0 0
        %1874 = vmatprep.subr.bf16.mxu0 0
        %1875 = vmatpush1.bf16.msra.mxu0 0
        %1876 = vmatprep.subr.bf16.mxu0 0
        %1877 = vmatpush1.bf16.msra.mxu0 0
        %1878 = vmatprep.subr.bf16.mxu0 0
        %1879 = vmatpush1.bf16.msra.mxu0 0
        %1880 = vmatprep.subr.bf16.mxu0 0
        %1881 = vmatpush1.bf16.msra.mxu0 0
        %1882 = vmatprep.subr.bf16.mxu0 0
        %1883 = vmatpush1.bf16.msra.mxu0 0
        %1884 = vmatprep.subr.bf16.mxu0 0
        %1885 = vmatpush1.bf16.msra.mxu0 0
        %1886 = vmatprep.subr.bf16.mxu0 0
        %1887 = vmatpush1.bf16.msra.mxu0 0
        %1888 = vmatprep.subr.bf16.mxu0 0
        %1889 = vmatpush1.bf16.msra.mxu0 0
        %1890 = vmatprep.mubr.bf16.mxu0 0
        %1891 = vmatmul.mubr.bf16.gmra.mrb[0].mxu0 %v1835
        %v1892 = vpop.f32.mrb[0].mxu0
        %v1893 = vadd.f32 0.0, %v1892
        %v1894 = vpop.f32.mrb[0].mxu0
        %v1895 = vpop.f32.mrb[0].mxu0
        %v1896 = vadd.f32 0.0, %v1895
        %v1897 = vpop.f32.mrb[0].mxu0
        %1898 = vmatprep.mubr.bf16.mxu0 0
        %1899 = vmatmul.mubr.bf16.gmra.mrb[0].mxu0 %v1838
        %v1900 = vpop.f32.mrb[0].mxu0
        %v1901 = vadd.f32 0.0, %v1900
        %v1902 = vpop.f32.mrb[0].mxu0
        %v1903 = vpop.f32.mrb[0].mxu0
        %v1904 = vadd.f32 0.0, %v1903
        %v1905 = vpop.f32.mrb[0].mxu0
        %1906 = vmatprep.mubr.bf16.mxu0 0
        %1907 = vmatmul.mubr.bf16.gmra.mrb[0].mxu0 %v1841
        %v1908 = vpop.f32.mrb[0].mxu0
        %v1909 = vadd.f32 0.0, %v1908
        %v1910 = vpop.f32.mrb[0].mxu0
        %v1911 = vpop.f32.mrb[0].mxu0
        %v1912 = vadd.f32 0.0, %v1911
        %v1913 = vpop.f32.mrb[0].mxu0
        %1914 = vmatprep.mubr.bf16.mxu0 0
        %1915 = vmatmul.mubr.bf16.gmra.mrb[0].mxu0 %v1844
        %v1916 = vpop.f32.mrb[0].mxu0
        %v1917 = vadd.f32 0.0, %v1916
        %v1918 = vpop.f32.mrb[0].mxu0
        %v1919 = vpop.f32.mrb[0].mxu0
        %v1920 = vadd.f32 0.0, %v1919
        %v1921 = vpop.f32.mrb[0].mxu0
        %1922 = vmatprep.mubr.bf16.mxu0 0
        %1923 = vmatmul.mubr.bf16.gmra.mrb[0].mxu0 %v1847
        %v1924 = vpop.f32.mrb[0].mxu0
        %v1925 = vadd.f32 0.0, %v1924
        %v1926 = vpop.f32.mrb[0].mxu0
        %v1927 = vpop.f32.mrb[0].mxu0
        %v1928 = vadd.f32 0.0, %v1927
        %v1929 = vpop.f32.mrb[0].mxu0
        %1930 = vmatprep.mubr.bf16.mxu0 0
        %1931 = vmatmul.mubr.bf16.gmra.mrb[0].mxu0 %v1850
        %v1932 = vpop.f32.mrb[0].mxu0
        %v1933 = vadd.f32 0.0, %v1932
        %v1934 = vpop.f32.mrb[0].mxu0
        %v1935 = vpop.f32.mrb[0].mxu0
        %v1936 = vadd.f32 0.0, %v1935
        %v1937 = vpop.f32.mrb[0].mxu0
        %1938 = vmatprep.mubr.bf16.mxu0 0
        %1939 = vmatmul.mubr.bf16.gmra.mrb[0].mxu0 %v1853
        %v1940 = vpop.f32.mrb[0].mxu0
        %v1941 = vadd.f32 0.0, %v1940
        %v1942 = vpop.f32.mrb[0].mxu0
        %v1943 = vpop.f32.mrb[0].mxu0
        %v1944 = vadd.f32 0.0, %v1943
        %v1945 = vpop.f32.mrb[0].mxu0
        %1946 = vmatprep.mubr.bf16.mxu0 0
        %1947 = vmatmul.mubr.bf16.gmra.mrb[0].mxu0 %v1856
        %v1948 = vpop.f32.mrb[0].mxu0
        %v1949 = vadd.f32 0.0, %v1948
        %v1950 = vpop.f32.mrb[0].mxu0
        %v1951 = vpop.f32.mrb[0].mxu0
        %v1952 = vadd.f32 0.0, %v1951
        %v1953 = vpop.f32.mrb[0].mxu0
        %1954 = vdwg.mxu0
        %1955 = vmax.xlane.f32.xlu0 %v1893
        %v1956 = vpop.xlane.xlu0 %1955
        %1957 = vmax.xlane.f32.xlu0 %v1896
        %v1958 = vpop.xlane.xlu0 %1957
        %1959 = vmax.xlane.f32.xlu0 %v1901
        %v1960 = vpop.xlane.xlu0 %1959
        %1961 = vmax.xlane.f32.xlu0 %v1904
        %v1962 = vpop.xlane.xlu0 %1961
        %1963 = vmax.xlane.f32.xlu0 %v1909
        %v1964 = vpop.xlane.xlu0 %1963
        %1965 = vmax.xlane.f32.xlu0 %v1912
        %v1966 = vpop.xlane.xlu0 %1965
        %1967 = vmax.xlane.f32.xlu0 %v1917
        %v1968 = vpop.xlane.xlu0 %1967
        %1969 = vmax.xlane.f32.xlu0 %v1920
        %v1970 = vpop.xlane.xlu0 %1969
        %1971 = vmax.xlane.f32.xlu0 %v1925
        %v1972 = vpop.xlane.xlu0 %1971
        %1973 = vmax.xlane.f32.xlu0 %v1928
        %v1974 = vpop.xlane.xlu0 %1973
        %1975 = vmax.xlane.f32.xlu0 %v1933
        %v1976 = vpop.xlane.xlu0 %1975
        %1977 = vmax.xlane.f32.xlu0 %v1936
        %v1978 = vpop.xlane.xlu0 %1977
        %1979 = vmax.xlane.f32.xlu0 %v1941
        %v1980 = vpop.xlane.xlu0 %1979
        %1981 = vmax.xlane.f32.xlu0 %v1944
        %v1982 = vpop.xlane.xlu0 %1981
        %1983 = vmax.xlane.f32.xlu0 %v1949
        %v1984 = vpop.xlane.xlu0 %1983
        %1985 = vmax.xlane.f32.xlu0 %v1952
        %v1986 = vpop.xlane.xlu0 %1985
        %v1987 = vsub.f32 %v1893, %v1956
        %v1988 = vsub.f32 %v1896, %v1958
        %v1989 = vsub.f32 %v1901, %v1960
        %v1990 = vsub.f32 %v1904, %v1962
        %v1991 = vsub.f32 %v1909, %v1964
        %v1992 = vsub.f32 %v1912, %v1966
        %v1993 = vsub.f32 %v1917, %v1968
        %v1994 = vsub.f32 %v1920, %v1970
        %v1995 = vsub.f32 %v1925, %v1972
        %v1996 = vsub.f32 %v1928, %v1974
        %v1997 = vsub.f32 %v1933, %v1976
        %v1998 = vsub.f32 %v1936, %v1978
        %v1999 = vsub.f32 %v1941, %v1980
        %v2000 = vsub.f32 %v1944, %v1982
        %v2001 = vsub.f32 %v1949, %v1984
        %v2002 = vsub.f32 %v1952, %v1986
        %v2003 = vmul.f32 %v1987, 1.442695
        %v2004 = vpow.pop %v2003
        %v2005 = vmul.f32 %v1988, 1.442695
        %v2006 = vpow.pop %v2005
        %v2007 = vmul.f32 %v1989, 1.442695
        %v2008 = vpow.pop %v2007
        %v2009 = vmul.f32 %v1990, 1.442695
        %v2010 = vpow.pop %v2009
        %v2011 = vmul.f32 %v1991, 1.442695
        %v2012 = vpow.pop %v2011
        %v2013 = vmul.f32 %v1992, 1.442695
        %v2014 = vpow.pop %v2013
        %v2015 = vmul.f32 %v1993, 1.442695
        %v2016 = vpow.pop %v2015
        %v2017 = vmul.f32 %v1994, 1.442695
        %v2018 = vpow.pop %v2017
        %v2019 = vmul.f32 %v1995, 1.442695
        %v2020 = vpow.pop %v2019
        %v2021 = vmul.f32 %v1996, 1.442695
        %v2022 = vpow.pop %v2021
        %v2023 = vmul.f32 %v1997, 1.442695
        %v2024 = vpow.pop %v2023
        %v2025 = vmul.f32 %v1998, 1.442695
        %v2026 = vpow.pop %v2025
        %v2027 = vmul.f32 %v1999, 1.442695
        %v2028 = vpow.pop %v2027
        %v2029 = vmul.f32 %v2000, 1.442695
        %v2030 = vpow.pop %v2029
        %v2031 = vmul.f32 %v2001, 1.442695
        %v2032 = vpow.pop %v2031
        %v2033 = vmul.f32 %v2002, 1.442695
        %v2034 = vpow.pop %v2033
        %2035 = vadd.xlane.f32.xlu0 %v2004
        %v2036 = vpop.xlane.xlu0 %2035
        %2037 = vadd.xlane.f32.xlu0 %v2006
        %v2038 = vpop.xlane.xlu0 %2037
        %2039 = vadd.xlane.f32.xlu0 %v2008
        %v2040 = vpop.xlane.xlu0 %2039
        %2041 = vadd.xlane.f32.xlu0 %v2010
        %v2042 = vpop.xlane.xlu0 %2041
        %2043 = vadd.xlane.f32.xlu0 %v2012
        %v2044 = vpop.xlane.xlu0 %2043
        %2045 = vadd.xlane.f32.xlu0 %v2014
        %v2046 = vpop.xlane.xlu0 %2045
        %2047 = vadd.xlane.f32.xlu0 %v2016
        %v2048 = vpop.xlane.xlu0 %2047
        %2049 = vadd.xlane.f32.xlu0 %v2018
        %v2050 = vpop.xlane.xlu0 %2049
        %2051 = vadd.xlane.f32.xlu0 %v2020
        %v2052 = vpop.xlane.xlu0 %2051
        %2053 = vadd.xlane.f32.xlu0 %v2022
        %v2054 = vpop.xlane.xlu0 %2053
        %2055 = vadd.xlane.f32.xlu0 %v2024
        %v2056 = vpop.xlane.xlu0 %2055
        %2057 = vadd.xlane.f32.xlu0 %v2026
        %v2058 = vpop.xlane.xlu0 %2057
        %2059 = vadd.xlane.f32.xlu0 %v2028
        %v2060 = vpop.xlane.xlu0 %2059
        %2061 = vadd.xlane.f32.xlu0 %v2030
        %v2062 = vpop.xlane.xlu0 %2061
        %2063 = vadd.xlane.f32.xlu0 %v2032
        %v2064 = vpop.xlane.xlu0 %2063
        %2065 = vadd.xlane.f32.xlu0 %v2034
        %v2066 = vpop.xlane.xlu0 %2065
        %v2067 = vrcp.pop %v2036
        %v2068 = vrcp.pop %v2038
        %v2069 = vrcp.pop %v2040
        %v2070 = vrcp.pop %v2042
        %v2071 = vrcp.pop %v2044
        %v2072 = vrcp.pop %v2046
        %v2073 = vrcp.pop %v2048
        %v2074 = vrcp.pop %v2050
        %v2075 = vrcp.pop %v2052
        %v2076 = vrcp.pop %v2054
        %v2077 = vrcp.pop %v2056
        %v2078 = vrcp.pop %v2058
        %v2079 = vrcp.pop %v2060
        %v2080 = vrcp.pop %v2062
        %v2081 = vrcp.pop %v2064
        %v2082 = vrcp.pop %v2066
        %v2083 = vmul.f32 %v2004, %v2067
        %v2084 = vmul.f32 %v2006, %v2068
        %v2085 = vmul.f32 %v2008, %v2069
        %v2086 = vmul.f32 %v2010, %v2070
        %v2087 = vmul.f32 %v2012, %v2071
        %v2088 = vmul.f32 %v2014, %v2072
        %v2089 = vmul.f32 %v2016, %v2073
        %v2090 = vmul.f32 %v2018, %v2074
        %v2091 = vmul.f32 %v2020, %v2075
        %v2092 = vmul.f32 %v2022, %v2076
        %v2093 = vmul.f32 %v2024, %v2077
        %v2094 = vmul.f32 %v2026, %v2078
        %v2095 = vmul.f32 %v2028, %v2079
        %v2096 = vmul.f32 %v2030, %v2080
        %v2097 = vmul.f32 %v2032, %v2081
        %v2098 = vmul.f32 %v2034, %v2082
        %v2099 = vadd.f32 %v2083, %v2084
        %v2100 = vadd.f32 %v2099, %v2085
        %v2101 = vadd.f32 %v2100, %v2086
        %v2102 = vadd.f32 %v2101, %v2087
        %v2103 = vadd.f32 %v2102, %v2088
        %v2104 = vadd.f32 %v2103, %v2089
        %v2105 = vadd.f32 %v2104, %v2090
        %v2106 = vadd.f32 %v2105, %v2091
        %v2107 = vadd.f32 %v2106, %v2092
        %v2108 = vadd.f32 %v2107, %v2093
        %v2109 = vadd.f32 %v2108, %v2094
        %v2110 = vadd.f32 %v2109, %v2095
        %v2111 = vadd.f32 %v2110, %v2096
        %v2112 = vadd.f32 %v2111, %v2097
        %v2113 = vadd.f32 %v2112, %v2098
        %v2114 = vrot.slane %v2113, 4
        %v2115 = vadd.f32 %v2113, %v2114
        %v2116 = vrot.slane %v2115, 2
        %v2117 = vadd.f32 %v2115, %v2116
        %v2118 = vrot.slane %v2117, 1
        %v2119 = vadd.f32 %v2117, %v2118
        %v2120 = vadd.f32 %v2119, 1e-09
        %v2121 = vrcp.pop %v2120
        %v2122 = vmul.f32 %v2083, %v2121
        %v2123 = vmul.f32 %v2084, %v2121
        %v2124 = vmul.f32 %v2085, %v2121
        %v2125 = vmul.f32 %v2086, %v2121
        %v2126 = vmul.f32 %v2087, %v2121
        %v2127 = vmul.f32 %v2088, %v2121
        %v2128 = vmul.f32 %v2089, %v2121
        %v2129 = vmul.f32 %v2090, %v2121
        %v2130 = vmul.f32 %v2091, %v2121
        %v2131 = vmul.f32 %v2092, %v2121
        %v2132 = vmul.f32 %v2093, %v2121
        %v2133 = vmul.f32 %v2094, %v2121
        %v2134 = vmul.f32 %v2095, %v2121
        %v2135 = vmul.f32 %v2096, %v2121
        %v2136 = vmul.f32 %v2097, %v2121
        %v2137 = vmul.f32 %v2098, %v2121
        %v2138 = vpack.c.bf16 %v1811, %v1810
        %v2139 = vpack.c.bf16 %v1813, %v1812
        %v2140 = vpack.c.bf16 %v1815, %v1814
        %v2141 = vpack.c.bf16 %v1817, %v1816
        %v2142 = vpack.c.bf16 %v2123, %v2122
        %v2143 = vpack.c.bf16 %v2125, %v2124
        %v2144 = vpack.c.bf16 %v2127, %v2126
        %v2145 = vpack.c.bf16 %v2129, %v2128
        %v2146 = vpack.c.bf16 %v2131, %v2130
        %v2147 = vpack.c.bf16 %v2133, %v2132
        %v2148 = vpack.c.bf16 %v2135, %v2134
        %v2149 = vpack.c.bf16 %v2137, %v2136
        %2150 = vmatprep.subr.bf16.mxu0 0
        %2151 = vmatpush1.bf16.msra.mxu0 %v2142
        %2152 = vmatprep.subr.bf16.mxu0 0
        %2153 = vmatpush1.bf16.msra.mxu0 %v2143
        %2154 = vmatprep.subr.bf16.mxu0 0
        %2155 = vmatpush1.bf16.msra.mxu0 %v2144
        %2156 = vmatprep.subr.bf16.mxu0 0
        %2157 = vmatpush1.bf16.msra.mxu0 %v2145
        %2158 = vmatprep.subr.bf16.mxu0 0
        %2159 = vmatpush1.bf16.msra.mxu0 %v2146
        %2160 = vmatprep.subr.bf16.mxu0 0
        %2161 = vmatpush1.bf16.msra.mxu0 %v2147
        %2162 = vmatprep.subr.bf16.mxu0 0
        %2163 = vmatpush1.bf16.msra.mxu0 %v2148
        %2164 = vmatprep.subr.bf16.mxu0 0
        %2165 = vmatpush1.bf16.msra.mxu0 %v2149
        %2166 = vmatprep.subr.bf16.mxu0 0
        %2167 = vmatpush1.bf16.msra.mxu0 0
        %2168 = vmatprep.subr.bf16.mxu0 0
        %2169 = vmatpush1.bf16.msra.mxu0 0
        %2170 = vmatprep.subr.bf16.mxu0 0
        %2171 = vmatpush1.bf16.msra.mxu0 0
        %2172 = vmatprep.subr.bf16.mxu0 0
        %2173 = vmatpush1.bf16.msra.mxu0 0
        %2174 = vmatprep.subr.bf16.mxu0 0
        %2175 = vmatpush1.bf16.msra.mxu0 0
        %2176 = vmatprep.subr.bf16.mxu0 0
        %2177 = vmatpush1.bf16.msra.mxu0 0
        %2178 = vmatprep.subr.bf16.mxu0 0
        %2179 = vmatpush1.bf16.msra.mxu0 0
        %2180 = vmatprep.subr.bf16.mxu0 0
        %2181 = vmatpush1.bf16.msra.mxu0 0
        %2182 = vmatprep.mubr.bf16.mxu0 0
        %2183 = vmatmul.mubr.bf16.gmra.mrb[0].mxu0 %v2138
        %v2184 = vpop.f32.mrb[0].mxu0
        %v2185 = vadd.f32 0.0, %v2184
        %v2186 = vpop.f32.mrb[0].mxu0
        %v2187 = vpop.f32.mrb[0].mxu0
        %v2188 = vadd.f32 0.0, %v2187
        %v2189 = vpop.f32.mrb[0].mxu0
        %2190 = vmatprep.mubr.bf16.mxu0 0
        %2191 = vmatmul.mubr.bf16.gmra.mrb[0].mxu0 %v2139
        %v2192 = vpop.f32.mrb[0].mxu0
        %v2193 = vadd.f32 0.0, %v2192
        %v2194 = vpop.f32.mrb[0].mxu0
        %v2195 = vpop.f32.mrb[0].mxu0
        %v2196 = vadd.f32 0.0, %v2195
        %v2197 = vpop.f32.mrb[0].mxu0
        %2198 = vmatprep.mubr.bf16.mxu0 0
        %2199 = vmatmul.mubr.bf16.gmra.mrb[0].mxu0 %v2140
        %v2200 = vpop.f32.mrb[0].mxu0
        %v2201 = vadd.f32 0.0, %v2200
        %v2202 = vpop.f32.mrb[0].mxu0
        %v2203 = vpop.f32.mrb[0].mxu0
        %v2204 = vadd.f32 0.0, %v2203
        %v2205 = vpop.f32.mrb[0].mxu0
        %2206 = vmatprep.mubr.bf16.mxu0 0
        %2207 = vmatmul.mubr.bf16.gmra.mrb[0].mxu0 %v2141
        %v2208 = vpop.f32.mrb[0].mxu0
        %v2209 = vadd.f32 0.0, %v2208
        %v2210 = vpop.f32.mrb[0].mxu0
        %v2211 = vpop.f32.mrb[0].mxu0
        %v2212 = vadd.f32 0.0, %v2211
        %v2213 = vpop.f32.mrb[0].mxu0
        %2214 = vdwg.mxu0
        %v2215 = vsub.f32 %v1724, %v2185
        %v2216 = vsub.f32 %v1725, %v2188
        %v2217 = vsub.f32 %v1726, %v2193
        %v2218 = vsub.f32 %v1727, %v2196
        %v2219 = vsub.f32 %v1728, %v2201
        %v2220 = vsub.f32 %v1729, %v2204
        %v2221 = vsub.f32 %v1730, %v2209
        %v2222 = vsub.f32 %v1731, %v2212
        %v2223 = vpack.c.bf16 %v2216, %v2215
        %v2224 = vpack.c.bf16 %v2218, %v2217
        %v2225 = vpack.c.bf16 %v2220, %v2219
        %v2226 = vpack.c.bf16 %v2222, %v2221
        %2227 = vmatprep.subr.bf16.mxu0 0
        %2228 = vmatpush1.bf16.msra.mxu0 %v2223
        %2229 = vmatprep.subr.bf16.mxu0 0
        %2230 = vmatpush1.bf16.msra.mxu0 %v2224
        %2231 = vmatprep.subr.bf16.mxu0 0
        %2232 = vmatpush1.bf16.msra.mxu0 %v2225
        %2233 = vmatprep.subr.bf16.mxu0 0
        %2234 = vmatpush1.bf16.msra.mxu0 %v2226
        %2235 = vmatprep.subr.bf16.mxu0 0
        %2236 = vmatpush1.bf16.msra.mxu0 0
        %2237 = vmatprep.subr.bf16.mxu0 0
        %2238 = vmatpush1.bf16.msra.mxu0 0
        %2239 = vmatprep.subr.bf16.mxu0 0
        %2240 = vmatpush1.bf16.msra.mxu0 0
        %2241 = vmatprep.subr.bf16.mxu0 0
        %2242 = vmatpush1.bf16.msra.mxu0 0
        %2243 = vmatprep.subr.bf16.mxu0 0
        %2244 = vmatpush1.bf16.msra.mxu0 0
        %2245 = vmatprep.subr.bf16.mxu0 0
        %2246 = vmatpush1.bf16.msra.mxu0 0
        %2247 = vmatprep.subr.bf16.mxu0 0
        %2248 = vmatpush1.bf16.msra.mxu0 0
        %2249 = vmatprep.subr.bf16.mxu0 0
        %2250 = vmatpush1.bf16.msra.mxu0 0
        %2251 = vmatprep.subr.bf16.mxu0 0
        %2252 = vmatpush1.bf16.msra.mxu0 0
        %2253 = vmatprep.subr.bf16.mxu0 0
        %2254 = vmatpush1.bf16.msra.mxu0 0
        %2255 = vmatprep.subr.bf16.mxu0 0
        %2256 = vmatpush1.bf16.msra.mxu0 0
        %2257 = vmatprep.subr.bf16.mxu0 0
        %2258 = vmatpush1.bf16.msra.mxu0 0
        %2259 = vmatprep.mubr.bf16.mxu0 0
        %2260 = vmatmul.mubr.bf16.gmra.mrb[0].mxu0 %v965
        %v2261 = vpop.f32.mrb[0].mxu0
        %v2262 = vadd.f32 %v907, %v2261
        %v2263 = vpop.f32.mrb[0].mxu0
        %v2264 = vpop.f32.mrb[0].mxu0
        %v2265 = vadd.f32 %v912, %v2264
        %v2266 = vpop.f32.mrb[0].mxu0
        %2267 = vmatprep.mubr.bf16.mxu0 0
        %2268 = vmatmul.mubr.bf16.gmra.mrb[0].mxu0 %v968
        %v2269 = vpop.f32.mrb[0].mxu0
        %v2270 = vadd.f32 %v917, %v2269
        %v2271 = vpop.f32.mrb[0].mxu0
        %v2272 = vpop.f32.mrb[0].mxu0
        %v2273 = vadd.f32 %v922, %v2272
        %v2274 = vpop.f32.mrb[0].mxu0
        %2275 = vmatprep.mubr.bf16.mxu0 0
        %2276 = vmatmul.mubr.bf16.gmra.mrb[0].mxu0 %v971
        %v2277 = vpop.f32.mrb[0].mxu0
        %v2278 = vadd.f32 %v927, %v2277
        %v2279 = vpop.f32.mrb[0].mxu0
        %v2280 = vpop.f32.mrb[0].mxu0
        %v2281 = vadd.f32 %v932, %v2280
        %v2282 = vpop.f32.mrb[0].mxu0
        %2283 = vmatprep.mubr.bf16.mxu0 0
        %2284 = vmatmul.mubr.bf16.gmra.mrb[0].mxu0 %v974
        %v2285 = vpop.f32.mrb[0].mxu0
        %v2286 = vadd.f32 %v937, %v2285
        %v2287 = vpop.f32.mrb[0].mxu0
        %v2288 = vpop.f32.mrb[0].mxu0
        %v2289 = vadd.f32 %v942, %v2288
        %v2290 = vpop.f32.mrb[0].mxu0
        %2291 = vdwg.mxu0
        %s2292 = scalar_lea.vmem %s271, 128 [#allocation5]
        %2293 = vst [vmem:[%s2292] sm:$0xff] %v2262
        %2294 = vst [vmem:[%s2292 + $0x8] sm:$0xff] %v2265
        %2295 = vst [vmem:[%s2292 + $0x10] sm:$0xff] %v2270
        %2296 = vst [vmem:[%s2292 + $0x18] sm:$0xff] %v2273
        %2297 = vst [vmem:[%s2292 + $0x20] sm:$0xff] %v2278
        %2298 = vst [vmem:[%s2292 + $0x28] sm:$0xff] %v2281
        %2299 = vst [vmem:[%s2292 + $0x30] sm:$0xff] %v2286
        %2300 = vst [vmem:[%s2292 + $0x38] sm:$0xff] %v2289
        %2301 = vadd.xlane.f32.xlu0 %v2262
        %v2302 = vpop.xlane.xlu0 %2301
        %2303 = vadd.xlane.f32.xlu0 %v2265
        %v2304 = vpop.xlane.xlu0 %2303
        %2305 = vadd.xlane.f32.xlu0 %v2270
        %v2306 = vpop.xlane.xlu0 %2305
        %2307 = vadd.xlane.f32.xlu0 %v2273
        %v2308 = vpop.xlane.xlu0 %2307
        %2309 = vadd.xlane.f32.xlu0 %v2278
        %v2310 = vpop.xlane.xlu0 %2309
        %2311 = vadd.xlane.f32.xlu0 %v2281
        %v2312 = vpop.xlane.xlu0 %2311
        %2313 = vadd.xlane.f32.xlu0 %v2286
        %v2314 = vpop.xlane.xlu0 %2313
        %2315 = vadd.xlane.f32.xlu0 %v2289
        %v2316 = vpop.xlane.xlu0 %2315
        %v2317 = vmul.f32 %v2262, %v2262
        %v2318 = vmul.f32 %v2265, %v2265
        %v2319 = vmul.f32 %v2270, %v2270
        %v2320 = vmul.f32 %v2273, %v2273
        %v2321 = vmul.f32 %v2278, %v2278
        %v2322 = vmul.f32 %v2281, %v2281
        %v2323 = vmul.f32 %v2286, %v2286
        %v2324 = vmul.f32 %v2289, %v2289
        %2325 = vadd.xlane.f32.xlu0 %v2317
        %v2326 = vpop.xlane.xlu0 %2325
        %2327 = vadd.xlane.f32.xlu0 %v2318
        %v2328 = vpop.xlane.xlu0 %2327
        %2329 = vadd.xlane.f32.xlu0 %v2319
        %v2330 = vpop.xlane.xlu0 %2329
        %2331 = vadd.xlane.f32.xlu0 %v2320
        %v2332 = vpop.xlane.xlu0 %2331
        %2333 = vadd.xlane.f32.xlu0 %v2321
        %v2334 = vpop.xlane.xlu0 %2333
        %2335 = vadd.xlane.f32.xlu0 %v2322
        %v2336 = vpop.xlane.xlu0 %2335
        %2337 = vadd.xlane.f32.xlu0 %v2323
        %v2338 = vpop.xlane.xlu0 %2337
        %2339 = vadd.xlane.f32.xlu0 %v2324
        %v2340 = vpop.xlane.xlu0 %2339
        %v2341 = vadd.f32 %v1707, %v2302
        %v2342 = vadd.f32 %v1708, %v2304
        %v2343 = vadd.f32 %v1709, %v2306
        %v2344 = vadd.f32 %v1710, %v2308
        %v2345 = vadd.f32 %v1711, %v2310
        %v2346 = vadd.f32 %v1712, %v2312
        %v2347 = vadd.f32 %v1713, %v2314
        %v2348 = vadd.f32 %v1714, %v2316
        %v2349 = vadd.f32 %v1715, %v2326
        %v2350 = vadd.f32 %v1716, %v2328
        %v2351 = vadd.f32 %v1717, %v2330
        %v2352 = vadd.f32 %v1718, %v2332
        %v2353 = vadd.f32 %v1719, %v2334
        %v2354 = vadd.f32 %v1720, %v2336
        %v2355 = vadd.f32 %v1721, %v2338
        %v2356 = vadd.f32 %v1722, %v2340
        %s2357 = scalar_lea.vmem %s245, 192 [#allocation2]
        %v2358 = vld [vmem:[%s2357] sm:$0xff]
        %v2359 = vld [vmem:[%s2357 + $0x8] sm:$0xff]
        %v2360 = vld [vmem:[%s2357 + $0x10] sm:$0xff]
        %v2361 = vld [vmem:[%s2357 + $0x18] sm:$0xff]
        %v2362 = vld [vmem:[%s2357 + $0x20] sm:$0xff]
        %v2363 = vld [vmem:[%s2357 + $0x28] sm:$0xff]
        %v2364 = vld [vmem:[%s2357 + $0x30] sm:$0xff]
        %v2365 = vld [vmem:[%s2357 + $0x38] sm:$0xff]
        %v2366 = vpack.c.bf16 %v2359, %v2358
        %v2367 = vpack.c.bf16 %v2361, %v2360
        %v2368 = vpack.c.bf16 %v2363, %v2362
        %v2369 = vpack.c.bf16 %v2365, %v2364
        %2370 = vmatprep.subr.bf16.mxu0 0
        %2371 = vmatpush1.bf16.msra.mxu0 %v2366
        %2372 = vmatprep.subr.bf16.mxu0 0
        %2373 = vmatpush1.bf16.msra.mxu0 %v2367
        %2374 = vmatprep.subr.bf16.mxu0 0
        %2375 = vmatpush1.bf16.msra.mxu0 %v2368
        %2376 = vmatprep.subr.bf16.mxu0 0
        %2377 = vmatpush1.bf16.msra.mxu0 %v2369
        %2378 = vmatprep.subr.bf16.mxu0 0
        %2379 = vmatpush1.bf16.msra.mxu0 0
        %2380 = vmatprep.subr.bf16.mxu0 0
        %2381 = vmatpush1.bf16.msra.mxu0 0
        %2382 = vmatprep.subr.bf16.mxu0 0
        %2383 = vmatpush1.bf16.msra.mxu0 0
        %2384 = vmatprep.subr.bf16.mxu0 0
        %2385 = vmatpush1.bf16.msra.mxu0 0
        %2386 = vmatprep.subr.bf16.mxu0 0
        %2387 = vmatpush1.bf16.msra.mxu0 0
        %2388 = vmatprep.subr.bf16.mxu0 0
        %2389 = vmatpush1.bf16.msra.mxu0 0
        %2390 = vmatprep.subr.bf16.mxu0 0
        %2391 = vmatpush1.bf16.msra.mxu0 0
        %2392 = vmatprep.subr.bf16.mxu0 0
        %2393 = vmatpush1.bf16.msra.mxu0 0
        %2394 = vmatprep.subr.bf16.mxu0 0
        %2395 = vmatpush1.bf16.msra.mxu0 0
        %2396 = vmatprep.subr.bf16.mxu0 0
        %2397 = vmatpush1.bf16.msra.mxu0 0
        %2398 = vmatprep.subr.bf16.mxu0 0
        %2399 = vmatpush1.bf16.msra.mxu0 0
        %2400 = vmatprep.subr.bf16.mxu0 0
        %2401 = vmatpush1.bf16.msra.mxu0 0
        %2402 = vmatprep.mubr.bf16.mxu0 0
        %2403 = vmatmul.mubr.bf16.gmra.mrb[0].mxu0 %v358
        %v2404 = vpop.f32.mrb[0].mxu0
        %v2405 = vadd.f32 0.0, %v2404
        %v2406 = vpop.f32.mrb[0].mxu0
        %v2407 = vpop.f32.mrb[0].mxu0
        %v2408 = vadd.f32 0.0, %v2407
        %v2409 = vpop.f32.mrb[0].mxu0
        %2410 = vmatprep.mubr.bf16.mxu0 0
        %2411 = vmatmul.mubr.bf16.gmra.mrb[0].mxu0 %v361
        %v2412 = vpop.f32.mrb[0].mxu0
        %v2413 = vadd.f32 0.0, %v2412
        %v2414 = vpop.f32.mrb[0].mxu0
        %v2415 = vpop.f32.mrb[0].mxu0
        %v2416 = vadd.f32 0.0, %v2415
        %v2417 = vpop.f32.mrb[0].mxu0
        %2418 = vmatprep.mubr.bf16.mxu0 0
        %2419 = vmatmul.mubr.bf16.gmra.mrb[0].mxu0 %v364
        %v2420 = vpop.f32.mrb[0].mxu0
        %v2421 = vadd.f32 0.0, %v2420
        %v2422 = vpop.f32.mrb[0].mxu0
        %v2423 = vpop.f32.mrb[0].mxu0
        %v2424 = vadd.f32 0.0, %v2423
        %v2425 = vpop.f32.mrb[0].mxu0
        %2426 = vmatprep.mubr.bf16.mxu0 0
        %2427 = vmatmul.mubr.bf16.gmra.mrb[0].mxu0 %v367
        %v2428 = vpop.f32.mrb[0].mxu0
        %v2429 = vadd.f32 0.0, %v2428
        %v2430 = vpop.f32.mrb[0].mxu0
        %v2431 = vpop.f32.mrb[0].mxu0
        %v2432 = vadd.f32 0.0, %v2431
        %v2433 = vpop.f32.mrb[0].mxu0
        %2434 = vmatprep.mubr.bf16.mxu0 0
        %2435 = vmatmul.mubr.bf16.gmra.mrb[0].mxu0 %v370
        %v2436 = vpop.f32.mrb[0].mxu0
        %v2437 = vadd.f32 0.0, %v2436
        %v2438 = vpop.f32.mrb[0].mxu0
        %v2439 = vpop.f32.mrb[0].mxu0
        %v2440 = vadd.f32 0.0, %v2439
        %v2441 = vpop.f32.mrb[0].mxu0
        %2442 = vdwg.mxu0
        %v2443 = vpack.c.bf16 %v2408, %v2405
        %v2444 = vadd.f32 %v2413, %v449
        %v2445 = vadd.f32 %v2416, %v454
        %v2446 = vadd.f32 %v2421, %v459
        %v2447 = vadd.f32 %v2424, %v464
        %v2448 = vadd.f32 %v2429, %v469
        %v2449 = vadd.f32 %v2432, %v474
        %v2450 = vadd.f32 %v2437, %v479
        %v2451 = vadd.f32 %v2440, %v484
        %2452 = vxpose.xlu0.c.b16.start [1/8] %v2443, 128
        %2453 = vxpose.xlu0.c.b16.cont [2/8] 0, 128
        %2454 = vxpose.xlu0.c.b16.cont [3/8] 0, 128
        %2455 = vxpose.xlu0.c.b16.cont [4/8] 0, 128
        %2456 = vxpose.xlu0.c.b16.cont [5/8] 0, 128
        %2457 = vxpose.xlu0.c.b16.cont [6/8] 0, 128
        %2458 = vxpose.xlu0.c.b16.cont [7/8] 0, 128
        %2459 = vxpose.xlu0.c.b16.end [8/8] 0, 128
        %v2460 = vpop.trf.xlu0
        %v2461 = vpop.trf.xlu0
        %v2462 = vpop.trf.xlu0
        %v2463 = vpop.trf.xlu0
        %v2464 = vpop.trf.xlu0
        %v2465 = vpop.trf.xlu0
        %v2466 = vpop.trf.xlu0
        %v2467 = vpop.trf.xlu0
        %v2469 = vsel %vm510, %v2460, 0
        %v2472 = vsel %vm510, %v2461, 0
        %v2475 = vsel %vm510, %v2462, 0
        %v2478 = vsel %vm510, %v2463, 0
        %v2481 = vsel %vm510, %v2464, 0
        %v2484 = vsel %vm510, %v2465, 0
        %v2487 = vsel %vm510, %v2466, 0
        %v2490 = vsel %vm510, %v2467, 0
        %2492 = vmatprep.subr.bf16.mxu0 0
        %2493 = vmatpush1.bf16.msra.mxu0 %v2443
        %2494 = vmatprep.subr.bf16.mxu0 0
        %2495 = vmatpush1.bf16.msra.mxu0 0
        %2496 = vmatprep.subr.bf16.mxu0 0
        %2497 = vmatpush1.bf16.msra.mxu0 0
        %2498 = vmatprep.subr.bf16.mxu0 0
        %2499 = vmatpush1.bf16.msra.mxu0 0
        %2500 = vmatprep.subr.bf16.mxu0 0
        %2501 = vmatpush1.bf16.msra.mxu0 0
        %2502 = vmatprep.subr.bf16.mxu0 0
        %2503 = vmatpush1.bf16.msra.mxu0 0
        %2504 = vmatprep.subr.bf16.mxu0 0
        %2505 = vmatpush1.bf16.msra.mxu0 0
        %2506 = vmatprep.subr.bf16.mxu0 0
        %2507 = vmatpush1.bf16.msra.mxu0 0
        %2508 = vmatprep.subr.bf16.mxu0 0
        %2509 = vmatpush1.bf16.msra.mxu0 0
        %2510 = vmatprep.subr.bf16.mxu0 0
        %2511 = vmatpush1.bf16.msra.mxu0 0
        %2512 = vmatprep.subr.bf16.mxu0 0
        %2513 = vmatpush1.bf16.msra.mxu0 0
        %2514 = vmatprep.subr.bf16.mxu0 0
        %2515 = vmatpush1.bf16.msra.mxu0 0
        %2516 = vmatprep.subr.bf16.mxu0 0
        %2517 = vmatpush1.bf16.msra.mxu0 0
        %2518 = vmatprep.subr.bf16.mxu0 0
        %2519 = vmatpush1.bf16.msra.mxu0 0
        %2520 = vmatprep.subr.bf16.mxu0 0
        %2521 = vmatpush1.bf16.msra.mxu0 0
        %2522 = vmatprep.subr.bf16.mxu0 0
        %2523 = vmatpush1.bf16.msra.mxu0 0
        %2524 = vmatprep.mubr.bf16.mxu0 0
        %2525 = vmatmul.mubr.bf16.gmra.mrb[0].mxu0 %v2469
        %v2526 = vpop.f32.mrb[0].mxu0
        %v2527 = vadd.f32 0.0, %v2526
        %v2528 = vpop.f32.mrb[0].mxu0
        %v2529 = vpop.f32.mrb[0].mxu0
        %v2530 = vadd.f32 0.0, %v2529
        %v2531 = vpop.f32.mrb[0].mxu0
        %2532 = vmatprep.mubr.bf16.mxu0 0
        %2533 = vmatmul.mubr.bf16.gmra.mrb[0].mxu0 %v2472
        %v2534 = vpop.f32.mrb[0].mxu0
        %v2535 = vadd.f32 0.0, %v2534
        %v2536 = vpop.f32.mrb[0].mxu0
        %v2537 = vpop.f32.mrb[0].mxu0
        %v2538 = vadd.f32 0.0, %v2537
        %v2539 = vpop.f32.mrb[0].mxu0
        %2540 = vmatprep.mubr.bf16.mxu0 0
        %2541 = vmatmul.mubr.bf16.gmra.mrb[0].mxu0 %v2475
        %v2542 = vpop.f32.mrb[0].mxu0
        %v2543 = vadd.f32 0.0, %v2542
        %v2544 = vpop.f32.mrb[0].mxu0
        %v2545 = vpop.f32.mrb[0].mxu0
        %v2546 = vadd.f32 0.0, %v2545
        %v2547 = vpop.f32.mrb[0].mxu0
        %2548 = vmatprep.mubr.bf16.mxu0 0
        %2549 = vmatmul.mubr.bf16.gmra.mrb[0].mxu0 %v2478
        %v2550 = vpop.f32.mrb[0].mxu0
        %v2551 = vadd.f32 0.0, %v2550
        %v2552 = vpop.f32.mrb[0].mxu0
        %v2553 = vpop.f32.mrb[0].mxu0
        %v2554 = vadd.f32 0.0, %v2553
        %v2555 = vpop.f32.mrb[0].mxu0
        %2556 = vmatprep.mubr.bf16.mxu0 0
        %2557 = vmatmul.mubr.bf16.gmra.mrb[0].mxu0 %v2481
        %v2558 = vpop.f32.mrb[0].mxu0
        %v2559 = vadd.f32 0.0, %v2558
        %v2560 = vpop.f32.mrb[0].mxu0
        %v2561 = vpop.f32.mrb[0].mxu0
        %v2562 = vadd.f32 0.0, %v2561
        %v2563 = vpop.f32.mrb[0].mxu0
        %2564 = vmatprep.mubr.bf16.mxu0 0
        %2565 = vmatmul.mubr.bf16.gmra.mrb[0].mxu0 %v2484
        %v2566 = vpop.f32.mrb[0].mxu0
        %v2567 = vadd.f32 0.0, %v2566
        %v2568 = vpop.f32.mrb[0].mxu0
        %v2569 = vpop.f32.mrb[0].mxu0
        %v2570 = vadd.f32 0.0, %v2569
        %v2571 = vpop.f32.mrb[0].mxu0
        %2572 = vmatprep.mubr.bf16.mxu0 0
        %2573 = vmatmul.mubr.bf16.gmra.mrb[0].mxu0 %v2487
        %v2574 = vpop.f32.mrb[0].mxu0
        %v2575 = vadd.f32 0.0, %v2574
        %v2576 = vpop.f32.mrb[0].mxu0
        %v2577 = vpop.f32.mrb[0].mxu0
        %v2578 = vadd.f32 0.0, %v2577
        %v2579 = vpop.f32.mrb[0].mxu0
        %2580 = vmatprep.mubr.bf16.mxu0 0
        %2581 = vmatmul.mubr.bf16.gmra.mrb[0].mxu0 %v2490
        %v2582 = vpop.f32.mrb[0].mxu0
        %v2583 = vadd.f32 0.0, %v2582
        %v2584 = vpop.f32.mrb[0].mxu0
        %v2585 = vpop.f32.mrb[0].mxu0
        %v2586 = vadd.f32 0.0, %v2585
        %v2587 = vpop.f32.mrb[0].mxu0
        %2588 = vdwg.mxu0
        %2589 = vmax.xlane.f32.xlu0 %v2527
        %v2590 = vpop.xlane.xlu0 %2589
        %2591 = vmax.xlane.f32.xlu0 %v2530
        %v2592 = vpop.xlane.xlu0 %2591
        %2593 = vmax.xlane.f32.xlu0 %v2535
        %v2594 = vpop.xlane.xlu0 %2593
        %2595 = vmax.xlane.f32.xlu0 %v2538
        %v2596 = vpop.xlane.xlu0 %2595
        %2597 = vmax.xlane.f32.xlu0 %v2543
        %v2598 = vpop.xlane.xlu0 %2597
        %2599 = vmax.xlane.f32.xlu0 %v2546
        %v2600 = vpop.xlane.xlu0 %2599
        %2601 = vmax.xlane.f32.xlu0 %v2551
        %v2602 = vpop.xlane.xlu0 %2601
        %2603 = vmax.xlane.f32.xlu0 %v2554
        %v2604 = vpop.xlane.xlu0 %2603
        %2605 = vmax.xlane.f32.xlu0 %v2559
        %v2606 = vpop.xlane.xlu0 %2605
        %2607 = vmax.xlane.f32.xlu0 %v2562
        %v2608 = vpop.xlane.xlu0 %2607
        %2609 = vmax.xlane.f32.xlu0 %v2567
        %v2610 = vpop.xlane.xlu0 %2609
        %2611 = vmax.xlane.f32.xlu0 %v2570
        %v2612 = vpop.xlane.xlu0 %2611
        %2613 = vmax.xlane.f32.xlu0 %v2575
        %v2614 = vpop.xlane.xlu0 %2613
        %2615 = vmax.xlane.f32.xlu0 %v2578
        %v2616 = vpop.xlane.xlu0 %2615
        %2617 = vmax.xlane.f32.xlu0 %v2583
        %v2618 = vpop.xlane.xlu0 %2617
        %2619 = vmax.xlane.f32.xlu0 %v2586
        %v2620 = vpop.xlane.xlu0 %2619
        %v2621 = vsub.f32 %v2527, %v2590
        %v2622 = vsub.f32 %v2530, %v2592
        %v2623 = vsub.f32 %v2535, %v2594
        %v2624 = vsub.f32 %v2538, %v2596
        %v2625 = vsub.f32 %v2543, %v2598
        %v2626 = vsub.f32 %v2546, %v2600
        %v2627 = vsub.f32 %v2551, %v2602
        %v2628 = vsub.f32 %v2554, %v2604
        %v2629 = vsub.f32 %v2559, %v2606
        %v2630 = vsub.f32 %v2562, %v2608
        %v2631 = vsub.f32 %v2567, %v2610
        %v2632 = vsub.f32 %v2570, %v2612
        %v2633 = vsub.f32 %v2575, %v2614
        %v2634 = vsub.f32 %v2578, %v2616
        %v2635 = vsub.f32 %v2583, %v2618
        %v2636 = vsub.f32 %v2586, %v2620
        %v2637 = vmul.f32 %v2621, 1.442695
        %v2638 = vpow.pop %v2637
        %v2639 = vmul.f32 %v2622, 1.442695
        %v2640 = vpow.pop %v2639
        %v2641 = vmul.f32 %v2623, 1.442695
        %v2642 = vpow.pop %v2641
        %v2643 = vmul.f32 %v2624, 1.442695
        %v2644 = vpow.pop %v2643
        %v2645 = vmul.f32 %v2625, 1.442695
        %v2646 = vpow.pop %v2645
        %v2647 = vmul.f32 %v2626, 1.442695
        %v2648 = vpow.pop %v2647
        %v2649 = vmul.f32 %v2627, 1.442695
        %v2650 = vpow.pop %v2649
        %v2651 = vmul.f32 %v2628, 1.442695
        %v2652 = vpow.pop %v2651
        %v2653 = vmul.f32 %v2629, 1.442695
        %v2654 = vpow.pop %v2653
        %v2655 = vmul.f32 %v2630, 1.442695
        %v2656 = vpow.pop %v2655
        %v2657 = vmul.f32 %v2631, 1.442695
        %v2658 = vpow.pop %v2657
        %v2659 = vmul.f32 %v2632, 1.442695
        %v2660 = vpow.pop %v2659
        %v2661 = vmul.f32 %v2633, 1.442695
        %v2662 = vpow.pop %v2661
        %v2663 = vmul.f32 %v2634, 1.442695
        %v2664 = vpow.pop %v2663
        %v2665 = vmul.f32 %v2635, 1.442695
        %v2666 = vpow.pop %v2665
        %v2667 = vmul.f32 %v2636, 1.442695
        %v2668 = vpow.pop %v2667
        %2669 = vadd.xlane.f32.xlu0 %v2638
        %v2670 = vpop.xlane.xlu0 %2669
        %2671 = vadd.xlane.f32.xlu0 %v2640
        %v2672 = vpop.xlane.xlu0 %2671
        %2673 = vadd.xlane.f32.xlu0 %v2642
        %v2674 = vpop.xlane.xlu0 %2673
        %2675 = vadd.xlane.f32.xlu0 %v2644
        %v2676 = vpop.xlane.xlu0 %2675
        %2677 = vadd.xlane.f32.xlu0 %v2646
        %v2678 = vpop.xlane.xlu0 %2677
        %2679 = vadd.xlane.f32.xlu0 %v2648
        %v2680 = vpop.xlane.xlu0 %2679
        %2681 = vadd.xlane.f32.xlu0 %v2650
        %v2682 = vpop.xlane.xlu0 %2681
        %2683 = vadd.xlane.f32.xlu0 %v2652
        %v2684 = vpop.xlane.xlu0 %2683
        %2685 = vadd.xlane.f32.xlu0 %v2654
        %v2686 = vpop.xlane.xlu0 %2685
        %2687 = vadd.xlane.f32.xlu0 %v2656
        %v2688 = vpop.xlane.xlu0 %2687
        %2689 = vadd.xlane.f32.xlu0 %v2658
        %v2690 = vpop.xlane.xlu0 %2689
        %2691 = vadd.xlane.f32.xlu0 %v2660
        %v2692 = vpop.xlane.xlu0 %2691
        %2693 = vadd.xlane.f32.xlu0 %v2662
        %v2694 = vpop.xlane.xlu0 %2693
        %2695 = vadd.xlane.f32.xlu0 %v2664
        %v2696 = vpop.xlane.xlu0 %2695
        %2697 = vadd.xlane.f32.xlu0 %v2666
        %v2698 = vpop.xlane.xlu0 %2697
        %2699 = vadd.xlane.f32.xlu0 %v2668
        %v2700 = vpop.xlane.xlu0 %2699
        %v2701 = vrcp.pop %v2670
        %v2702 = vrcp.pop %v2672
        %v2703 = vrcp.pop %v2674
        %v2704 = vrcp.pop %v2676
        %v2705 = vrcp.pop %v2678
        %v2706 = vrcp.pop %v2680
        %v2707 = vrcp.pop %v2682
        %v2708 = vrcp.pop %v2684
        %v2709 = vrcp.pop %v2686
        %v2710 = vrcp.pop %v2688
        %v2711 = vrcp.pop %v2690
        %v2712 = vrcp.pop %v2692
        %v2713 = vrcp.pop %v2694
        %v2714 = vrcp.pop %v2696
        %v2715 = vrcp.pop %v2698
        %v2716 = vrcp.pop %v2700
        %v2717 = vmul.f32 %v2638, %v2701
        %v2718 = vmul.f32 %v2640, %v2702
        %v2719 = vmul.f32 %v2642, %v2703
        %v2720 = vmul.f32 %v2644, %v2704
        %v2721 = vmul.f32 %v2646, %v2705
        %v2722 = vmul.f32 %v2648, %v2706
        %v2723 = vmul.f32 %v2650, %v2707
        %v2724 = vmul.f32 %v2652, %v2708
        %v2725 = vmul.f32 %v2654, %v2709
        %v2726 = vmul.f32 %v2656, %v2710
        %v2727 = vmul.f32 %v2658, %v2711
        %v2728 = vmul.f32 %v2660, %v2712
        %v2729 = vmul.f32 %v2662, %v2713
        %v2730 = vmul.f32 %v2664, %v2714
        %v2731 = vmul.f32 %v2666, %v2715
        %v2732 = vmul.f32 %v2668, %v2716
        %v2733 = vadd.f32 %v2717, %v2718
        %v2734 = vadd.f32 %v2733, %v2719
        %v2735 = vadd.f32 %v2734, %v2720
        %v2736 = vadd.f32 %v2735, %v2721
        %v2737 = vadd.f32 %v2736, %v2722
        %v2738 = vadd.f32 %v2737, %v2723
        %v2739 = vadd.f32 %v2738, %v2724
        %v2740 = vadd.f32 %v2739, %v2725
        %v2741 = vadd.f32 %v2740, %v2726
        %v2742 = vadd.f32 %v2741, %v2727
        %v2743 = vadd.f32 %v2742, %v2728
        %v2744 = vadd.f32 %v2743, %v2729
        %v2745 = vadd.f32 %v2744, %v2730
        %v2746 = vadd.f32 %v2745, %v2731
        %v2747 = vadd.f32 %v2746, %v2732
        %v2748 = vrot.slane %v2747, 4
        %v2749 = vadd.f32 %v2747, %v2748
        %v2750 = vrot.slane %v2749, 2
        %v2751 = vadd.f32 %v2749, %v2750
        %v2752 = vrot.slane %v2751, 1
        %v2753 = vadd.f32 %v2751, %v2752
        %v2754 = vadd.f32 %v2753, 1e-09
        %v2755 = vrcp.pop %v2754
        %v2756 = vmul.f32 %v2717, %v2755
        %v2757 = vmul.f32 %v2718, %v2755
        %v2758 = vmul.f32 %v2719, %v2755
        %v2759 = vmul.f32 %v2720, %v2755
        %v2760 = vmul.f32 %v2721, %v2755
        %v2761 = vmul.f32 %v2722, %v2755
        %v2762 = vmul.f32 %v2723, %v2755
        %v2763 = vmul.f32 %v2724, %v2755
        %v2764 = vmul.f32 %v2725, %v2755
        %v2765 = vmul.f32 %v2726, %v2755
        %v2766 = vmul.f32 %v2727, %v2755
        %v2767 = vmul.f32 %v2728, %v2755
        %v2768 = vmul.f32 %v2729, %v2755
        %v2769 = vmul.f32 %v2730, %v2755
        %v2770 = vmul.f32 %v2731, %v2755
        %v2771 = vmul.f32 %v2732, %v2755
        %v2772 = vpack.c.bf16 %v2445, %v2444
        %v2773 = vpack.c.bf16 %v2447, %v2446
        %v2774 = vpack.c.bf16 %v2449, %v2448
        %v2775 = vpack.c.bf16 %v2451, %v2450
        %v2776 = vpack.c.bf16 %v2757, %v2756
        %v2777 = vpack.c.bf16 %v2759, %v2758
        %v2778 = vpack.c.bf16 %v2761, %v2760
        %v2779 = vpack.c.bf16 %v2763, %v2762
        %v2780 = vpack.c.bf16 %v2765, %v2764
        %v2781 = vpack.c.bf16 %v2767, %v2766
        %v2782 = vpack.c.bf16 %v2769, %v2768
        %v2783 = vpack.c.bf16 %v2771, %v2770
        %2784 = vmatprep.subr.bf16.mxu0 0
        %2785 = vmatpush1.bf16.msra.mxu0 %v2776
        %2786 = vmatprep.subr.bf16.mxu0 0
        %2787 = vmatpush1.bf16.msra.mxu0 %v2777
        %2788 = vmatprep.subr.bf16.mxu0 0
        %2789 = vmatpush1.bf16.msra.mxu0 %v2778
        %2790 = vmatprep.subr.bf16.mxu0 0
        %2791 = vmatpush1.bf16.msra.mxu0 %v2779
        %2792 = vmatprep.subr.bf16.mxu0 0
        %2793 = vmatpush1.bf16.msra.mxu0 %v2780
        %2794 = vmatprep.subr.bf16.mxu0 0
        %2795 = vmatpush1.bf16.msra.mxu0 %v2781
        %2796 = vmatprep.subr.bf16.mxu0 0
        %2797 = vmatpush1.bf16.msra.mxu0 %v2782
        %2798 = vmatprep.subr.bf16.mxu0 0
        %2799 = vmatpush1.bf16.msra.mxu0 %v2783
        %2800 = vmatprep.subr.bf16.mxu0 0
        %2801 = vmatpush1.bf16.msra.mxu0 0
        %2802 = vmatprep.subr.bf16.mxu0 0
        %2803 = vmatpush1.bf16.msra.mxu0 0
        %2804 = vmatprep.subr.bf16.mxu0 0
        %2805 = vmatpush1.bf16.msra.mxu0 0
        %2806 = vmatprep.subr.bf16.mxu0 0
        %2807 = vmatpush1.bf16.msra.mxu0 0
        %2808 = vmatprep.subr.bf16.mxu0 0
        %2809 = vmatpush1.bf16.msra.mxu0 0
        %2810 = vmatprep.subr.bf16.mxu0 0
        %2811 = vmatpush1.bf16.msra.mxu0 0
        %2812 = vmatprep.subr.bf16.mxu0 0
        %2813 = vmatpush1.bf16.msra.mxu0 0
        %2814 = vmatprep.subr.bf16.mxu0 0
        %2815 = vmatpush1.bf16.msra.mxu0 0
        %2816 = vmatprep.mubr.bf16.mxu0 0
        %2817 = vmatmul.mubr.bf16.gmra.mrb[0].mxu0 %v2772
        %v2818 = vpop.f32.mrb[0].mxu0
        %v2819 = vadd.f32 0.0, %v2818
        %v2820 = vpop.f32.mrb[0].mxu0
        %v2821 = vpop.f32.mrb[0].mxu0
        %v2822 = vadd.f32 0.0, %v2821
        %v2823 = vpop.f32.mrb[0].mxu0
        %2824 = vmatprep.mubr.bf16.mxu0 0
        %2825 = vmatmul.mubr.bf16.gmra.mrb[0].mxu0 %v2773
        %v2826 = vpop.f32.mrb[0].mxu0
        %v2827 = vadd.f32 0.0, %v2826
        %v2828 = vpop.f32.mrb[0].mxu0
        %v2829 = vpop.f32.mrb[0].mxu0
        %v2830 = vadd.f32 0.0, %v2829
        %v2831 = vpop.f32.mrb[0].mxu0
        %2832 = vmatprep.mubr.bf16.mxu0 0
        %2833 = vmatmul.mubr.bf16.gmra.mrb[0].mxu0 %v2774
        %v2834 = vpop.f32.mrb[0].mxu0
        %v2835 = vadd.f32 0.0, %v2834
        %v2836 = vpop.f32.mrb[0].mxu0
        %v2837 = vpop.f32.mrb[0].mxu0
        %v2838 = vadd.f32 0.0, %v2837
        %v2839 = vpop.f32.mrb[0].mxu0
        %2840 = vmatprep.mubr.bf16.mxu0 0
        %2841 = vmatmul.mubr.bf16.gmra.mrb[0].mxu0 %v2775
        %v2842 = vpop.f32.mrb[0].mxu0
        %v2843 = vadd.f32 0.0, %v2842
        %v2844 = vpop.f32.mrb[0].mxu0
        %v2845 = vpop.f32.mrb[0].mxu0
        %v2846 = vadd.f32 0.0, %v2845
        %v2847 = vpop.f32.mrb[0].mxu0
        %2848 = vdwg.mxu0
        %v2849 = vsub.f32 %v2358, %v2819
        %v2850 = vsub.f32 %v2359, %v2822
        %v2851 = vsub.f32 %v2360, %v2827
        %v2852 = vsub.f32 %v2361, %v2830
        %v2853 = vsub.f32 %v2362, %v2835
        %v2854 = vsub.f32 %v2363, %v2838
        %v2855 = vsub.f32 %v2364, %v2843
        %v2856 = vsub.f32 %v2365, %v2846
        %v2857 = vpack.c.bf16 %v2850, %v2849
        %v2858 = vpack.c.bf16 %v2852, %v2851
        %v2859 = vpack.c.bf16 %v2854, %v2853
        %v2860 = vpack.c.bf16 %v2856, %v2855
        %2861 = vmatprep.subr.bf16.mxu0 0
        %2862 = vmatpush1.bf16.msra.mxu0 %v2857
        %2863 = vmatprep.subr.bf16.mxu0 0
        %2864 = vmatpush1.bf16.msra.mxu0 %v2858
        %2865 = vmatprep.subr.bf16.mxu0 0
        %2866 = vmatpush1.bf16.msra.mxu0 %v2859
        %2867 = vmatprep.subr.bf16.mxu0 0
        %2868 = vmatpush1.bf16.msra.mxu0 %v2860
        %2869 = vmatprep.subr.bf16.mxu0 0
        %2870 = vmatpush1.bf16.msra.mxu0 0
        %2871 = vmatprep.subr.bf16.mxu0 0
        %2872 = vmatpush1.bf16.msra.mxu0 0
        %2873 = vmatprep.subr.bf16.mxu0 0
        %2874 = vmatpush1.bf16.msra.mxu0 0
        %2875 = vmatprep.subr.bf16.mxu0 0
        %2876 = vmatpush1.bf16.msra.mxu0 0
        %2877 = vmatprep.subr.bf16.mxu0 0
        %2878 = vmatpush1.bf16.msra.mxu0 0
        %2879 = vmatprep.subr.bf16.mxu0 0
        %2880 = vmatpush1.bf16.msra.mxu0 0
        %2881 = vmatprep.subr.bf16.mxu0 0
        %2882 = vmatpush1.bf16.msra.mxu0 0
        %2883 = vmatprep.subr.bf16.mxu0 0
        %2884 = vmatpush1.bf16.msra.mxu0 0
        %2885 = vmatprep.subr.bf16.mxu0 0
        %2886 = vmatpush1.bf16.msra.mxu0 0
        %2887 = vmatprep.subr.bf16.mxu0 0
        %2888 = vmatpush1.bf16.msra.mxu0 0
        %2889 = vmatprep.subr.bf16.mxu0 0
        %2890 = vmatpush1.bf16.msra.mxu0 0
        %2891 = vmatprep.subr.bf16.mxu0 0
        %2892 = vmatpush1.bf16.msra.mxu0 0
        %2893 = vmatprep.mubr.bf16.mxu0 0
        %2894 = vmatmul.mubr.bf16.gmra.mrb[0].mxu0 %v965
        %v2895 = vpop.f32.mrb[0].mxu0
        %v2896 = vadd.f32 %v907, %v2895
        %v2897 = vpop.f32.mrb[0].mxu0
        %v2898 = vpop.f32.mrb[0].mxu0
        %v2899 = vadd.f32 %v912, %v2898
        %v2900 = vpop.f32.mrb[0].mxu0
        %2901 = vmatprep.mubr.bf16.mxu0 0
        %2902 = vmatmul.mubr.bf16.gmra.mrb[0].mxu0 %v968
        %v2903 = vpop.f32.mrb[0].mxu0
        %v2904 = vadd.f32 %v917, %v2903
        %v2905 = vpop.f32.mrb[0].mxu0
        %v2906 = vpop.f32.mrb[0].mxu0
        %v2907 = vadd.f32 %v922, %v2906
        %v2908 = vpop.f32.mrb[0].mxu0
        %2909 = vmatprep.mubr.bf16.mxu0 0
        %2910 = vmatmul.mubr.bf16.gmra.mrb[0].mxu0 %v971
        %v2911 = vpop.f32.mrb[0].mxu0
        %v2912 = vadd.f32 %v927, %v2911
        %v2913 = vpop.f32.mrb[0].mxu0
        %v2914 = vpop.f32.mrb[0].mxu0
        %v2915 = vadd.f32 %v932, %v2914
        %v2916 = vpop.f32.mrb[0].mxu0
        %2917 = vmatprep.mubr.bf16.mxu0 0
        %2918 = vmatmul.mubr.bf16.gmra.mrb[0].mxu0 %v974
        %v2919 = vpop.f32.mrb[0].mxu0
        %v2920 = vadd.f32 %v937, %v2919
        %v2921 = vpop.f32.mrb[0].mxu0
        %v2922 = vpop.f32.mrb[0].mxu0
        %v2923 = vadd.f32 %v942, %v2922
        %v2924 = vpop.f32.mrb[0].mxu0
        %2925 = vdwg.mxu0
        %s2926 = scalar_lea.vmem %s271, 192 [#allocation5]
        %2927 = vst [vmem:[%s2926] sm:$0xff] %v2896
        %2928 = vst [vmem:[%s2926 + $0x8] sm:$0xff] %v2899
        %2929 = vst [vmem:[%s2926 + $0x10] sm:$0xff] %v2904
        %2930 = vst [vmem:[%s2926 + $0x18] sm:$0xff] %v2907
        %2931 = vst [vmem:[%s2926 + $0x20] sm:$0xff] %v2912
        %2932 = vst [vmem:[%s2926 + $0x28] sm:$0xff] %v2915
        %2933 = vst [vmem:[%s2926 + $0x30] sm:$0xff] %v2920
        %2934 = vst [vmem:[%s2926 + $0x38] sm:$0xff] %v2923
        %2935 = vadd.xlane.f32.xlu0 %v2896
        %v2936 = vpop.xlane.xlu0 %2935
        %2937 = vadd.xlane.f32.xlu0 %v2899
        %v2938 = vpop.xlane.xlu0 %2937
        %2939 = vadd.xlane.f32.xlu0 %v2904
        %v2940 = vpop.xlane.xlu0 %2939
        %2941 = vadd.xlane.f32.xlu0 %v2907
        %v2942 = vpop.xlane.xlu0 %2941
        %2943 = vadd.xlane.f32.xlu0 %v2912
        %v2944 = vpop.xlane.xlu0 %2943
        %2945 = vadd.xlane.f32.xlu0 %v2915
        %v2946 = vpop.xlane.xlu0 %2945
        %2947 = vadd.xlane.f32.xlu0 %v2920
        %v2948 = vpop.xlane.xlu0 %2947
        %2949 = vadd.xlane.f32.xlu0 %v2923
        %v2950 = vpop.xlane.xlu0 %2949
        %v2951 = vmul.f32 %v2896, %v2896
        %v2952 = vmul.f32 %v2899, %v2899
        %v2953 = vmul.f32 %v2904, %v2904
        %v2954 = vmul.f32 %v2907, %v2907
        %v2955 = vmul.f32 %v2912, %v2912
        %v2956 = vmul.f32 %v2915, %v2915
        %v2957 = vmul.f32 %v2920, %v2920
        %v2958 = vmul.f32 %v2923, %v2923
        %2959 = vadd.xlane.f32.xlu0 %v2951
        %v2960 = vpop.xlane.xlu0 %2959
        %2961 = vadd.xlane.f32.xlu0 %v2952
        %v2962 = vpop.xlane.xlu0 %2961
        %2963 = vadd.xlane.f32.xlu0 %v2953
        %v2964 = vpop.xlane.xlu0 %2963
        %2965 = vadd.xlane.f32.xlu0 %v2954
        %v2966 = vpop.xlane.xlu0 %2965
        %2967 = vadd.xlane.f32.xlu0 %v2955
        %v2968 = vpop.xlane.xlu0 %2967
        %2969 = vadd.xlane.f32.xlu0 %v2956
        %v2970 = vpop.xlane.xlu0 %2969
        %2971 = vadd.xlane.f32.xlu0 %v2957
        %v2972 = vpop.xlane.xlu0 %2971
        %2973 = vadd.xlane.f32.xlu0 %v2958
        %v2974 = vpop.xlane.xlu0 %2973
        %v2975 = vadd.f32 %v2341, %v2936
        %v2976 = vadd.f32 %v2342, %v2938
        %v2977 = vadd.f32 %v2343, %v2940
        %v2978 = vadd.f32 %v2344, %v2942
        %v2979 = vadd.f32 %v2345, %v2944
        %v2980 = vadd.f32 %v2346, %v2946
        %v2981 = vadd.f32 %v2347, %v2948
        %v2982 = vadd.f32 %v2348, %v2950
        %v2983 = vadd.f32 %v2349, %v2960
        %v2984 = vadd.f32 %v2350, %v2962
        %v2985 = vadd.f32 %v2351, %v2964
        %v2986 = vadd.f32 %v2352, %v2966
        %v2987 = vadd.f32 %v2353, %v2968
        %v2988 = vadd.f32 %v2354, %v2970
        %v2989 = vadd.f32 %v2355, %v2972
        %v2990 = vadd.f32 %v2356, %v2974
        %v2999 = vlaneseq
        %v3000 = vand.u32 %v2999, 127
        %v3001 = vlaneseq
        %v3002 = vshrl.u32 %v3001, 7
        %v3003 = vsub.s32 %v3000, %v3002
        %v3004 = vrot.slane %v2975, %v3003
        %v3005 = vadd.s32 %v3000, 4294967288
        %v3006 = vlaneseq
        %v3007 = vshrl.u32 %v3006, 7
        %v3008 = vsub.s32 %v3005, %v3007
        %v3009 = vrot.slane %v2976, %v3008
        %vm3010 = vcmask 130112
        %v3011 = vsel %vm3010, %v3009, %v3004
        %v3012 = vadd.s32 %v3000, 4294967280
        %v3013 = vlaneseq
        %v3014 = vshrl.u32 %v3013, 7
        %v3015 = vsub.s32 %v3012, %v3014
        %v3016 = vrot.slane %v2977, %v3015
        %vm3017 = vcmask 195712
        %v3018 = vsel %vm3017, %v3016, %v3011
        %v3019 = vadd.s32 %v3000, 4294967272
        %v3020 = vlaneseq
        %v3021 = vshrl.u32 %v3020, 7
        %v3022 = vsub.s32 %v3019, %v3021
        %v3023 = vrot.slane %v2978, %v3022
        %vm3024 = vcmask 261312
        %v3025 = vsel %vm3024, %v3023, %v3018
        %v3026 = vadd.s32 %v3000, 4294967264
        %v3027 = vlaneseq
        %v3028 = vshrl.u32 %v3027, 7
        %v3029 = vsub.s32 %v3026, %v3028
        %v3030 = vrot.slane %v2979, %v3029
        %vm3031 = vcmask 326912
        %v3032 = vsel %vm3031, %v3030, %v3025
        %v3033 = vadd.s32 %v3000, 4294967256
        %v3034 = vlaneseq
        %v3035 = vshrl.u32 %v3034, 7
        %v3036 = vsub.s32 %v3033, %v3035
        %v3037 = vrot.slane %v2980, %v3036
        %vm3038 = vcmask 392512
        %v3039 = vsel %vm3038, %v3037, %v3032
        %v3040 = vadd.s32 %v3000, 4294967248
        %v3041 = vlaneseq
        %v3042 = vshrl.u32 %v3041, 7
        %v3043 = vsub.s32 %v3040, %v3042
        %v3044 = vrot.slane %v2981, %v3043
        %vm3045 = vcmask 458112
        %v3046 = vsel %vm3045, %v3044, %v3039
        %v3047 = vadd.s32 %v3000, 4294967240
        %v3048 = vlaneseq
        %v3049 = vshrl.u32 %v3048, 7
        %v3050 = vsub.s32 %v3047, %v3049
        %v3051 = vrot.slane %v2982, %v3050
        %vm3052 = vcmask 523712
        %v3053 = vsel %vm3052, %v3051, %v3046
        %vm3055 = vcmask 516096
        %3056 = vst.msk [vmem:[%s283] sm:$0x1] %vm3055, %v3053
        %v3065 = vlaneseq
        %v3066 = vshrl.u32 %v3065, 7
        %v3067 = vsub.s32 %v3000, %v3066
        %v3068 = vrot.slane %v2983, %v3067
        %v3069 = vlaneseq
        %v3070 = vshrl.u32 %v3069, 7
        %v3071 = vsub.s32 %v3005, %v3070
        %v3072 = vrot.slane %v2984, %v3071
        %v3073 = vsel %vm3010, %v3072, %v3068
        %v3074 = vlaneseq
        %v3075 = vshrl.u32 %v3074, 7
        %v3076 = vsub.s32 %v3012, %v3075
        %v3077 = vrot.slane %v2985, %v3076
        %v3078 = vsel %vm3017, %v3077, %v3073
        %v3079 = vlaneseq
        %v3080 = vshrl.u32 %v3079, 7
        %v3081 = vsub.s32 %v3019, %v3080
        %v3082 = vrot.slane %v2986, %v3081
        %v3083 = vsel %vm3024, %v3082, %v3078
        %v3084 = vlaneseq
        %v3085 = vshrl.u32 %v3084, 7
        %v3086 = vsub.s32 %v3026, %v3085
        %v3087 = vrot.slane %v2987, %v3086
        %v3088 = vsel %vm3031, %v3087, %v3083
        %v3089 = vlaneseq
        %v3090 = vshrl.u32 %v3089, 7
        %v3091 = vsub.s32 %v3033, %v3090
        %v3092 = vrot.slane %v2988, %v3091
        %v3093 = vsel %vm3038, %v3092, %v3088
        %v3094 = vlaneseq
        %v3095 = vshrl.u32 %v3094, 7
        %v3096 = vsub.s32 %v3040, %v3095
        %v3097 = vrot.slane %v2989, %v3096
        %v3098 = vsel %vm3045, %v3097, %v3093
        %v3099 = vlaneseq
        %v3100 = vshrl.u32 %v3099, 7
        %v3101 = vsub.s32 %v3047, %v3100
        %v3102 = vrot.slane %v2990, %v3101
        %v3103 = vsel %vm3052, %v3102, %v3098
        %3105 = vst.msk [vmem:[%s283 + $0x1] sm:$0x1] %vm3055, %v3103
        %s3106 = sand.u32 %s142, 1
        %s3107 = scalar_lea.sflag [#allocation4], %s3106
        %s3108 = sand.u32 %s142, 1
        %s3109 = smul.addr %s3108, 256
        %s3110 = scalar_lea.vmem [#allocation5], %s3109
        %p3111 = scmp.lt.s32.totalorder %s24, 1
        %s3112 = scalar_select %p3111, %s24, 1
        %s3113 = smul.addr %s3112, 2
        %s3114 = scalar_lea.vmem %s6, %s3113
        // Predicated region
        $region45: #{sa_layer.2} parent=39 // pred_check
          %p3115 = pneg %p152
        $region46: #{sa_layer.2} parent=39 // pred_check_branch
          %3117 = sbr.rel (%p3115) target = $region48
        $region47: #{sa_layer.2} parent=39 // pred_region
          %s3118 = smul.u32 4, %s24
          %s3120 = ssub.s32 4096, 4096
          %3121 = vsyncadd %s3107, %s3120
          %s3122 = smul.addr %s3118, 8
          %s3123 = smul.addr %s3122, 128
          %s3124 = scalar_lea.hbm %s5, %s3123
          %s3125 = sshll.u32 %s3110, 4
          %s3126 = int_to_ptr.vmem [resolvable:$true] %s3125
          %3131 = dma.vmem_to_hbm [thread:$0]  %s3126, 4096, %s3124, %s3107, 128, 128, 8
        $region48: #{sa_layer.2} parent=39 // pred_fallthru
          _
        // Predicated region
        $region49: #{sa_layer.2} parent=39 // pred_check
          %p3132 = pneg %p178
        $region50: #{sa_layer.2} parent=39 // pred_check_branch
          %3134 = sbr.rel (%p3132) target = $region52
        $region51: #{sa_layer.2} parent=39 // pred_region
          _
        $region52: #{sa_layer.2} parent=39 // pred_fallthru
          _
      $region40: #{sa_layer.2} parent=5 // pred_fallthru
        _
      %p3135 = scmp.le.s32.totalorder 2, %s19
      // Predicated region
      $region53: #{sa_layer.2} parent=5 // pred_check
        %p3136 = pneg %p3135
      $region54: #{sa_layer.2} parent=5 // pred_check_branch
        %3138 = sbr.rel (%p3136) target = $region56
      $region55: #{sa_layer.2} parent=5 // pred_region
        %s3139 = ssub.s32 %s19, 2
        // Predicated region
        $region57: #{sa_layer.2} parent=55 // pred_check
          %p3140 = pneg %p158
        $region58: #{sa_layer.2} parent=55 // pred_check_branch
          %3142 = sbr.rel (%p3140) target = $region60
        $region59: #{sa_layer.2} parent=55 // pred_region
          %s3143 = sand.u32 %s143, 1
          %s3144 = scalar_lea.sflag [#allocation4], %s3143
          %s3145 = sand.u32 %s143, 1
          %s3146 = smul.addr %s3145, 256
          %s3147 = scalar_lea.vmem [#allocation5], %s3146
          %3148 = dma.done %s3144, 4096
        $region60: #{sa_layer.2} parent=55 // pred_fallthru
          _
        // Predicated region
        $region61: #{sa_layer.2} parent=55 // pred_check
          %p3149 = pneg %p184
        $region62: #{sa_layer.2} parent=55 // pred_check_branch
          %3151 = sbr.rel (%p3149) target = $region64
        $region63: #{sa_layer.2} parent=55 // pred_region
          %p3152 = scmp.lt.s32.totalorder %s25, 1
          %s3153 = scalar_select %p3152, %s25, 1
          %s3154 = smul.addr %s3153, 2
          %s3155 = scalar_lea.vmem %s6, %s3154
        $region64: #{sa_layer.2} parent=55 // pred_fallthru
          _
      $region56: #{sa_layer.2} parent=5 // pred_fallthru
        _
    $region6: #{sa_layer.2} parent=1 // loop_footer
      %s23 = sadd.s32 1, %s19
    $region7: #{sa_layer.2} parent=1 // loop_footer_branch
      %18 = sbr.rel target = $region3
    $region8: #{sa_layer.2} parent=1 // loop_exit
      _
    %3156 = vsyncpa [#allocation3], 1
    %s3157 = scalar_lea.sflag [#allocation3], 1
    %3158 = vsyncpa %s3157, 1
    %3159 = vsyncpa [#allocation4], 1
    %s3160 = scalar_lea.sflag [#allocation4], 1
    %3161 = vsyncpa %s3160, 1

</llo_original>
